<compile_context>
chip_gen: v6e
topology: v6e:2x2x1
jax: 0.10.0
libtpu: 0.0.40
codegen_flags: <defaults>
</compile_context>

<pallas_src>
import jax
import jax.numpy as jnp
from jax import lax
from jax.experimental import pallas as pl
from jax.experimental.pallas import tpu as pltpu


# ---------------------------------------------------------------------------
# Kernel 1: multi-layer LSTM recurrence  (grid = (batch_tiles, layers))
# ---------------------------------------------------------------------------
def _make_recurrence_kernel(num_layers: int, seq_len: int, time_chunk: int,
                            batch_tile: int, in_pad: int, h_pad: int):
    L, T, Tc, BT = num_layers, seq_len, time_chunk, batch_tile
    n_chunks = T // Tc

    # Cap the time-loop unroll when the gate width is large so one step's
    # g_in + gate slices + h/c stay inside the 64-vreg file (review item).
    if 4 * h_pad >= 2048:
        unroll = 2
    elif Tc <= 16:
        unroll = True
    else:
        unroll = 4

    def kernel(x_ref, w_ih_ref, w_hh_ref, b_ref, h_out_ref, gates_ref, seq_ref):
        # x_ref    : (T*BT, in_pad)      bf16   embedded tokens for this batch tile
        # w_ih_ref : (in_pad, 4*H_pad)   bf16   this layer's input-projection weights
        # w_hh_ref : (H_pad, 4*H_pad)    bf16   this layer's recurrent weights
        # b_ref    : (1, 4*H_pad)        f32    pre-summed biases
        # h_out_ref: (BT, H_pad)         bf16   final-step hidden state (last layer)
        # gates_ref: (Tc*BT, 4*H_pad)    bf16   hoisted input projection (per chunk)
        # seq_ref  : (T*BT, in_pad)      bf16   layer input / output sequence
        layer = pl.program_id(1)

        # Layer 0's input is the embedded sequence; deeper layers read the previous
        # layer's hidden states from the same scratch (written below), so copy once.
        # TODO(synk): at large T, stream x per time-chunk from HBM instead of keeping
        # the whole embedded sequence resident (seq would then also be chunked).
        @pl.when(layer == 0)
        def _():
            seq_ref[...] = x_ref[...]

        h0 = jnp.zeros((BT, h_pad), jnp.float32)
        c0 = jnp.zeros((BT, h_pad), jnp.float32)
        carry = (h0, c0)

        for ci in range(n_chunks):                       # static chunk loop over time
            base = ci * Tc * BT

            # Hoisted input projection for this chunk: ONE MXU matmul, bias folded in.
            # Stored bf16 (halves the gate-slab VMEM and the per-step vld).
            x_chunk = seq_ref[pl.ds(base, Tc * BT), :]
            gates_ref[...] = (
                jnp.dot(x_chunk, w_ih_ref[...], preferred_element_type=jnp.float32)
                + b_ref[...]
            ).astype(jnp.bfloat16)

            def step(t, carry, base=base):
                h, c = carry
                r = pl.multiple_of(t * BT, BT)
                g_in = gates_ref[pl.ds(r, BT), :].astype(jnp.float32)
                # TODO(synk): for tiny batch and H <= ~256, hold W_hh stationary across
                # the T loop via pltpu.matmul_push_rhs/matmul_acc_lhs instead of
                # re-streaming the (H,4H) weight through the MXU every step.
                gates = g_in + jnp.dot(h.astype(jnp.bfloat16), w_hh_ref[...],
                                       preferred_element_type=jnp.float32)
                # Gate slices land on 128-lane boundaries (H_pad is a multiple of 128).
                i_g = jax.nn.sigmoid(gates[:, 0:h_pad])
                f_g = jax.nn.sigmoid(gates[:, h_pad:2 * h_pad])
                g_g = jnp.tanh(gates[:, 2 * h_pad:3 * h_pad])
                o_g = jax.nn.sigmoid(gates[:, 3 * h_pad:4 * h_pad])
                c_new = f_g * c + i_g * g_g
                h_new = o_g * jnp.tanh(c_new)
                # Write this step's hidden state (bf16) as the next layer's input.
                row = pl.multiple_of(base + t * BT, BT)
                h_bf = h_new.astype(jnp.bfloat16)
                if in_pad == h_pad:
                    seq_ref[pl.ds(row, BT), :] = h_bf
                else:
                    seq_ref[pl.ds(row, BT), pl.ds(0, h_pad)] = h_bf
                return (h_new, c_new)

            carry = lax.fori_loop(0, Tc, step, carry, unroll=unroll)

        # Final hidden state of the last layer, cached once as bf16 so the vocab
        # matmul kernel never re-casts it per tile.
        @pl.when(layer == L - 1)
        def _():
            h_out_ref[...] = carry[0].astype(jnp.bfloat16)

    return kernel


# ---------------------------------------------------------------------------
# Kernel 2: final Linear over the vocab, tiled + parallel grid (lane-dense stores)
# ---------------------------------------------------------------------------
def _linear_kernel(h_ref, w_ref, b_ref, o_ref):
    # h_ref: (B_pad, H_pad) bf16 ; w_ref: (H_pad, V_TILE) bf16 ; b_ref: (1, V_TILE) f32
    o_ref[...] = (
        jnp.dot(h_ref[...], w_ref[...], preferred_element_type=jnp.float32)
        + b_ref[...]
    )


# ---------------------------------------------------------------------------
# Host-side wrapper (padding / casting / BlockSpecs)
# ---------------------------------------------------------------------------
def _round_up(n: int, m: int) -> int:
    return ((n + m - 1) // m) * m


def _pick_time_chunk(t: int, cap: int = 32) -> int:
    if t <= cap:
        return t
    for c in range(cap, 0, -1):
        if t % c == 0:
            return c
    return t


def _pick_batch_tile(bp: int, cap: int = 256) -> int:
    if bp <= cap:
        return bp
    for c in range(cap, 15, -16):
        if bp % c == 0:
            return c
    return bp


def _pad_gate_cols(m, rows_pad: int, H: int, H_pad: int):
    """Pad a gate-blocked matrix/bias (rows, 4H) -> (rows_pad, 4*H_pad).

    Columns are [i|f|g|o] blocks of width H; each block is zero-padded to H_pad so
    gate slices stay at multiples of H_pad inside the kernel."""
    rows = m.shape[0]
    m4 = m.reshape(rows, 4, H)
    m4 = jnp.pad(m4, ((0, rows_pad - rows), (0, 0), (0, H_pad - H)))
    return m4.reshape(rows_pad, 4 * H_pad)


def multilayer_lstm_forward(x_tokens, params):
    """Pallas-backed forward pass equivalent to MultiLayerLSTM.forward(x, None)."""
    emb_table = params["embedding"]                   # (V, E), row 0 zeros (padding_idx)
    B, T = x_tokens.shape
    V, E = emb_table.shape
    H = params["hidden_dim"]
    L = params["num_layers"]

    # Batch padded to 16 so bf16 (16,128) sublane tiles stay aligned for the per-step
    # dynamic sublane slices of the bf16 gates/seq scratch.
    B_pad = _round_up(B, 16)
    E_pad = _round_up(E, 128)
    H_pad = _round_up(H, 128)
    in_pad = max(E_pad, H_pad)                        # uniform in-dim for stacked w_ih
    BT = _pick_batch_tile(B_pad)
    nb = B_pad // BT
    Tc = _pick_time_chunk(T)

    # Vocab tile: large lane-dense slabs; cap 2048 (keep ~1024 on v7x for 64MiB VMEM).
    V_pad0 = _round_up(V, 128)
    V_TILE = min(2048, V_pad0)
    V_pad = _round_up(V_pad0, V_TILE)

    # --- embedding gather (JAX) + layout: (nb, T*BT, in_pad) bf16, time-major/tile ---
    xe = emb_table[x_tokens].astype(jnp.float32)                      # (B, T, E)
    xe = jnp.transpose(xe, (1, 0, 2))                                 # (T, B, E)
    xe = jnp.pad(xe, ((0, 0), (0, B_pad - B), (0, in_pad - E)))       # (T, B_pad, in_pad)
    xe = xe.reshape(T, nb, BT, in_pad).transpose(1, 0, 2, 3)          # (nb, T, BT, in_pad)
    x_tiles = xe.reshape(nb, T * BT, in_pad).astype(jnp.bfloat16)

    # --- stack per-layer weights so BlockSpec streams them layer by layer ---
    w_ih_stack = jnp.stack(
        [_pad_gate_cols(params["w_ih_t"][l], in_pad, H, H_pad) for l in range(L)]
    ).astype(jnp.bfloat16)                                            # (L, in_pad, 4H)
    w_hh_stack = jnp.stack(
        [_pad_gate_cols(params["w_hh_t"][l], H_pad, H, H_pad) for l in range(L)]
    ).astype(jnp.bfloat16)                                            # (L, H_pad, 4H)
    b_stack = jnp.stack(
        [_pad_gate_cols(params["b"][l], 1, H, H_pad) for l in range(L)]
    ).astype(jnp.float32)                                             # (L, 1, 4H)

    # --- kernel 1: recurrence -> final bf16 hidden state ---
    # NOTE: pipeline_mode=pl.Buffered(1) on the grid-invariant x spec would drop its
    # second pipeline buffer; omitted here for lowering robustness.
    h_last = pl.pallas_call(
        _make_recurrence_kernel(L, T, Tc, BT, in_pad, H_pad),
        out_shape=jax.ShapeDtypeStruct((B_pad, H_pad), jnp.bfloat16),
        grid_spec=pltpu.PrefetchScalarGridSpec(
            num_scalar_prefetch=0,
            grid=(nb, L),
            in_specs=[
                pl.BlockSpec((None, T * BT, in_pad), lambda b, l: (b, 0, 0)),      # x tile
                pl.BlockSpec((None, in_pad, 4 * H_pad), lambda b, l: (l, 0, 0)),   # w_ih[l]
                pl.BlockSpec((None, H_pad, 4 * H_pad), lambda b, l: (l, 0, 0)),    # w_hh[l]
                pl.BlockSpec((None, 1, 4 * H_pad), lambda b, l: (l, 0, 0)),        # bias[l]
            ],
            out_specs=pl.BlockSpec((BT, H_pad), lambda b, l: (b, 0)),
            scratch_shapes=[
                pltpu.VMEM((Tc * BT, 4 * H_pad), jnp.bfloat16),   # hoisted gate slab
                pltpu.VMEM((T * BT, in_pad), jnp.bfloat16),       # layer in/out sequence
            ],
        ),
        compiler_params=pltpu.CompilerParams(
            # batch tiles independent (megacore); layer axis carries seq scratch.
            dimension_semantics=("parallel", "arbitrary"),
            vmem_limit_bytes=48 * 1024 * 1024,   # conservative for v7x; raise on v5e/v6e
        ),
    )(x_tiles, w_ih_stack, w_hh_stack, b_stack)

    # --- kernel 2: vocab Linear, parallel tiled matmul ---
    fc_w = jnp.pad(params["fc_w_t"], ((0, H_pad - H), (0, V_pad - V))).astype(jnp.bfloat16)
    fc_b = jnp.pad(params["fc_b"], ((0, 0), (0, V_pad - V))).astype(jnp.float32)

    logits = pl.pallas_call(
        _linear_kernel,
        out_shape=jax.ShapeDtypeStruct((B_pad, V_pad), jnp.float32),
        grid_spec=pltpu.PrefetchScalarGridSpec(
            num_scalar_prefetch=0,
            grid=(V_pad // V_TILE,),
            in_specs=[
                pl.BlockSpec((B_pad, H_pad), lambda j: (0, 0)),
                pl.BlockSpec((H_pad, V_TILE), lambda j: (0, j)),
                pl.BlockSpec((1, V_TILE), lambda j: (0, j)),
            ],
            out_specs=pl.BlockSpec((B_pad, V_TILE), lambda j: (0, j)),
        ),
        compiler_params=pltpu.CompilerParams(
            dimension_semantics=("parallel",),          # vocab tiles independent
            vmem_limit_bytes=48 * 1024 * 1024,
        ),
    )(h_last, fc_w, fc_b)

    return logits[:B, :V]


# ---------------------------------------------------------------------------
# Pure-JAX reference (torch.nn.LSTM semantics, gate order i,f,g,o)
# ---------------------------------------------------------------------------
def reference_forward(x_tokens, params, bf16_matmul=False):
    H = params["hidden_dim"]
    L = params["num_layers"]
    B = x_tokens.shape[0]

    def mm(a, w):
        if bf16_matmul:
            return jnp.dot(a.astype(jnp.bfloat16), w.astype(jnp.bfloat16),
                           preferred_element_type=jnp.float32)
        return jnp.dot(a, w, preferred_element_type=jnp.float32)

    seq = params["embedding"][x_tokens].astype(jnp.float32)          # (B, T, E)
    for l in range(L):
        h = jnp.zeros((B, H), jnp.float32)
        c = jnp.zeros((B, H), jnp.float32)
        w_ih_t, w_hh_t, b = params["w_ih_t"][l], params["w_hh_t"][l], params["b"][l]
        outs = []
        for t in range(seq.shape[1]):
            gates = mm(seq[:, t], w_ih_t) + mm(h, w_hh_t) + b
            i_g = jax.nn.sigmoid(gates[:, :H])
            f_g = jax.nn.sigmoid(gates[:, H:2 * H])
            g_g = jnp.tanh(gates[:, 2 * H:3 * H])
            o_g = jax.nn.sigmoid(gates[:, 3 * H:])
            c = f_g * c + i_g * g_g
            h = o_g * jnp.tanh(c)
            outs.append(h)
        seq = jnp.stack(outs, axis=1)
    return mm(seq[:, -1], params["fc_w_t"]) + params["fc_b"]


# ---------------------------------------------------------------------------
# Parameter init (matches torch defaults: U(-1/sqrt(H), 1/sqrt(H)), padding_idx=0)
# ---------------------------------------------------------------------------
def init_params(key, vocab_size, embedding_dim, hidden_dim, num_layers):
    keys = iter(jax.random.split(key, 3 + 4 * num_layers))
    inv = 1.0 / jnp.sqrt(jnp.float32(hidden_dim))

    emb = jax.random.normal(next(keys), (vocab_size, embedding_dim), jnp.float32)
    emb = emb.at[0].set(0.0)  # padding_idx=0

    w_ih_t, w_hh_t, b = [], [], []
    for l in range(num_layers):
        in_dim = embedding_dim if l == 0 else hidden_dim
        w_ih = jax.random.uniform(next(keys), (4 * hidden_dim, in_dim), jnp.float32, -inv, inv)
        w_hh = jax.random.uniform(next(keys), (4 * hidden_dim, hidden_dim), jnp.float32, -inv, inv)
        b_ih = jax.random.uniform(next(keys), (4 * hidden_dim,), jnp.float32, -inv, inv)
        b_hh = jax.random.uniform(next(keys), (4 * hidden_dim,), jnp.float32, -inv, inv)
        w_ih_t.append(w_ih.T)                 # (in_dim, 4H)
        w_hh_t.append(w_hh.T)                 # (H, 4H)
        b.append((b_ih + b_hh)[None, :])      # (1, 4H) -- biases pre-summed

    fc_w = jax.random.uniform(next(keys), (vocab_size, hidden_dim), jnp.float32, -inv, inv)
    fc_b = jax.random.uniform(next(keys), (vocab_size,), jnp.float32, -inv, inv)

    return {
        "embedding": emb,
        "w_ih_t": w_ih_t,
        "w_hh_t": w_hh_t,
        "b": b,
        "fc_w_t": fc_w.T,          # (H, V)
        "fc_b": fc_b[None, :],     # (1, V)
        "hidden_dim": hidden_dim,
        "num_layers": num_layers,
    }


if __name__ == "__main__":
    vocab_size, embedding_dim, hidden_dim, num_layers = 32, 16, 32, 2
    batch, seq_len = 2, 8

    key = jax.random.PRNGKey(0)
    pkey, xkey = jax.random.split(key)
    params = init_params(pkey, vocab_size, embedding_dim, hidden_dim, num_layers)

    x = jax.random.randint(xkey, (batch, seq_len), 0, vocab_size, dtype=jnp.int32)
    x = x.at[:, 0].set(0)  # exercise padding_idx=0 rows

    logits = jax.block_until_ready(multilayer_lstm_forward(x, params))
    assert logits.shape == (batch, vocab_size)

    # Tight check vs a reference using the same bf16 matmul operands (validates the
    # recurrence / gate structure), plus a loose sanity check vs pure-f32 module
    # semantics (bf16 MXU operands + bf16 gate slab cost a few 1e-3 absolute here).
    ref_bf16 = reference_forward(x, params, bf16_matmul=True)
    ref_f32 = reference_forward(x, params, bf16_matmul=False)
    assert jnp.allclose(logits, ref_bf16, atol=1e-2, rtol=1e-2), (
        f"max abs diff vs bf16-matched ref {jnp.max(jnp.abs(logits - ref_bf16))}")
    assert jnp.allclose(logits, ref_f32, atol=1e-1, rtol=1e-1), (
        f"max abs diff vs f32 ref {jnp.max(jnp.abs(logits - ref_f32))}")

    print("KERNEL_OK")
</pallas_src>

<mosaic_0001>
module attributes {stable_mosaic.version = 11 : i64} {
  func.func @kernel(%arg0: i32, %arg1: i32, %arg2: memref<1x128x128xbf16, #tpu.memory_space<vmem>>, %arg3: memref<1x128x512xbf16, #tpu.memory_space<vmem>>, %arg4: memref<1x128x512xbf16, #tpu.memory_space<vmem>>, %arg5: memref<1x1x512xf32, #tpu.memory_space<vmem>>, %arg6: memref<16x128xbf16, #tpu.memory_space<vmem>>, %arg7: memref<128x512xbf16, #tpu.memory_space<vmem>>, %arg8: memref<128x128xbf16, #tpu.memory_space<vmem>>) attributes {dimension_semantics = [#tpu.dimension_semantics<parallel>, #tpu.dimension_semantics<arbitrary>], iteration_bounds = array<i64: 1, 2>, scalar_prefetch = 0 : i64, scratch_operands = 2 : i64, tpu.core_type = #tpu.core_type<tc>, window_params = [{transform_indices = @transform_0, window_bounds = array<i64: 1, 128, 128>}, {transform_indices = @transform_1, window_bounds = array<i64: 1, 128, 512>}, {transform_indices = @transform_2, window_bounds = array<i64: 1, 128, 512>}, {transform_indices = @transform_3, window_bounds = array<i64: 1, 1, 512>}, {transform_indices = @transform_4, window_bounds = array<i64: 16, 128>}]} {
    %c0_i32 = arith.constant 0 : i32
    %0 = arith.cmpi eq, %arg1, %c0_i32 : i32
    %1 = arith.extui %0 : i1 to i32
    %c0_i32_0 = arith.constant 0 : i32
    %2 = arith.cmpi ne, %1, %c0_i32_0 : i32
    scf.if %2 {
      %c0_110 = arith.constant 0 : index
      %c0_111 = arith.constant 0 : index
      %c0_112 = arith.constant 0 : index
      %346 = vector.load %arg2[%c0_110, %c0_111, %c0_112] : memref<1x128x128xbf16, #tpu.memory_space<vmem>>, vector<1x128x128xbf16>
      %347 = vector.shape_cast %346 : vector<1x128x128xbf16> to vector<128x128xbf16>
      %c0_113 = arith.constant 0 : index
      %c0_114 = arith.constant 0 : index
      %348 = vector.load %arg8[%c0_113, %c0_114] : memref<128x128xbf16, #tpu.memory_space<vmem>>, vector<128x128xbf16>
      tpu.vector_store %arg8[%c0_113, %c0_114], %347 {strides = array<i32>} : memref<128x128xbf16, #tpu.memory_space<vmem>>, vector<128x128xbf16>,
    } else {
    }
    %cst = arith.constant 0.000000e+00 : f32
    %3 = vector.broadcast %cst : f32 to vector<16x128xf32>
    %cst_1 = arith.constant 0.000000e+00 : f32
    %4 = vector.broadcast %cst_1 : f32 to vector<16x128xf32>
    %c0 = arith.constant 0 : index
    %c0_2 = arith.constant 0 : index
    %5 = vector.load %arg8[%c0, %c0_2] : memref<128x128xbf16, #tpu.memory_space<vmem>>, vector<128x128xbf16>
    %c0_3 = arith.constant 0 : index
    %c0_4 = arith.constant 0 : index
    %c0_5 = arith.constant 0 : index
    %6 = vector.load %arg3[%c0_3, %c0_4, %c0_5] : memref<1x128x512xbf16, #tpu.memory_space<vmem>>, vector<1x128x512xbf16>
    %7 = vector.shape_cast %6 : vector<1x128x512xbf16> to vector<128x512xbf16>
    %cst_6 = arith.constant dense<0.000000e+00> : vector<128x512xf32>
    %8 = tpu.matmul %5, %7, %cst_6 {dimension_numbers = #tpu.dot_dimension_numbers<[1], [0], [0], [1], [0, 0, 1, 1], [], []>} : vector<128x128xbf16>, vector<128x512xbf16>, vector<128x512xf32> -> vector<128x512xf32>
    %c0_7 = arith.constant 0 : index
    %c0_8 = arith.constant 0 : index
    %c0_9 = arith.constant 0 : index
    %9 = vector.load %arg5[%c0_7, %c0_8, %c0_9] : memref<1x1x512xf32, #tpu.memory_space<vmem>>, vector<1x1x512xf32>
    %10 = vector.shape_cast %9 : vector<1x1x512xf32> to vector<1x512xf32>
    %11 = vector.broadcast %10 : vector<1x512xf32> to vector<128x512xf32>
    %12 = arith.addf %8, %11 : vector<128x512xf32>
    %13 = arith.truncf %12 : vector<128x512xf32> to vector<128x512xbf16>
    %c0_10 = arith.constant 0 : index
    %c0_11 = arith.constant 0 : index
    %14 = vector.load %arg7[%c0_10, %c0_11] : memref<128x512xbf16, #tpu.memory_space<vmem>>, vector<128x512xbf16>
    tpu.vector_store %arg7[%c0_10, %c0_11], %13 {strides = array<i32>} : memref<128x512xbf16, #tpu.memory_space<vmem>>, vector<128x512xbf16>,
    %c0_i32_12 = arith.constant 0 : i32
    %c16_i32 = arith.constant 16 : i32
    %15 = arith.muli %c0_i32_12, %c16_i32 : i32
    %16 = tpu.assume_multiple %15, 16 : i32
    %17 = arith.index_cast %16 : i32 to index
    %c0_13 = arith.constant 0 : index
    %18 = vector.load %arg7[%17, %c0_13] : memref<128x512xbf16, #tpu.memory_space<vmem>>, vector<16x512xbf16>
    %19 = arith.extf %18 : vector<16x512xbf16> to vector<16x512xf32>
    %20 = arith.truncf %3 : vector<16x128xf32> to vector<16x128xbf16>
    %c0_14 = arith.constant 0 : index
    %c0_15 = arith.constant 0 : index
    %c0_16 = arith.constant 0 : index
    %21 = vector.load %arg4[%c0_14, %c0_15, %c0_16] : memref<1x128x512xbf16, #tpu.memory_space<vmem>>, vector<1x128x512xbf16>
    %22 = vector.shape_cast %21 : vector<1x128x512xbf16> to vector<128x512xbf16>
    %cst_17 = arith.constant dense<0.000000e+00> : vector<16x512xf32>
    %23 = tpu.matmul %20, %22, %cst_17 {dimension_numbers = #tpu.dot_dimension_numbers<[1], [0], [0], [1], [0, 0, 1, 1], [], []>} : vector<16x128xbf16>, vector<128x512xbf16>, vector<16x512xf32> -> vector<16x512xf32>
    %24 = arith.addf %19, %23 : vector<16x512xf32>
    %25 = vector.extract_strided_slice %24 {offsets = [0, 0], sizes = [16, 128], strides = [1, 1]} : vector<16x512xf32> to vector<16x128xf32>
    %26 = arith.negf %25 : vector<16x128xf32>
    %27 = math.exp %26 : vector<16x128xf32>
    %cst_18 = arith.constant 1.000000e+00 : f32
    %28 = vector.broadcast %cst_18 : f32 to vector<16x128xf32>
    %29 = arith.addf %28, %27 : vector<16x128xf32>
    %30 = arith.divf %28, %29 : vector<16x128xf32>
    %31 = vector.extract_strided_slice %24 {offsets = [0, 128], sizes = [16, 128], strides = [1, 1]} : vector<16x512xf32> to vector<16x128xf32>
    %32 = arith.negf %31 : vector<16x128xf32>
    %33 = math.exp %32 : vector<16x128xf32>
    %cst_19 = arith.constant 1.000000e+00 : f32
    %34 = vector.broadcast %cst_19 : f32 to vector<16x128xf32>
    %35 = arith.addf %34, %33 : vector<16x128xf32>
    %36 = arith.divf %34, %35 : vector<16x128xf32>
    %37 = vector.extract_strided_slice %24 {offsets = [0, 256], sizes = [16, 128], strides = [1, 1]} : vector<16x512xf32> to vector<16x128xf32>
    %38 = math.tanh %37 : vector<16x128xf32>
    %39 = vector.extract_strided_slice %24 {offsets = [0, 384], sizes = [16, 128], strides = [1, 1]} : vector<16x512xf32> to vector<16x128xf32>
    %40 = arith.negf %39 : vector<16x128xf32>
    %41 = math.exp %40 : vector<16x128xf32>
    %cst_20 = arith.constant 1.000000e+00 : f32
    %42 = vector.broadcast %cst_20 : f32 to vector<16x128xf32>
    %43 = arith.addf %42, %41 : vector<16x128xf32>
    %44 = arith.divf %42, %43 : vector<16x128xf32>
    %45 = arith.mulf %36, %4 : vector<16x128xf32>
    %46 = arith.mulf %30, %38 : vector<16x128xf32>
    %47 = arith.addf %45, %46 : vector<16x128xf32>
    %48 = math.tanh %47 : vector<16x128xf32>
    %49 = arith.mulf %44, %48 : vector<16x128xf32>
    %c16_i32_21 = arith.constant 16 : i32
    %50 = arith.muli %c0_i32_12, %c16_i32_21 : i32
    %c0_i32_22 = arith.constant 0 : i32
    %51 = arith.addi %c0_i32_22, %50 : i32
    %52 = tpu.assume_multiple %51, 16 : i32
    %53 = arith.truncf %49 : vector<16x128xf32> to vector<16x128xbf16>
    %54 = arith.index_cast %52 : i32 to index
    %c0_23 = arith.constant 0 : index
    %55 = vector.load %arg8[%54, %c0_23] : memref<128x128xbf16, #tpu.memory_space<vmem>>, vector<16x128xbf16>
    tpu.vector_store %arg8[%54, %c0_23], %53 {strides = array<i32>} : memref<128x128xbf16, #tpu.memory_space<vmem>>, vector<16x128xbf16>,
    %c1_i32 = arith.constant 1 : i32
    %c16_i32_24 = arith.constant 16 : i32
    %56 = arith.muli %c1_i32, %c16_i32_24 : i32
    %57 = tpu.assume_multiple %56, 16 : i32
    %58 = arith.index_cast %57 : i32 to index
    %c0_25 = arith.constant 0 : index
    %59 = vector.load %arg7[%58, %c0_25] : memref<128x512xbf16, #tpu.memory_space<vmem>>, vector<16x512xbf16>
    %60 = arith.extf %59 : vector<16x512xbf16> to vector<16x512xf32>
    %61 = arith.truncf %49 : vector<16x128xf32> to vector<16x128xbf16>
    %c0_26 = arith.constant 0 : index
    %c0_27 = arith.constant 0 : index
    %c0_28 = arith.constant 0 : index
    %62 = vector.load %arg4[%c0_26, %c0_27, %c0_28] : memref<1x128x512xbf16, #tpu.memory_space<vmem>>, vector<1x128x512xbf16>
    %63 = vector.shape_cast %62 : vector<1x128x512xbf16> to vector<128x512xbf16>
    %cst_29 = arith.constant dense<0.000000e+00> : vector<16x512xf32>
    %64 = tpu.matmul %61, %63, %cst_29 {dimension_numbers = #tpu.dot_dimension_numbers<[1], [0], [0], [1], [0, 0, 1, 1], [], []>} : vector<16x128xbf16>, vector<128x512xbf16>, vector<16x512xf32> -> vector<16x512xf32>
    %65 = arith.addf %60, %64 : vector<16x512xf32>
    %66 = vector.extract_strided_slice %65 {offsets = [0, 0], sizes = [16, 128], strides = [1, 1]} : vector<16x512xf32> to vector<16x128xf32>
    %67 = arith.negf %66 : vector<16x128xf32>
    %68 = math.exp %67 : vector<16x128xf32>
    %cst_30 = arith.constant 1.000000e+00 : f32
    %69 = vector.broadcast %cst_30 : f32 to vector<16x128xf32>
    %70 = arith.addf %69, %68 : vector<16x128xf32>
    %71 = arith.divf %69, %70 : vector<16x128xf32>
    %72 = vector.extract_strided_slice %65 {offsets = [0, 128], sizes = [16, 128], strides = [1, 1]} : vector<16x512xf32> to vector<16x128xf32>
    %73 = arith.negf %72 : vector<16x128xf32>
    %74 = math.exp %73 : vector<16x128xf32>
    %cst_31 = arith.constant 1.000000e+00 : f32
    %75 = vector.broadcast %cst_31 : f32 to vector<16x128xf32>
    %76 = arith.addf %75, %74 : vector<16x128xf32>
    %77 = arith.divf %75, %76 : vector<16x128xf32>
    %78 = vector.extract_strided_slice %65 {offsets = [0, 256], sizes = [16, 128], strides = [1, 1]} : vector<16x512xf32> to vector<16x128xf32>
    %79 = math.tanh %78 : vector<16x128xf32>
    %80 = vector.extract_strided_slice %65 {offsets = [0, 384], sizes = [16, 128], strides = [1, 1]} : vector<16x512xf32> to vector<16x128xf32>
    %81 = arith.negf %80 : vector<16x128xf32>
    %82 = math.exp %81 : vector<16x128xf32>
    %cst_32 = arith.constant 1.000000e+00 : f32
    %83 = vector.broadcast %cst_32 : f32 to vector<16x128xf32>
    %84 = arith.addf %83, %82 : vector<16x128xf32>
    %85 = arith.divf %83, %84 : vector<16x128xf32>
    %86 = arith.mulf %77, %47 : vector<16x128xf32>
    %87 = arith.mulf %71, %79 : vector<16x128xf32>
    %88 = arith.addf %86, %87 : vector<16x128xf32>
    %89 = math.tanh %88 : vector<16x128xf32>
    %90 = arith.mulf %85, %89 : vector<16x128xf32>
    %c16_i32_33 = arith.constant 16 : i32
    %91 = arith.muli %c1_i32, %c16_i32_33 : i32
    %c0_i32_34 = arith.constant 0 : i32
    %92 = arith.addi %c0_i32_34, %91 : i32
    %93 = tpu.assume_multiple %92, 16 : i32
    %94 = arith.truncf %90 : vector<16x128xf32> to vector<16x128xbf16>
    %95 = arith.index_cast %93 : i32 to index
    %c0_35 = arith.constant 0 : index
    %96 = vector.load %arg8[%95, %c0_35] : memref<128x128xbf16, #tpu.memory_space<vmem>>, vector<16x128xbf16>
    tpu.vector_store %arg8[%95, %c0_35], %94 {strides = array<i32>} : memref<128x128xbf16, #tpu.memory_space<vmem>>, vector<16x128xbf16>,
    %c2_i32 = arith.constant 2 : i32
    %c16_i32_36 = arith.constant 16 : i32
    %97 = arith.muli %c2_i32, %c16_i32_36 : i32
    %98 = tpu.assume_multiple %97, 16 : i32
    %99 = arith.index_cast %98 : i32 to index
    %c0_37 = arith.constant 0 : index
    %100 = vector.load %arg7[%99, %c0_37] : memref<128x512xbf16, #tpu.memory_space<vmem>>, vector<16x512xbf16>
    %101 = arith.extf %100 : vector<16x512xbf16> to vector<16x512xf32>
    %102 = arith.truncf %90 : vector<16x128xf32> to vector<16x128xbf16>
    %c0_38 = arith.constant 0 : index
    %c0_39 = arith.constant 0 : index
    %c0_40 = arith.constant 0 : index
    %103 = vector.load %arg4[%c0_38, %c0_39, %c0_40] : memref<1x128x512xbf16, #tpu.memory_space<vmem>>, vector<1x128x512xbf16>
    %104 = vector.shape_cast %103 : vector<1x128x512xbf16> to vector<128x512xbf16>
    %cst_41 = arith.constant dense<0.000000e+00> : vector<16x512xf32>
    %105 = tpu.matmul %102, %104, %cst_41 {dimension_numbers = #tpu.dot_dimension_numbers<[1], [0], [0], [1], [0, 0, 1, 1], [], []>} : vector<16x128xbf16>, vector<128x512xbf16>, vector<16x512xf32> -> vector<16x512xf32>
    %106 = arith.addf %101, %105 : vector<16x512xf32>
    %107 = vector.extract_strided_slice %106 {offsets = [0, 0], sizes = [16, 128], strides = [1, 1]} : vector<16x512xf32> to vector<16x128xf32>
    %108 = arith.negf %107 : vector<16x128xf32>
    %109 = math.exp %108 : vector<16x128xf32>
    %cst_42 = arith.constant 1.000000e+00 : f32
    %110 = vector.broadcast %cst_42 : f32 to vector<16x128xf32>
    %111 = arith.addf %110, %109 : vector<16x128xf32>
    %112 = arith.divf %110, %111 : vector<16x128xf32>
    %113 = vector.extract_strided_slice %106 {offsets = [0, 128], sizes = [16, 128], strides = [1, 1]} : vector<16x512xf32> to vector<16x128xf32>
    %114 = arith.negf %113 : vector<16x128xf32>
    %115 = math.exp %114 : vector<16x128xf32>
    %cst_43 = arith.constant 1.000000e+00 : f32
    %116 = vector.broadcast %cst_43 : f32 to vector<16x128xf32>
    %117 = arith.addf %116, %115 : vector<16x128xf32>
    %118 = arith.divf %116, %117 : vector<16x128xf32>
    %119 = vector.extract_strided_slice %106 {offsets = [0, 256], sizes = [16, 128], strides = [1, 1]} : vector<16x512xf32> to vector<16x128xf32>
    %120 = math.tanh %119 : vector<16x128xf32>
    %121 = vector.extract_strided_slice %106 {offsets = [0, 384], sizes = [16, 128], strides = [1, 1]} : vector<16x512xf32> to vector<16x128xf32>
    %122 = arith.negf %121 : vector<16x128xf32>
    %123 = math.exp %122 : vector<16x128xf32>
    %cst_44 = arith.constant 1.000000e+00 : f32
    %124 = vector.broadcast %cst_44 : f32 to vector<16x128xf32>
    %125 = arith.addf %124, %123 : vector<16x128xf32>
    %126 = arith.divf %124, %125 : vector<16x128xf32>
    %127 = arith.mulf %118, %88 : vector<16x128xf32>
    %128 = arith.mulf %112, %120 : vector<16x128xf32>
    %129 = arith.addf %127, %128 : vector<16x128xf32>
    %130 = math.tanh %129 : vector<16x128xf32>
    %131 = arith.mulf %126, %130 : vector<16x128xf32>
    %c16_i32_45 = arith.constant 16 : i32
    %132 = arith.muli %c2_i32, %c16_i32_45 : i32
    %c0_i32_46 = arith.constant 0 : i32
    %133 = arith.addi %c0_i32_46, %132 : i32
    %134 = tpu.assume_multiple %133, 16 : i32
    %135 = arith.truncf %131 : vector<16x128xf32> to vector<16x128xbf16>
    %136 = arith.index_cast %134 : i32 to index
    %c0_47 = arith.constant 0 : index
    %137 = vector.load %arg8[%136, %c0_47] : memref<128x128xbf16, #tpu.memory_space<vmem>>, vector<16x128xbf16>
    tpu.vector_store %arg8[%136, %c0_47], %135 {strides = array<i32>} : memref<128x128xbf16, #tpu.memory_space<vmem>>, vector<16x128xbf16>,
    %c3_i32 = arith.constant 3 : i32
    %c16_i32_48 = arith.constant 16 : i32
    %138 = arith.muli %c3_i32, %c16_i32_48 : i32
    %139 = tpu.assume_multiple %138, 16 : i32
    %140 = arith.index_cast %139 : i32 to index
    %c0_49 = arith.constant 0 : index
    %141 = vector.load %arg7[%140, %c0_49] : memref<128x512xbf16, #tpu.memory_space<vmem>>, vector<16x512xbf16>
    %142 = arith.extf %141 : vector<16x512xbf16> to vector<16x512xf32>
    %143 = arith.truncf %131 : vector<16x128xf32> to vector<16x128xbf16>
    %c0_50 = arith.constant 0 : index
    %c0_51 = arith.constant 0 : index
    %c0_52 = arith.constant 0 : index
    %144 = vector.load %arg4[%c0_50, %c0_51, %c0_52] : memref<1x128x512xbf16, #tpu.memory_space<vmem>>, vector<1x128x512xbf16>
    %145 = vector.shape_cast %144 : vector<1x128x512xbf16> to vector<128x512xbf16>
    %cst_53 = arith.constant dense<0.000000e+00> : vector<16x512xf32>
    %146 = tpu.matmul %143, %145, %cst_53 {dimension_numbers = #tpu.dot_dimension_numbers<[1], [0], [0], [1], [0, 0, 1, 1], [], []>} : vector<16x128xbf16>, vector<128x512xbf16>, vector<16x512xf32> -> vector<16x512xf32>
    %147 = arith.addf %142, %146 : vector<16x512xf32>
    %148 = vector.extract_strided_slice %147 {offsets = [0, 0], sizes = [16, 128], strides = [1, 1]} : vector<16x512xf32> to vector<16x128xf32>
    %149 = arith.negf %148 : vector<16x128xf32>
    %150 = math.exp %149 : vector<16x128xf32>
    %cst_54 = arith.constant 1.000000e+00 : f32
    %151 = vector.broadcast %cst_54 : f32 to vector<16x128xf32>
    %152 = arith.addf %151, %150 : vector<16x128xf32>
    %153 = arith.divf %151, %152 : vector<16x128xf32>
    %154 = vector.extract_strided_slice %147 {offsets = [0, 128], sizes = [16, 128], strides = [1, 1]} : vector<16x512xf32> to vector<16x128xf32>
    %155 = arith.negf %154 : vector<16x128xf32>
    %156 = math.exp %155 : vector<16x128xf32>
    %cst_55 = arith.constant 1.000000e+00 : f32
    %157 = vector.broadcast %cst_55 : f32 to vector<16x128xf32>
    %158 = arith.addf %157, %156 : vector<16x128xf32>
    %159 = arith.divf %157, %158 : vector<16x128xf32>
    %160 = vector.extract_strided_slice %147 {offsets = [0, 256], sizes = [16, 128], strides = [1, 1]} : vector<16x512xf32> to vector<16x128xf32>
    %161 = math.tanh %160 : vector<16x128xf32>
    %162 = vector.extract_strided_slice %147 {offsets = [0, 384], sizes = [16, 128], strides = [1, 1]} : vector<16x512xf32> to vector<16x128xf32>
    %163 = arith.negf %162 : vector<16x128xf32>
    %164 = math.exp %163 : vector<16x128xf32>
    %cst_56 = arith.constant 1.000000e+00 : f32
    %165 = vector.broadcast %cst_56 : f32 to vector<16x128xf32>
    %166 = arith.addf %165, %164 : vector<16x128xf32>
    %167 = arith.divf %165, %166 : vector<16x128xf32>
    %168 = arith.mulf %159, %129 : vector<16x128xf32>
    %169 = arith.mulf %153, %161 : vector<16x128xf32>
    %170 = arith.addf %168, %169 : vector<16x128xf32>
    %171 = math.tanh %170 : vector<16x128xf32>
    %172 = arith.mulf %167, %171 : vector<16x128xf32>
    %c16_i32_57 = arith.constant 16 : i32
    %173 = arith.muli %c3_i32, %c16_i32_57 : i32
    %c0_i32_58 = arith.constant 0 : i32
    %174 = arith.addi %c0_i32_58, %173 : i32
    %175 = tpu.assume_multiple %174, 16 : i32
    %176 = arith.truncf %172 : vector<16x128xf32> to vector<16x128xbf16>
    %177 = arith.index_cast %175 : i32 to index
    %c0_59 = arith.constant 0 : index
    %178 = vector.load %arg8[%177, %c0_59] : memref<128x128xbf16, #tpu.memory_space<vmem>>, vector<16x128xbf16>
    tpu.vector_store %arg8[%177, %c0_59], %176 {strides = array<i32>} : memref<128x128xbf16, #tpu.memory_space<vmem>>, vector<16x128xbf16>,
    %c4_i32 = arith.constant 4 : i32
    %c16_i32_60 = arith.constant 16 : i32
    %179 = arith.muli %c4_i32, %c16_i32_60 : i32
    %180 = tpu.assume_multiple %179, 16 : i32
    %181 = arith.index_cast %180 : i32 to index
    %c0_61 = arith.constant 0 : index
    %182 = vector.load %arg7[%181, %c0_61] : memref<128x512xbf16, #tpu.memory_space<vmem>>, vector<16x512xbf16>
    %183 = arith.extf %182 : vector<16x512xbf16> to vector<16x512xf32>
    %184 = arith.truncf %172 : vector<16x128xf32> to vector<16x128xbf16>
    %c0_62 = arith.constant 0 : index
    %c0_63 = arith.constant 0 : index
    %c0_64 = arith.constant 0 : index
    %185 = vector.load %arg4[%c0_62, %c0_63, %c0_64] : memref<1x128x512xbf16, #tpu.memory_space<vmem>>, vector<1x128x512xbf16>
    %186 = vector.shape_cast %185 : vector<1x128x512xbf16> to vector<128x512xbf16>
    %cst_65 = arith.constant dense<0.000000e+00> : vector<16x512xf32>
    %187 = tpu.matmul %184, %186, %cst_65 {dimension_numbers = #tpu.dot_dimension_numbers<[1], [0], [0], [1], [0, 0, 1, 1], [], []>} : vector<16x128xbf16>, vector<128x512xbf16>, vector<16x512xf32> -> vector<16x512xf32>
    %188 = arith.addf %183, %187 : vector<16x512xf32>
    %189 = vector.extract_strided_slice %188 {offsets = [0, 0], sizes = [16, 128], strides = [1, 1]} : vector<16x512xf32> to vector<16x128xf32>
    %190 = arith.negf %189 : vector<16x128xf32>
    %191 = math.exp %190 : vector<16x128xf32>
    %cst_66 = arith.constant 1.000000e+00 : f32
    %192 = vector.broadcast %cst_66 : f32 to vector<16x128xf32>
    %193 = arith.addf %192, %191 : vector<16x128xf32>
    %194 = arith.divf %192, %193 : vector<16x128xf32>
    %195 = vector.extract_strided_slice %188 {offsets = [0, 128], sizes = [16, 128], strides = [1, 1]} : vector<16x512xf32> to vector<16x128xf32>
    %196 = arith.negf %195 : vector<16x128xf32>
    %197 = math.exp %196 : vector<16x128xf32>
    %cst_67 = arith.constant 1.000000e+00 : f32
    %198 = vector.broadcast %cst_67 : f32 to vector<16x128xf32>
    %199 = arith.addf %198, %197 : vector<16x128xf32>
    %200 = arith.divf %198, %199 : vector<16x128xf32>
    %201 = vector.extract_strided_slice %188 {offsets = [0, 256], sizes = [16, 128], strides = [1, 1]} : vector<16x512xf32> to vector<16x128xf32>
    %202 = math.tanh %201 : vector<16x128xf32>
    %203 = vector.extract_strided_slice %188 {offsets = [0, 384], sizes = [16, 128], strides = [1, 1]} : vector<16x512xf32> to vector<16x128xf32>
    %204 = arith.negf %203 : vector<16x128xf32>
    %205 = math.exp %204 : vector<16x128xf32>
    %cst_68 = arith.constant 1.000000e+00 : f32
    %206 = vector.broadcast %cst_68 : f32 to vector<16x128xf32>
    %207 = arith.addf %206, %205 : vector<16x128xf32>
    %208 = arith.divf %206, %207 : vector<16x128xf32>
    %209 = arith.mulf %200, %170 : vector<16x128xf32>
    %210 = arith.mulf %194, %202 : vector<16x128xf32>
    %211 = arith.addf %209, %210 : vector<16x128xf32>
    %212 = math.tanh %211 : vector<16x128xf32>
    %213 = arith.mulf %208, %212 : vector<16x128xf32>
    %c16_i32_69 = arith.constant 16 : i32
    %214 = arith.muli %c4_i32, %c16_i32_69 : i32
    %c0_i32_70 = arith.constant 0 : i32
    %215 = arith.addi %c0_i32_70, %214 : i32
    %216 = tpu.assume_multiple %215, 16 : i32
    %217 = arith.truncf %213 : vector<16x128xf32> to vector<16x128xbf16>
    %218 = arith.index_cast %216 : i32 to index
    %c0_71 = arith.constant 0 : index
    %219 = vector.load %arg8[%218, %c0_71] : memref<128x128xbf16, #tpu.memory_space<vmem>>, vector<16x128xbf16>
    tpu.vector_store %arg8[%218, %c0_71], %217 {strides = array<i32>} : memref<128x128xbf16, #tpu.memory_space<vmem>>, vector<16x128xbf16>,
    %c5_i32 = arith.constant 5 : i32
    %c16_i32_72 = arith.constant 16 : i32
    %220 = arith.muli %c5_i32, %c16_i32_72 : i32
    %221 = tpu.assume_multiple %220, 16 : i32
    %222 = arith.index_cast %221 : i32 to index
    %c0_73 = arith.constant 0 : index
    %223 = vector.load %arg7[%222, %c0_73] : memref<128x512xbf16, #tpu.memory_space<vmem>>, vector<16x512xbf16>
    %224 = arith.extf %223 : vector<16x512xbf16> to vector<16x512xf32>
    %225 = arith.truncf %213 : vector<16x128xf32> to vector<16x128xbf16>
    %c0_74 = arith.constant 0 : index
    %c0_75 = arith.constant 0 : index
    %c0_76 = arith.constant 0 : index
    %226 = vector.load %arg4[%c0_74, %c0_75, %c0_76] : memref<1x128x512xbf16, #tpu.memory_space<vmem>>, vector<1x128x512xbf16>
    %227 = vector.shape_cast %226 : vector<1x128x512xbf16> to vector<128x512xbf16>
    %cst_77 = arith.constant dense<0.000000e+00> : vector<16x512xf32>
    %228 = tpu.matmul %225, %227, %cst_77 {dimension_numbers = #tpu.dot_dimension_numbers<[1], [0], [0], [1], [0, 0, 1, 1], [], []>} : vector<16x128xbf16>, vector<128x512xbf16>, vector<16x512xf32> -> vector<16x512xf32>
    %229 = arith.addf %224, %228 : vector<16x512xf32>
    %230 = vector.extract_strided_slice %229 {offsets = [0, 0], sizes = [16, 128], strides = [1, 1]} : vector<16x512xf32> to vector<16x128xf32>
    %231 = arith.negf %230 : vector<16x128xf32>
    %232 = math.exp %231 : vector<16x128xf32>
    %cst_78 = arith.constant 1.000000e+00 : f32
    %233 = vector.broadcast %cst_78 : f32 to vector<16x128xf32>
    %234 = arith.addf %233, %232 : vector<16x128xf32>
    %235 = arith.divf %233, %234 : vector<16x128xf32>
    %236 = vector.extract_strided_slice %229 {offsets = [0, 128], sizes = [16, 128], strides = [1, 1]} : vector<16x512xf32> to vector<16x128xf32>
    %237 = arith.negf %236 : vector<16x128xf32>
    %238 = math.exp %237 : vector<16x128xf32>
    %cst_79 = arith.constant 1.000000e+00 : f32
    %239 = vector.broadcast %cst_79 : f32 to vector<16x128xf32>
    %240 = arith.addf %239, %238 : vector<16x128xf32>
    %241 = arith.divf %239, %240 : vector<16x128xf32>
    %242 = vector.extract_strided_slice %229 {offsets = [0, 256], sizes = [16, 128], strides = [1, 1]} : vector<16x512xf32> to vector<16x128xf32>
    %243 = math.tanh %242 : vector<16x128xf32>
    %244 = vector.extract_strided_slice %229 {offsets = [0, 384], sizes = [16, 128], strides = [1, 1]} : vector<16x512xf32> to vector<16x128xf32>
    %245 = arith.negf %244 : vector<16x128xf32>
    %246 = math.exp %245 : vector<16x128xf32>
    %cst_80 = arith.constant 1.000000e+00 : f32
    %247 = vector.broadcast %cst_80 : f32 to vector<16x128xf32>
    %248 = arith.addf %247, %246 : vector<16x128xf32>
    %249 = arith.divf %247, %248 : vector<16x128xf32>
    %250 = arith.mulf %241, %211 : vector<16x128xf32>
    %251 = arith.mulf %235, %243 : vector<16x128xf32>
    %252 = arith.addf %250, %251 : vector<16x128xf32>
    %253 = math.tanh %252 : vector<16x128xf32>
    %254 = arith.mulf %249, %253 : vector<16x128xf32>
    %c16_i32_81 = arith.constant 16 : i32
    %255 = arith.muli %c5_i32, %c16_i32_81 : i32
    %c0_i32_82 = arith.constant 0 : i32
    %256 = arith.addi %c0_i32_82, %255 : i32
    %257 = tpu.assume_multiple %256, 16 : i32
    %258 = arith.truncf %254 : vector<16x128xf32> to vector<16x128xbf16>
    %259 = arith.index_cast %257 : i32 to index
    %c0_83 = arith.constant 0 : index
    %260 = vector.load %arg8[%259, %c0_83] : memref<128x128xbf16, #tpu.memory_space<vmem>>, vector<16x128xbf16>
    tpu.vector_store %arg8[%259, %c0_83], %258 {strides = array<i32>} : memref<128x128xbf16, #tpu.memory_space<vmem>>, vector<16x128xbf16>,
    %c6_i32 = arith.constant 6 : i32
    %c16_i32_84 = arith.constant 16 : i32
    %261 = arith.muli %c6_i32, %c16_i32_84 : i32
    %262 = tpu.assume_multiple %261, 16 : i32
    %263 = arith.index_cast %262 : i32 to index
    %c0_85 = arith.constant 0 : index
    %264 = vector.load %arg7[%263, %c0_85] : memref<128x512xbf16, #tpu.memory_space<vmem>>, vector<16x512xbf16>
    %265 = arith.extf %264 : vector<16x512xbf16> to vector<16x512xf32>
    %266 = arith.truncf %254 : vector<16x128xf32> to vector<16x128xbf16>
    %c0_86 = arith.constant 0 : index
    %c0_87 = arith.constant 0 : index
    %c0_88 = arith.constant 0 : index
    %267 = vector.load %arg4[%c0_86, %c0_87, %c0_88] : memref<1x128x512xbf16, #tpu.memory_space<vmem>>, vector<1x128x512xbf16>
    %268 = vector.shape_cast %267 : vector<1x128x512xbf16> to vector<128x512xbf16>
    %cst_89 = arith.constant dense<0.000000e+00> : vector<16x512xf32>
    %269 = tpu.matmul %266, %268, %cst_89 {dimension_numbers = #tpu.dot_dimension_numbers<[1], [0], [0], [1], [0, 0, 1, 1], [], []>} : vector<16x128xbf16>, vector<128x512xbf16>, vector<16x512xf32> -> vector<16x512xf32>
    %270 = arith.addf %265, %269 : vector<16x512xf32>
    %271 = vector.extract_strided_slice %270 {offsets = [0, 0], sizes = [16, 128], strides = [1, 1]} : vector<16x512xf32> to vector<16x128xf32>
    %272 = arith.negf %271 : vector<16x128xf32>
    %273 = math.exp %272 : vector<16x128xf32>
    %cst_90 = arith.constant 1.000000e+00 : f32
    %274 = vector.broadcast %cst_90 : f32 to vector<16x128xf32>
    %275 = arith.addf %274, %273 : vector<16x128xf32>
    %276 = arith.divf %274, %275 : vector<16x128xf32>
    %277 = vector.extract_strided_slice %270 {offsets = [0, 128], sizes = [16, 128], strides = [1, 1]} : vector<16x512xf32> to vector<16x128xf32>
    %278 = arith.negf %277 : vector<16x128xf32>
    %279 = math.exp %278 : vector<16x128xf32>
    %cst_91 = arith.constant 1.000000e+00 : f32
    %280 = vector.broadcast %cst_91 : f32 to vector<16x128xf32>
    %281 = arith.addf %280, %279 : vector<16x128xf32>
    %282 = arith.divf %280, %281 : vector<16x128xf32>
    %283 = vector.extract_strided_slice %270 {offsets = [0, 256], sizes = [16, 128], strides = [1, 1]} : vector<16x512xf32> to vector<16x128xf32>
    %284 = math.tanh %283 : vector<16x128xf32>
    %285 = vector.extract_strided_slice %270 {offsets = [0, 384], sizes = [16, 128], strides = [1, 1]} : vector<16x512xf32> to vector<16x128xf32>
    %286 = arith.negf %285 : vector<16x128xf32>
    %287 = math.exp %286 : vector<16x128xf32>
    %cst_92 = arith.constant 1.000000e+00 : f32
    %288 = vector.broadcast %cst_92 : f32 to vector<16x128xf32>
    %289 = arith.addf %288, %287 : vector<16x128xf32>
    %290 = arith.divf %288, %289 : vector<16x128xf32>
    %291 = arith.mulf %282, %252 : vector<16x128xf32>
    %292 = arith.mulf %276, %284 : vector<16x128xf32>
    %293 = arith.addf %291, %292 : vector<16x128xf32>
    %294 = math.tanh %293 : vector<16x128xf32>
    %295 = arith.mulf %290, %294 : vector<16x128xf32>
    %c16_i32_93 = arith.constant 16 : i32
    %296 = arith.muli %c6_i32, %c16_i32_93 : i32
    %c0_i32_94 = arith.constant 0 : i32
    %297 = arith.addi %c0_i32_94, %296 : i32
    %298 = tpu.assume_multiple %297, 16 : i32
    %299 = arith.truncf %295 : vector<16x128xf32> to vector<16x128xbf16>
    %300 = arith.index_cast %298 : i32 to index
    %c0_95 = arith.constant 0 : index
    %301 = vector.load %arg8[%300, %c0_95] : memref<128x128xbf16, #tpu.memory_space<vmem>>, vector<16x128xbf16>
    tpu.vector_store %arg8[%300, %c0_95], %299 {strides = array<i32>} : memref<128x128xbf16, #tpu.memory_space<vmem>>, vector<16x128xbf16>,
    %c7_i32 = arith.constant 7 : i32
    %c16_i32_96 = arith.constant 16 : i32
    %302 = arith.muli %c7_i32, %c16_i32_96 : i32
    %303 = tpu.assume_multiple %302, 16 : i32
    %304 = arith.index_cast %303 : i32 to index
    %c0_97 = arith.constant 0 : index
    %305 = vector.load %arg7[%304, %c0_97] : memref<128x512xbf16, #tpu.memory_space<vmem>>, vector<16x512xbf16>
    %306 = arith.extf %305 : vector<16x512xbf16> to vector<16x512xf32>
    %307 = arith.truncf %295 : vector<16x128xf32> to vector<16x128xbf16>
    %c0_98 = arith.constant 0 : index
    %c0_99 = arith.constant 0 : index
    %c0_100 = arith.constant 0 : index
    %308 = vector.load %arg4[%c0_98, %c0_99, %c0_100] : memref<1x128x512xbf16, #tpu.memory_space<vmem>>, vector<1x128x512xbf16>
    %309 = vector.shape_cast %308 : vector<1x128x512xbf16> to vector<128x512xbf16>
    %cst_101 = arith.constant dense<0.000000e+00> : vector<16x512xf32>
    %310 = tpu.matmul %307, %309, %cst_101 {dimension_numbers = #tpu.dot_dimension_numbers<[1], [0], [0], [1], [0, 0, 1, 1], [], []>} : vector<16x128xbf16>, vector<128x512xbf16>, vector<16x512xf32> -> vector<16x512xf32>
    %311 = arith.addf %306, %310 : vector<16x512xf32>
    %312 = vector.extract_strided_slice %311 {offsets = [0, 0], sizes = [16, 128], strides = [1, 1]} : vector<16x512xf32> to vector<16x128xf32>
    %313 = arith.negf %312 : vector<16x128xf32>
    %314 = math.exp %313 : vector<16x128xf32>
    %cst_102 = arith.constant 1.000000e+00 : f32
    %315 = vector.broadcast %cst_102 : f32 to vector<16x128xf32>
    %316 = arith.addf %315, %314 : vector<16x128xf32>
    %317 = arith.divf %315, %316 : vector<16x128xf32>
    %318 = vector.extract_strided_slice %311 {offsets = [0, 128], sizes = [16, 128], strides = [1, 1]} : vector<16x512xf32> to vector<16x128xf32>
    %319 = arith.negf %318 : vector<16x128xf32>
    %320 = math.exp %319 : vector<16x128xf32>
    %cst_103 = arith.constant 1.000000e+00 : f32
    %321 = vector.broadcast %cst_103 : f32 to vector<16x128xf32>
    %322 = arith.addf %321, %320 : vector<16x128xf32>
    %323 = arith.divf %321, %322 : vector<16x128xf32>
    %324 = vector.extract_strided_slice %311 {offsets = [0, 256], sizes = [16, 128], strides = [1, 1]} : vector<16x512xf32> to vector<16x128xf32>
    %325 = math.tanh %324 : vector<16x128xf32>
    %326 = vector.extract_strided_slice %311 {offsets = [0, 384], sizes = [16, 128], strides = [1, 1]} : vector<16x512xf32> to vector<16x128xf32>
    %327 = arith.negf %326 : vector<16x128xf32>
    %328 = math.exp %327 : vector<16x128xf32>
    %cst_104 = arith.constant 1.000000e+00 : f32
    %329 = vector.broadcast %cst_104 : f32 to vector<16x128xf32>
    %330 = arith.addf %329, %328 : vector<16x128xf32>
    %331 = arith.divf %329, %330 : vector<16x128xf32>
    %332 = arith.mulf %323, %293 : vector<16x128xf32>
    %333 = arith.mulf %317, %325 : vector<16x128xf32>
    %334 = arith.addf %332, %333 : vector<16x128xf32>
    %335 = math.tanh %334 : vector<16x128xf32>
    %336 = arith.mulf %331, %335 : vector<16x128xf32>
    %c16_i32_105 = arith.constant 16 : i32
    %337 = arith.muli %c7_i32, %c16_i32_105 : i32
    %c0_i32_106 = arith.constant 0 : i32
    %338 = arith.addi %c0_i32_106, %337 : i32
    %339 = tpu.assume_multiple %338, 16 : i32
    %340 = arith.truncf %336 : vector<16x128xf32> to vector<16x128xbf16>
    %341 = arith.index_cast %339 : i32 to index
    %c0_107 = arith.constant 0 : index
    %342 = vector.load %arg8[%341, %c0_107] : memref<128x128xbf16, #tpu.memory_space<vmem>>, vector<16x128xbf16>
    tpu.vector_store %arg8[%341, %c0_107], %340 {strides = array<i32>} : memref<128x128xbf16, #tpu.memory_space<vmem>>, vector<16x128xbf16>,
    %c8_i32 = arith.constant 8 : i32
    %c1_i32_108 = arith.constant 1 : i32
    %343 = arith.cmpi eq, %arg1, %c1_i32_108 : i32
    %344 = arith.extui %343 : i1 to i32
    %c0_i32_109 = arith.constant 0 : i32
    %345 = arith.cmpi ne, %344, %c0_i32_109 : i32
    scf.if %345 {
      %346 = arith.truncf %336 : vector<16x128xf32> to vector<16x128xbf16>
      %c0_110 = arith.constant 0 : index
      %c0_111 = arith.constant 0 : index
      %347 = vector.load %arg6[%c0_110, %c0_111] : memref<16x128xbf16, #tpu.memory_space<vmem>>, vector<16x128xbf16>
      tpu.vector_store %arg6[%c0_110, %c0_111], %346 {strides = array<i32>} : memref<16x128xbf16, #tpu.memory_space<vmem>>, vector<16x128xbf16>,
    } else {
    }
    return
  }
  func.func @transform_0(%arg0: i32, %arg1: i32) -> (i32, i32, i32) {
    %c0_i32 = arith.constant 0 : i32
    %c0_i32_0 = arith.constant 0 : i32
    %c0_i32_1 = arith.constant 0 : i32
    return %arg0, %c0_i32, %c0_i32_0 : i32, i32, i32
  }
  func.func @transform_1(%arg0: i32, %arg1: i32) -> (i32, i32, i32) {
    %c0_i32 = arith.constant 0 : i32
    %c0_i32_0 = arith.constant 0 : i32
    %c0_i32_1 = arith.constant 0 : i32
    return %arg1, %c0_i32, %c0_i32_0 : i32, i32, i32
  }
  func.func @transform_2(%arg0: i32, %arg1: i32) -> (i32, i32, i32) {
    %c0_i32 = arith.constant 0 : i32
    %c0_i32_0 = arith.constant 0 : i32
    %c0_i32_1 = arith.constant 0 : i32
    return %arg1, %c0_i32, %c0_i32_0 : i32, i32, i32
  }
  func.func @transform_3(%arg0: i32, %arg1: i32) -> (i32, i32, i32) {
    %c0_i32 = arith.constant 0 : i32
    %c0_i32_0 = arith.constant 0 : i32
    %c0_i32_1 = arith.constant 0 : i32
    return %arg1, %c0_i32, %c0_i32_0 : i32, i32, i32
  }
  func.func @transform_4(%arg0: i32, %arg1: i32) -> (i32, i32) {
    %c0_i32 = arith.constant 0 : i32
    %c0_i32_0 = arith.constant 0 : i32
    return %arg0, %c0_i32 : i32, i32
  }
}

</mosaic_0001>

<llo_original>
// kernel: tpu_custom_call.1
$region0: #{tpu_custom_call.1}
  #allocation0 [shape = 'u32[]', space=smem, size = 0x4, offset = 0x4, fixed_abs, tag = 'smem constant byte address 0x4 - core index']
  #allocation1 [shape = 'u32[144,128]{1,0:T(1,128)}', space=vmem, size = 0x12000, scoped, tag = 'internal scratch']
  #allocation2 [shape = 'bf16[128,512]{1,0:T(8,128)(2,1)}', space=vmem, size = 0x20000, scoped, tag = 'scratch operand']
  #allocation3 [shape = 'bf16[128,128]{1,0:T(8,128)(2,1)}', space=vmem, size = 0x8000, scoped, tag = 'scratch operand']
  %s0 = inlined_call_operand.hbm [shape: bf16[1,128,128], index: 0, kind: input, shape index: {}]
  %s1 = inlined_call_operand.hbm [shape: bf16[2,128,512], index: 1, kind: input, shape index: {}]
  %s2 = inlined_call_operand.hbm [shape: bf16[2,128,512], index: 2, kind: input, shape index: {}]
  %s3 = inlined_call_operand.hbm [shape: f32[2,1,512], index: 3, kind: input, shape index: {}]
  %s4 = inlined_call_operand.hbm [shape: bf16[16,128], index: 4, kind: output, shape index: {}]
  %s5 = sld [smem:[#allocation0]]
  $region73: #{tpu_custom_call.1} parent=0
    _
  %s7 = ssub.s32 1, %s5
  %s8 = scalar_select 0, %s7, %s5
  $region1: #{tpu_custom_call.1} parent=0
    #allocation4 [shape = 'u8[32768]{0}', space=vmem, size = 0x8000, scoped, tag = 'input window, operand 0, single buffered']
    #allocation5 [shape = 's32[2]{0}', space=sflag, size = 0x8, scoped, tag = 'scoped memory for tpu_custom_call.1']
    #allocation6 [shape = 's32[2]{0}', space=sflag, size = 0x8, scoped, tag = 'scoped memory for tpu_custom_call.1']
    #allocation7 [shape = 'u8[262144]{0}', space=vmem, size = 0x40000, scoped, tag = 'input window, operand 1']
    #allocation8 [shape = 's32[2]{0}', space=sflag, size = 0x8, scoped, tag = 'scoped memory for tpu_custom_call.1']
    #allocation9 [shape = 'u8[262144]{0}', space=vmem, size = 0x40000, scoped, tag = 'input window, operand 2']
    #allocation10 [shape = 'u8[4096]{0}', space=vmem, size = 0x1000, scoped, tag = 'input window, operand 3']
    #allocation11 [shape = 's32[2]{0}', space=sflag, size = 0x8, scoped, tag = 'scoped memory for tpu_custom_call.1']
    #allocation12 [shape = 'u8[4096]{0}', space=vmem, size = 0x1000, scoped, tag = 'output window, operand 0, single buffered']
    %9 = vsyncpa [#allocation5], 0
    %10 = vsyncpa [#allocation8], 0
    %s11 = scalar_lea.sflag [#allocation8], 1
    %12 = vsyncpa %s11, 0
    %13 = vsyncpa [#allocation11], 0
    %s14 = scalar_lea.sflag [#allocation11], 1
    %15 = vsyncpa %s14, 0
    %16 = vsyncpa [#allocation6], 0
    loop: start=0, step=1, limit=4
    $region2: #{tpu_custom_call.1} parent=1 // loop_pre_header
      _
    $region3: #{tpu_custom_call.1} parent=1 // loop_header
      %s18 = sphi 0, %s22
      %p19 = scmp.ge.s32.totalorder %s18, 4
      %s25 = sphi 0, %s37
      %s26 = sphi 0, %s33
      %s27 = sphi 0, %s25
      %s28 = sphi 0, %s26
      %s29 = sphi 0, %s27
      %s30 = sphi 0, %s28
      %s40 = sphi 0, %s42
      %s43 = sphi 0, %s40
      %s44 = sphi 0, %s43
      %s60 = sphi 0, %s44
      %s66 = sphi 0, %s68
      %s69 = sphi 0, %s66
      %s70 = sphi 0, %s69
      %s86 = sphi 0, %s70
      %s92 = sphi 0, %s94
      %s95 = sphi 0, %s92
      %s96 = sphi 0, %s95
      %s112 = sphi 0, %s96
      %s118 = sphi 0, %s120
      %s121 = sphi 0, %s118
      %s122 = sphi 0, %s121
      %s138 = sphi 0, %s122
      %s144 = sphi 0, %s146
      %s147 = sphi 0, %s144
      %s148 = sphi 0, %s147
      %s164 = sphi 0, %s148
    $region4: #{tpu_custom_call.1} parent=1 // loop_header_branch
      %21 = sbr.rel (%p19) target = $region8
    $region5: #{tpu_custom_call.1} parent=1 // loop_body
      %s23 = ssub.s32 %s18, 1
      %s24 = ssub.s32 %s18, 2
      %s31 = sadd.s32 1, %s26
      %p32 = scmp.ge.s32.totalorder %s31, 2
      %s33 = scalar_select %p32, 0, %s31
      %s34 = sadd.s32 1, %s25
      %s35 = scalar_select %p32, %s34, %s25
      %p36 = scmp.ge.s32.totalorder %s35, 1
      %s37 = scalar_select %p36, 0, %s35
      %s38 = ssub.s32 %s25, %s37
      %p39 = scmp.eq.s32.totalorder %s38, 0
      %s41 = sadd.s32 %s40, 1
      %s42 = scalar_select %p39, %s40, %s41
      %p45 = pneg %p39
      %p46 = scmp.eq.s32.totalorder %s18, 1
      %p47 = por %p45, %p46
      %p48 = scmp.ne.s32.totalorder %s40, %s43
      %p49 = scmp.eq.s32.totalorder %s18, 0
      %p50 = por %p48, %p49
      %p51 = scmp.ne.s32.totalorder %s40, %s43
      %p52 = scmp.eq.s32.totalorder %s23, 1
      %p53 = por %p51, %p52
      %p54 = scmp.ne.s32.totalorder %s43, %s44
      %p55 = scmp.eq.s32.totalorder %s23, 0
      %p56 = por %p54, %p55
      %p57 = scmp.ne.s32.totalorder %s43, %s44
      %p58 = scmp.eq.s32.totalorder %s24, 1
      %p59 = por %p57, %p58
      %p61 = scmp.ne.s32.totalorder %s44, %s60
      %p62 = scmp.eq.s32.totalorder %s24, 0
      %p63 = por %p61, %p62
      %s64 = ssub.s32 %s26, %s33
      %p65 = scmp.eq.s32.totalorder %s64, 0
      %s67 = sadd.s32 %s66, 1
      %s68 = scalar_select %p65, %s66, %s67
      %p71 = pneg %p65
      %p72 = scmp.eq.s32.totalorder %s18, 1
      %p73 = por %p71, %p72
      %p74 = scmp.ne.s32.totalorder %s66, %s69
      %p75 = scmp.eq.s32.totalorder %s18, 0
      %p76 = por %p74, %p75
      %p77 = scmp.ne.s32.totalorder %s66, %s69
      %p78 = scmp.eq.s32.totalorder %s23, 1
      %p79 = por %p77, %p78
      %p80 = scmp.ne.s32.totalorder %s69, %s70
      %p81 = scmp.eq.s32.totalorder %s23, 0
      %p82 = por %p80, %p81
      %p83 = scmp.ne.s32.totalorder %s69, %s70
      %p84 = scmp.eq.s32.totalorder %s24, 1
      %p85 = por %p83, %p84
      %p87 = scmp.ne.s32.totalorder %s70, %s86
      %p88 = scmp.eq.s32.totalorder %s24, 0
      %p89 = por %p87, %p88
      %s90 = ssub.s32 %s26, %s33
      %p91 = scmp.eq.s32.totalorder %s90, 0
      %s93 = sadd.s32 %s92, 1
      %s94 = scalar_select %p91, %s92, %s93
      %p97 = pneg %p91
      %p98 = scmp.eq.s32.totalorder %s18, 1
      %p99 = por %p97, %p98
      %p100 = scmp.ne.s32.totalorder %s92, %s95
      %p101 = scmp.eq.s32.totalorder %s18, 0
      %p102 = por %p100, %p101
      %p103 = scmp.ne.s32.totalorder %s92, %s95
      %p104 = scmp.eq.s32.totalorder %s23, 1
      %p105 = por %p103, %p104
      %p106 = scmp.ne.s32.totalorder %s95, %s96
      %p107 = scmp.eq.s32.totalorder %s23, 0
      %p108 = por %p106, %p107
      %p109 = scmp.ne.s32.totalorder %s95, %s96
      %p110 = scmp.eq.s32.totalorder %s24, 1
      %p111 = por %p109, %p110
      %p113 = scmp.ne.s32.totalorder %s96, %s112
      %p114 = scmp.eq.s32.totalorder %s24, 0
      %p115 = por %p113, %p114
      %s116 = ssub.s32 %s26, %s33
      %p117 = scmp.eq.s32.totalorder %s116, 0
      %s119 = sadd.s32 %s118, 1
      %s120 = scalar_select %p117, %s118, %s119
      %p123 = pneg %p117
      %p124 = scmp.eq.s32.totalorder %s18, 1
      %p125 = por %p123, %p124
      %p126 = scmp.ne.s32.totalorder %s118, %s121
      %p127 = scmp.eq.s32.totalorder %s18, 0
      %p128 = por %p126, %p127
      %p129 = scmp.ne.s32.totalorder %s118, %s121
      %p130 = scmp.eq.s32.totalorder %s23, 1
      %p131 = por %p129, %p130
      %p132 = scmp.ne.s32.totalorder %s121, %s122
      %p133 = scmp.eq.s32.totalorder %s23, 0
      %p134 = por %p132, %p133
      %p135 = scmp.ne.s32.totalorder %s121, %s122
      %p136 = scmp.eq.s32.totalorder %s24, 1
      %p137 = por %p135, %p136
      %p139 = scmp.ne.s32.totalorder %s122, %s138
      %p140 = scmp.eq.s32.totalorder %s24, 0
      %p141 = por %p139, %p140
      %s142 = ssub.s32 %s25, %s37
      %p143 = scmp.eq.s32.totalorder %s142, 0
      %s145 = sadd.s32 %s144, 1
      %s146 = scalar_select %p143, %s144, %s145
      %p149 = pneg %p143
      %p150 = scmp.eq.s32.totalorder %s18, 1
      %p151 = por %p149, %p150
      %p152 = scmp.ne.s32.totalorder %s144, %s147
      %p153 = scmp.eq.s32.totalorder %s18, 0
      %p154 = por %p152, %p153
      %p155 = scmp.ne.s32.totalorder %s144, %s147
      %p156 = scmp.eq.s32.totalorder %s23, 1
      %p157 = por %p155, %p156
      %p158 = scmp.ne.s32.totalorder %s147, %s148
      %p159 = scmp.eq.s32.totalorder %s23, 0
      %p160 = por %p158, %p159
      %p161 = scmp.ne.s32.totalorder %s147, %s148
      %p162 = scmp.eq.s32.totalorder %s24, 1
      %p163 = por %p161, %p162
      %p165 = scmp.ne.s32.totalorder %s148, %s164
      %p166 = scmp.eq.s32.totalorder %s24, 0
      %p167 = por %p165, %p166
      %p168 = scmp.le.s32.totalorder 1, %s18
      %p169 = scmp.lt.s32.totalorder %s18, 3
      %p170 = pnand %p168, %p169
      %p171 = pneg %p170
      // Predicated region
      $region9: #{tpu_custom_call.1} parent=5 // pred_check
        _
      $region10: #{tpu_custom_call.1} parent=5 // pred_check_branch
        %173 = sbr.rel (%p170) target = $region12
      $region11: #{tpu_custom_call.1} parent=5 // pred_region
        %s174 = ssub.s32 %s18, 1
        // Predicated region
        $region13: #{tpu_custom_call.1} parent=11 // pred_check
          %p175 = pneg %p56
        $region14: #{tpu_custom_call.1} parent=11 // pred_check_branch
          %177 = sbr.rel (%p175) target = $region16
        $region15: #{tpu_custom_call.1} parent=11 // pred_region
          %s179 = ssub.s32 1024, 1024
          %180 = vsyncadd [#allocation5], %s179
          %s181 = smul.addr %s27, 16
          %s182 = smul.addr %s181, 64
          %s183 = scalar_lea.hbm %s0, %s182
          %s184 = sshll.u32 [#allocation4], 4
          %s185 = int_to_ptr.vmem [resolvable:$true] %s184
          %190 = dma.hbm_to_vmem [thread:$0]  %s183, 1024, %s185, [#allocation5], 64, 64, 4
        $region16: #{tpu_custom_call.1} parent=11 // pred_fallthru
          _
      $region12: #{tpu_custom_call.1} parent=5 // pred_fallthru
        _
      %p191 = scmp.lt.s32.totalorder %s18, 2
      // Predicated region
      $region17: #{tpu_custom_call.1} parent=5 // pred_check
        %p192 = pneg %p191
      $region18: #{tpu_custom_call.1} parent=5 // pred_check_branch
        %194 = sbr.rel (%p192) target = $region20
      $region19: #{tpu_custom_call.1} parent=5 // pred_region
        // Predicated region
        $region21: #{tpu_custom_call.1} parent=19 // pred_check
          %p195 = pneg %p76
        $region22: #{tpu_custom_call.1} parent=19 // pred_check_branch
          %197 = sbr.rel (%p195) target = $region24
        $region23: #{tpu_custom_call.1} parent=19 // pred_region
          %s198 = sand.u32 %s18, 1
          %s199 = scalar_lea.sflag [#allocation8], %s198
          %s200 = sand.u32 %s66, 1
          %s201 = smul.addr %s200, 256
          %s202 = scalar_lea.vmem [#allocation7], %s201
          %s204 = ssub.s32 4096, 4096
          %205 = vsyncadd %s199, %s204
          %s206 = smul.addr %s26, 64
          %s207 = smul.addr %s206, 64
          %s208 = scalar_lea.hbm %s1, %s207
          %s209 = sshll.u32 %s202, 4
          %s210 = int_to_ptr.vmem [resolvable:$true] %s209
          %215 = dma.hbm_to_vmem [thread:$0]  %s208, 4096, %s210, %s199, 256, 256, 16
        $region24: #{tpu_custom_call.1} parent=19 // pred_fallthru
          _
        // Predicated region
        $region25: #{tpu_custom_call.1} parent=19 // pred_check
          %p216 = pneg %p102
        $region26: #{tpu_custom_call.1} parent=19 // pred_check_branch
          %218 = sbr.rel (%p216) target = $region28
        $region27: #{tpu_custom_call.1} parent=19 // pred_region
          %s219 = sand.u32 %s18, 1
          %s220 = scalar_lea.sflag [#allocation8], %s219
          %s221 = sand.u32 %s92, 1
          %s222 = smul.addr %s221, 256
          %s223 = scalar_lea.vmem [#allocation9], %s222
          %s225 = ssub.s32 4096, 4096
          %226 = vsyncadd %s220, %s225
          %s227 = smul.addr %s26, 64
          %s228 = smul.addr %s227, 64
          %s229 = scalar_lea.hbm %s2, %s228
          %s230 = sshll.u32 %s223, 4
          %s231 = int_to_ptr.vmem [resolvable:$true] %s230
          %236 = dma.hbm_to_vmem [thread:$0]  %s229, 4096, %s231, %s220, 256, 256, 16
        $region28: #{tpu_custom_call.1} parent=19 // pred_fallthru
          _
        // Predicated region
        $region29: #{tpu_custom_call.1} parent=19 // pred_check
          %p237 = pneg %p128
        $region30: #{tpu_custom_call.1} parent=19 // pred_check_branch
          %239 = sbr.rel (%p237) target = $region32
        $region31: #{tpu_custom_call.1} parent=19 // pred_region
          %s240 = sand.u32 %s118, 1
          %s241 = scalar_lea.sflag [#allocation11], %s240
          %s242 = sand.u32 %s118, 1
          %s243 = smul.addr %s242, 4
          %s244 = scalar_lea.vmem [#allocation10], %s243
          %s246 = ssub.s32 64, 64
          %247 = vsyncadd %s241, %s246
          %s248 = smul.addr %s26, 4
          %s249 = smul.addr %s248, 16
          %s250 = scalar_lea.hbm %s3, %s249
          %s252 = sshll.u32 %s244, 4
          %s253 = int_to_ptr.vmem [resolvable:$true] %s252
          %255 = dma.hbm_to_vmem [thread:$0]  %s250, 64, %s253, %s241
        $region32: #{tpu_custom_call.1} parent=19 // pred_fallthru
          _
      $region20: #{tpu_custom_call.1} parent=5 // pred_fallthru
        _
      %p256 = scmp.le.s32.totalorder 1, %s18
      %p257 = scmp.lt.s32.totalorder %s18, 3
      %p258 = pnand %p256, %p257
      %p259 = pneg %p258
      // Predicated region
      $region33: #{tpu_custom_call.1} parent=5 // pred_check
        _
      $region34: #{tpu_custom_call.1} parent=5 // pred_check_branch
        %261 = sbr.rel (%p258) target = $region36
      $region35: #{tpu_custom_call.1} parent=5 // pred_region
        %s262 = ssub.s32 %s18, 1
        // Predicated region
        $region37: #{tpu_custom_call.1} parent=35 // pred_check
          %p263 = pneg %p56
        $region38: #{tpu_custom_call.1} parent=35 // pred_check_branch
          %265 = sbr.rel (%p263) target = $region40
        $region39: #{tpu_custom_call.1} parent=35 // pred_region
          %266 = dma.done [#allocation5], 1024
        $region40: #{tpu_custom_call.1} parent=35 // pred_fallthru
          _
        %s267 = sand.u32 %s23, 1
        %s268 = scalar_lea.sflag [#allocation8], %s267
        %s269 = sand.u32 %s69, 1
        %s270 = smul.addr %s269, 256
        %s271 = scalar_lea.vmem [#allocation7], %s270
        // Predicated region
        $region41: #{tpu_custom_call.1} parent=35 // pred_check
          %p272 = pneg %p82
        $region42: #{tpu_custom_call.1} parent=35 // pred_check_branch
          %274 = sbr.rel (%p272) target = $region44
        $region43: #{tpu_custom_call.1} parent=35 // pred_region
          %275 = dma.done %s268, 4096
        $region44: #{tpu_custom_call.1} parent=35 // pred_fallthru
          _
        %s276 = sand.u32 %s23, 1
        %s277 = scalar_lea.sflag [#allocation8], %s276
        %s278 = sand.u32 %s95, 1
        %s279 = smul.addr %s278, 256
        %s280 = scalar_lea.vmem [#allocation9], %s279
        // Predicated region
        $region45: #{tpu_custom_call.1} parent=35 // pred_check
          %p281 = pneg %p108
        $region46: #{tpu_custom_call.1} parent=35 // pred_check_branch
          %283 = sbr.rel (%p281) target = $region48
        $region47: #{tpu_custom_call.1} parent=35 // pred_region
          %284 = dma.done %s277, 4096
        $region48: #{tpu_custom_call.1} parent=35 // pred_fallthru
          _
        %s285 = sand.u32 %s121, 1
        %s286 = scalar_lea.sflag [#allocation11], %s285
        %s287 = sand.u32 %s121, 1
        %s288 = smul.addr %s287, 4
        %s289 = scalar_lea.vmem [#allocation10], %s288
        // Predicated region
        $region49: #{tpu_custom_call.1} parent=35 // pred_check
          %p290 = pneg %p134
        $region50: #{tpu_custom_call.1} parent=35 // pred_check_branch
          %292 = sbr.rel (%p290) target = $region52
        $region51: #{tpu_custom_call.1} parent=35 // pred_region
          %293 = dma.done %s286, 64
        $region52: #{tpu_custom_call.1} parent=35 // pred_fallthru
          _
        %p294 = pneg %p56
        %p295 = pneg %p53
        %s296 = sand.u32 %s23, 1
        %s297 = scalar_lea.sflag [#allocation8], %s296
        %s298 = sand.u32 %s69, 1
        %s299 = smul.addr %s298, 256
        %s300 = scalar_lea.vmem [#allocation7], %s299
        %p301 = pneg %p82
        %p302 = pneg %p79
        %s303 = sand.u32 %s23, 1
        %s304 = scalar_lea.sflag [#allocation8], %s303
        %s305 = sand.u32 %s95, 1
        %s306 = smul.addr %s305, 256
        %s307 = scalar_lea.vmem [#allocation9], %s306
        %p308 = pneg %p108
        %p309 = pneg %p105
        %s310 = sand.u32 %s121, 1
        %s311 = scalar_lea.sflag [#allocation11], %s310
        %s312 = sand.u32 %s121, 1
        %s313 = smul.addr %s312, 4
        %s314 = scalar_lea.vmem [#allocation10], %s313
        %p315 = pneg %p134
        %p316 = pneg %p131
        %p317 = pneg %p160
        %p318 = pneg %p157
        %s319 = smul.u32 2, %s27
        %p321 = scmp.eq.s32.totalorder %s28, 0
        // Predicated region
        $region53: #{tpu_custom_call.1} parent=35 // pred_check
          %p322 = pneg %p321
        $region54: #{tpu_custom_call.1} parent=35 // pred_check_branch
          %324 = sbr.rel (%p322) target = $region56
        $region55: #{tpu_custom_call.1} parent=35 // pred_region
          %v325 = vld [vmem:[#allocation4] sm:$0xf]
          %v326 = vld [vmem:[#allocation4 + $0x4] sm:$0xf]
          %v327 = vld [vmem:[#allocation4 + $0x8] sm:$0xf]
          %v328 = vld [vmem:[#allocation4 + $0xc] sm:$0xf]
          %v329 = vld [vmem:[#allocation4 + $0x10] sm:$0xf]
          %v330 = vld [vmem:[#allocation4 + $0x14] sm:$0xf]
          %v331 = vld [vmem:[#allocation4 + $0x18] sm:$0xf]
          %v332 = vld [vmem:[#allocation4 + $0x1c] sm:$0xf]
          %v333 = vld [vmem:[#allocation4 + $0x20] sm:$0xf]
          %v334 = vld [vmem:[#allocation4 + $0x24] sm:$0xf]
          %v335 = vld [vmem:[#allocation4 + $0x28] sm:$0xf]
          %v336 = vld [vmem:[#allocation4 + $0x2c] sm:$0xf]
          %v337 = vld [vmem:[#allocation4 + $0x30] sm:$0xf]
          %v338 = vld [vmem:[#allocation4 + $0x34] sm:$0xf]
          %v339 = vld [vmem:[#allocation4 + $0x38] sm:$0xf]
          %v340 = vld [vmem:[#allocation4 + $0x3c] sm:$0xf]
          %341 = vst [vmem:[#allocation3] sm:$0xf] %v325
          %342 = vst [vmem:[#allocation3 + $0x4] sm:$0xf] %v326
          %343 = vst [vmem:[#allocation3 + $0x8] sm:$0xf] %v327
          %344 = vst [vmem:[#allocation3 + $0xc] sm:$0xf] %v328
          %345 = vst [vmem:[#allocation3 + $0x10] sm:$0xf] %v329
          %346 = vst [vmem:[#allocation3 + $0x14] sm:$0xf] %v330
          %347 = vst [vmem:[#allocation3 + $0x18] sm:$0xf] %v331
          %348 = vst [vmem:[#allocation3 + $0x1c] sm:$0xf] %v332
          %349 = vst [vmem:[#allocation3 + $0x20] sm:$0xf] %v333
          %350 = vst [vmem:[#allocation3 + $0x24] sm:$0xf] %v334
          %351 = vst [vmem:[#allocation3 + $0x28] sm:$0xf] %v335
          %352 = vst [vmem:[#allocation3 + $0x2c] sm:$0xf] %v336
          %353 = vst [vmem:[#allocation3 + $0x30] sm:$0xf] %v337
          %354 = vst [vmem:[#allocation3 + $0x34] sm:$0xf] %v338
          %355 = vst [vmem:[#allocation3 + $0x38] sm:$0xf] %v339
          %356 = vst [vmem:[#allocation3 + $0x3c] sm:$0xf] %v340
        $region56: #{tpu_custom_call.1} parent=35 // pred_fallthru
          _
        %v357 = vld [vmem:[#allocation3] sm:$0xf]
        %v358 = vld [vmem:[#allocation3 + $0x4] sm:$0xf]
        %v359 = vld [vmem:[#allocation3 + $0x8] sm:$0xf]
        %v360 = vld [vmem:[#allocation3 + $0xc] sm:$0xf]
        %v361 = vld [vmem:[#allocation3 + $0x10] sm:$0xf]
        %v362 = vld [vmem:[#allocation3 + $0x14] sm:$0xf]
        %v363 = vld [vmem:[#allocation3 + $0x18] sm:$0xf]
        %v364 = vld [vmem:[#allocation3 + $0x1c] sm:$0xf]
        %v365 = vld [vmem:[#allocation3 + $0x20] sm:$0xf]
        %v366 = vld [vmem:[#allocation3 + $0x24] sm:$0xf]
        %v367 = vld [vmem:[#allocation3 + $0x28] sm:$0xf]
        %v368 = vld [vmem:[#allocation3 + $0x2c] sm:$0xf]
        %v369 = vld [vmem:[#allocation3 + $0x30] sm:$0xf]
        %v370 = vld [vmem:[#allocation3 + $0x34] sm:$0xf]
        %v371 = vld [vmem:[#allocation3 + $0x38] sm:$0xf]
        %v372 = vld [vmem:[#allocation3 + $0x3c] sm:$0xf]
        %v373 = vld [vmem:[%s271] sm:$0xff]
        %v374 = vld [vmem:[%s271 + $0x8] sm:$0xff]
        %v375 = vld [vmem:[%s271 + $0x10] sm:$0xff]
        %v376 = vld [vmem:[%s271 + $0x18] sm:$0xff]
        %v377 = vld [vmem:[%s271 + $0x20] sm:$0xff]
        %v378 = vld [vmem:[%s271 + $0x28] sm:$0xff]
        %v379 = vld [vmem:[%s271 + $0x30] sm:$0xff]
        %v380 = vld [vmem:[%s271 + $0x38] sm:$0xff]
        %v381 = vld [vmem:[%s271 + $0x40] sm:$0xff]
        %v382 = vld [vmem:[%s271 + $0x48] sm:$0xff]
        %v383 = vld [vmem:[%s271 + $0x50] sm:$0xff]
        %v384 = vld [vmem:[%s271 + $0x58] sm:$0xff]
        %v385 = vld [vmem:[%s271 + $0x60] sm:$0xff]
        %v386 = vld [vmem:[%s271 + $0x68] sm:$0xff]
        %v387 = vld [vmem:[%s271 + $0x70] sm:$0xff]
        %v388 = vld [vmem:[%s271 + $0x78] sm:$0xff]
        %v389 = vld [vmem:[%s271 + $0x80] sm:$0xff]
        %v390 = vld [vmem:[%s271 + $0x88] sm:$0xff]
        %v391 = vld [vmem:[%s271 + $0x90] sm:$0xff]
        %v392 = vld [vmem:[%s271 + $0x98] sm:$0xff]
        %v393 = vld [vmem:[%s271 + $0xa0] sm:$0xff]
        %v394 = vld [vmem:[%s271 + $0xa8] sm:$0xff]
        %v395 = vld [vmem:[%s271 + $0xb0] sm:$0xff]
        %v396 = vld [vmem:[%s271 + $0xb8] sm:$0xff]
        %v397 = vld [vmem:[%s271 + $0xc0] sm:$0xff]
        %v398 = vld [vmem:[%s271 + $0xc8] sm:$0xff]
        %v399 = vld [vmem:[%s271 + $0xd0] sm:$0xff]
        %v400 = vld [vmem:[%s271 + $0xd8] sm:$0xff]
        %v401 = vld [vmem:[%s271 + $0xe0] sm:$0xff]
        %v402 = vld [vmem:[%s271 + $0xe8] sm:$0xff]
        %v403 = vld [vmem:[%s271 + $0xf0] sm:$0xff]
        %v404 = vld [vmem:[%s271 + $0xf8] sm:$0xff]
        %v405 = vld [vmem:[%s289] sm:$0xf]
        %v407 = vlaneseq
        %v408 = vshrl.u32 %v407, 7
        %v409 = vsub.s32 0, %v408
        %v410 = vrot.slane %v405, %v409
        %v411 = vlaneseq
        %v412 = vshrl.u32 %v411, 7
        %v413 = vsub.s32 1, %v412
        %v414 = vrot.slane %v405, %v413
        %v415 = vlaneseq
        %v416 = vshrl.u32 %v415, 7
        %v417 = vsub.s32 2, %v416
        %v418 = vrot.slane %v405, %v417
        %v419 = vlaneseq
        %v420 = vshrl.u32 %v419, 7
        %v421 = vsub.s32 3, %v420
        %v422 = vrot.slane %v405, %v421
        %v443 = vunpack.c.l.b16 %v357
        %v444 = vunpack.c.l.b16 %v358
        %v445 = vunpack.c.l.b16 %v359
        %v446 = vunpack.c.l.b16 %v360
        %v447 = vunpack.c.l.b16 %v361
        %v448 = vunpack.c.l.b16 %v362
        %v449 = vunpack.c.l.b16 %v363
        %v450 = vunpack.c.l.b16 %v364
        %v451 = vunpack.c.l.b16 %v365
        %v452 = vunpack.c.l.b16 %v366
        %v453 = vunpack.c.l.b16 %v367
        %v454 = vunpack.c.l.b16 %v368
        %v455 = vunpack.c.l.b16 %v369
        %v456 = vunpack.c.l.b16 %v370
        %v457 = vunpack.c.l.b16 %v371
        %v458 = vunpack.c.l.b16 %v372
        %v459 = vpack.c.b16 %v444, %v443
        %v460 = vpack.c.b16 %v446, %v445
        %v461 = vpack.c.b16 %v448, %v447
        %v462 = vpack.c.b16 %v450, %v449
        %v463 = vpack.c.b16 %v452, %v451
        %v464 = vpack.c.b16 %v454, %v453
        %v465 = vpack.c.b16 %v456, %v455
        %v466 = vpack.c.b16 %v458, %v457
        %v507 = vunpack.c.l.b16 %v373
        %v508 = vunpack.c.h.b16 %v373
        %v509 = vunpack.c.l.b16 %v374
        %v510 = vunpack.c.h.b16 %v374
        %v511 = vunpack.c.l.b16 %v375
        %v512 = vunpack.c.h.b16 %v375
        %v513 = vunpack.c.l.b16 %v376
        %v514 = vunpack.c.h.b16 %v376
        %v515 = vunpack.c.l.b16 %v377
        %v516 = vunpack.c.h.b16 %v377
        %v517 = vunpack.c.l.b16 %v378
        %v518 = vunpack.c.h.b16 %v378
        %v519 = vunpack.c.l.b16 %v379
        %v520 = vunpack.c.h.b16 %v379
        %v521 = vunpack.c.l.b16 %v380
        %v522 = vunpack.c.h.b16 %v380
        %v523 = vunpack.c.l.b16 %v381
        %v524 = vunpack.c.h.b16 %v381
        %v525 = vunpack.c.l.b16 %v382
        %v526 = vunpack.c.h.b16 %v382
        %v527 = vunpack.c.l.b16 %v383
        %v528 = vunpack.c.h.b16 %v383
        %v529 = vunpack.c.l.b16 %v384
        %v530 = vunpack.c.h.b16 %v384
        %v531 = vunpack.c.l.b16 %v385
        %v532 = vunpack.c.h.b16 %v385
        %v533 = vunpack.c.l.b16 %v386
        %v534 = vunpack.c.h.b16 %v386
        %v535 = vunpack.c.l.b16 %v387
        %v536 = vunpack.c.h.b16 %v387
        %v537 = vunpack.c.l.b16 %v388
        %v538 = vunpack.c.h.b16 %v388
        %v539 = vunpack.c.l.b16 %v389
        %v540 = vunpack.c.h.b16 %v389
        %v541 = vunpack.c.l.b16 %v390
        %v542 = vunpack.c.h.b16 %v390
        %v543 = vunpack.c.l.b16 %v391
        %v544 = vunpack.c.h.b16 %v391
        %v545 = vunpack.c.l.b16 %v392
        %v546 = vunpack.c.h.b16 %v392
        %v547 = vunpack.c.l.b16 %v393
        %v548 = vunpack.c.h.b16 %v393
        %v549 = vunpack.c.l.b16 %v394
        %v550 = vunpack.c.h.b16 %v394
        %v551 = vunpack.c.l.b16 %v395
        %v552 = vunpack.c.h.b16 %v395
        %v553 = vunpack.c.l.b16 %v396
        %v554 = vunpack.c.h.b16 %v396
        %v555 = vunpack.c.l.b16 %v397
        %v556 = vunpack.c.h.b16 %v397
        %v557 = vunpack.c.l.b16 %v398
        %v558 = vunpack.c.h.b16 %v398
        %v559 = vunpack.c.l.b16 %v399
        %v560 = vunpack.c.h.b16 %v399
        %v561 = vunpack.c.l.b16 %v400
        %v562 = vunpack.c.h.b16 %v400
        %v563 = vunpack.c.l.b16 %v401
        %v564 = vunpack.c.h.b16 %v401
        %v565 = vunpack.c.l.b16 %v402
        %v566 = vunpack.c.h.b16 %v402
        %v567 = vunpack.c.l.b16 %v403
        %v568 = vunpack.c.h.b16 %v403
        %v569 = vunpack.c.l.b16 %v404
        %v570 = vunpack.c.h.b16 %v404
        %v571 = vpack.c.b16 %v511, %v507
        %v572 = vpack.c.b16 %v512, %v508
        %v573 = vpack.c.b16 %v513, %v509
        %v574 = vpack.c.b16 %v514, %v510
        %v575 = vpack.c.b16 %v519, %v515
        %v576 = vpack.c.b16 %v520, %v516
        %v577 = vpack.c.b16 %v521, %v517
        %v578 = vpack.c.b16 %v522, %v518
        %v579 = vpack.c.b16 %v527, %v523
        %v580 = vpack.c.b16 %v528, %v524
        %v581 = vpack.c.b16 %v529, %v525
        %v582 = vpack.c.b16 %v530, %v526
        %v583 = vpack.c.b16 %v535, %v531
        %v584 = vpack.c.b16 %v536, %v532
        %v585 = vpack.c.b16 %v537, %v533
        %v586 = vpack.c.b16 %v538, %v534
        %v587 = vpack.c.b16 %v543, %v539
        %v588 = vpack.c.b16 %v544, %v540
        %v589 = vpack.c.b16 %v545, %v541
        %v590 = vpack.c.b16 %v546, %v542
        %v591 = vpack.c.b16 %v551, %v547
        %v592 = vpack.c.b16 %v552, %v548
        %v593 = vpack.c.b16 %v553, %v549
        %v594 = vpack.c.b16 %v554, %v550
        %v595 = vpack.c.b16 %v559, %v555
        %v596 = vpack.c.b16 %v560, %v556
        %v597 = vpack.c.b16 %v561, %v557
        %v598 = vpack.c.b16 %v562, %v558
        %v599 = vpack.c.b16 %v567, %v563
        %v600 = vpack.c.b16 %v568, %v564
        %v601 = vpack.c.b16 %v569, %v565
        %v602 = vpack.c.b16 %v570, %v566
        %635 = vmatprep.subr.bf16.mxu0 %v600
        %636 = vmatpush1.bf16.msra.mxu0 %v599
        %637 = vmatprep.subr.bf16.mxu0 %v596
        %638 = vmatpush1.bf16.msra.mxu0 %v595
        %639 = vmatprep.subr.bf16.mxu0 %v592
        %640 = vmatpush1.bf16.msra.mxu0 %v591
        %641 = vmatprep.subr.bf16.mxu0 %v588
        %642 = vmatpush1.bf16.msra.mxu0 %v587
        %643 = vmatprep.subr.bf16.mxu0 %v584
        %644 = vmatpush1.bf16.msra.mxu0 %v583
        %645 = vmatprep.subr.bf16.mxu0 %v580
        %646 = vmatpush1.bf16.msra.mxu0 %v579
        %647 = vmatprep.subr.bf16.mxu0 %v576
        %648 = vmatpush1.bf16.msra.mxu0 %v575
        %649 = vmatprep.subr.bf16.mxu0 %v572
        %650 = vmatpush1.bf16.msra.mxu0 %v571
        %651 = vmatprep.subr.bf16.mxu0 0
        %652 = vmatpush2.bf16.msra.mxu0 0
        %653 = vmatprep.subr.bf16.mxu0 0
        %654 = vmatpush2.bf16.msra.mxu0 0
        %655 = vmatprep.subr.bf16.mxu0 0
        %656 = vmatpush2.bf16.msra.mxu0 0
        %657 = vmatprep.subr.bf16.mxu0 0
        %658 = vmatpush2.bf16.msra.mxu0 0
        %659 = vmatprep.subr.bf16.mxu0 0
        %660 = vmatpush2.bf16.msra.mxu0 0
        %661 = vmatprep.subr.bf16.mxu0 0
        %662 = vmatpush2.bf16.msra.mxu0 0
        %663 = vmatprep.subr.bf16.mxu0 0
        %664 = vmatpush2.bf16.msra.mxu0 0
        %665 = vmatprep.subr.bf16.mxu0 0
        %666 = vmatpush2.bf16.msra.mxu0 0
        %667 = vmatprep.mubr.bf16.mxu0 0
        %668 = vmatmul.mubr.bf16.gmra.mxu0 %v459
        %v669 = vpop.f32.mrf.mxu0
        %v670 = vadd.f32 %v410, %v669
        %v671 = vpop.f32.mrf.mxu0
        %v672 = vadd.f32 %v414, %v671
        %v673 = vpop.f32.mrf.mxu0
        %v674 = vadd.f32 %v410, %v673
        %v675 = vpop.f32.mrf.mxu0
        %v676 = vadd.f32 %v414, %v675
        %677 = vmatprep.mubr.bf16.mxu0 0
        %678 = vmatmul.mubr.bf16.gmra.mxu0 %v460
        %v679 = vpop.f32.mrf.mxu0
        %v680 = vadd.f32 %v410, %v679
        %v681 = vpop.f32.mrf.mxu0
        %v682 = vadd.f32 %v414, %v681
        %v683 = vpop.f32.mrf.mxu0
        %v684 = vadd.f32 %v410, %v683
        %v685 = vpop.f32.mrf.mxu0
        %v686 = vadd.f32 %v414, %v685
        %687 = vmatprep.mubr.bf16.mxu0 0
        %688 = vmatmul.mubr.bf16.gmra.mxu0 %v461
        %v689 = vpop.f32.mrf.mxu0
        %v690 = vadd.f32 %v410, %v689
        %v691 = vpop.f32.mrf.mxu0
        %v692 = vadd.f32 %v414, %v691
        %v693 = vpop.f32.mrf.mxu0
        %v694 = vadd.f32 %v410, %v693
        %v695 = vpop.f32.mrf.mxu0
        %v696 = vadd.f32 %v414, %v695
        %697 = vmatprep.mubr.bf16.mxu0 0
        %698 = vmatmul.mubr.bf16.gmra.mxu0 %v462
        %v699 = vpop.f32.mrf.mxu0
        %v700 = vadd.f32 %v410, %v699
        %v701 = vpop.f32.mrf.mxu0
        %v702 = vadd.f32 %v414, %v701
        %v703 = vpop.f32.mrf.mxu0
        %v704 = vadd.f32 %v410, %v703
        %v705 = vpop.f32.mrf.mxu0
        %v706 = vadd.f32 %v414, %v705
        %707 = vmatprep.mubr.bf16.mxu0 0
        %708 = vmatmul.mubr.bf16.gmra.mxu0 %v463
        %v709 = vpop.f32.mrf.mxu0
        %v710 = vadd.f32 %v410, %v709
        %v711 = vpop.f32.mrf.mxu0
        %v712 = vadd.f32 %v414, %v711
        %v713 = vpop.f32.mrf.mxu0
        %v714 = vadd.f32 %v410, %v713
        %v715 = vpop.f32.mrf.mxu0
        %v716 = vadd.f32 %v414, %v715
        %717 = vmatprep.mubr.bf16.mxu0 0
        %718 = vmatmul.mubr.bf16.gmra.mxu0 %v464
        %v719 = vpop.f32.mrf.mxu0
        %v720 = vadd.f32 %v410, %v719
        %v721 = vpop.f32.mrf.mxu0
        %v722 = vadd.f32 %v414, %v721
        %v723 = vpop.f32.mrf.mxu0
        %v724 = vadd.f32 %v410, %v723
        %v725 = vpop.f32.mrf.mxu0
        %v726 = vadd.f32 %v414, %v725
        %727 = vmatprep.mubr.bf16.mxu0 0
        %728 = vmatmul.mubr.bf16.gmra.mxu0 %v465
        %v729 = vpop.f32.mrf.mxu0
        %v730 = vadd.f32 %v410, %v729
        %v731 = vpop.f32.mrf.mxu0
        %v732 = vadd.f32 %v414, %v731
        %v733 = vpop.f32.mrf.mxu0
        %v734 = vadd.f32 %v410, %v733
        %v735 = vpop.f32.mrf.mxu0
        %v736 = vadd.f32 %v414, %v735
        %737 = vmatprep.mubr.bf16.mxu0 0
        %738 = vmatmul.mubr.bf16.gmra.mxu0 %v466
        %v739 = vpop.f32.mrf.mxu0
        %v740 = vadd.f32 %v410, %v739
        %v741 = vpop.f32.mrf.mxu0
        %v742 = vadd.f32 %v414, %v741
        %v743 = vpop.f32.mrf.mxu0
        %v744 = vadd.f32 %v410, %v743
        %v745 = vpop.f32.mrf.mxu0
        %v746 = vadd.f32 %v414, %v745
        %747 = vdwg.mxu0
        %748 = vmatprep.subr.bf16.mxu0 %v602
        %749 = vmatpush1.bf16.msra.mxu0 %v601
        %750 = vmatprep.subr.bf16.mxu0 %v598
        %751 = vmatpush1.bf16.msra.mxu0 %v597
        %752 = vmatprep.subr.bf16.mxu0 %v594
        %753 = vmatpush1.bf16.msra.mxu0 %v593
        %754 = vmatprep.subr.bf16.mxu0 %v590
        %755 = vmatpush1.bf16.msra.mxu0 %v589
        %756 = vmatprep.subr.bf16.mxu0 %v586
        %757 = vmatpush1.bf16.msra.mxu0 %v585
        %758 = vmatprep.subr.bf16.mxu0 %v582
        %759 = vmatpush1.bf16.msra.mxu0 %v581
        %760 = vmatprep.subr.bf16.mxu0 %v578
        %761 = vmatpush1.bf16.msra.mxu0 %v577
        %762 = vmatprep.subr.bf16.mxu0 %v574
        %763 = vmatpush1.bf16.msra.mxu0 %v573
        %764 = vmatprep.subr.bf16.mxu0 0
        %765 = vmatpush2.bf16.msra.mxu0 0
        %766 = vmatprep.subr.bf16.mxu0 0
        %767 = vmatpush2.bf16.msra.mxu0 0
        %768 = vmatprep.subr.bf16.mxu0 0
        %769 = vmatpush2.bf16.msra.mxu0 0
        %770 = vmatprep.subr.bf16.mxu0 0
        %771 = vmatpush2.bf16.msra.mxu0 0
        %772 = vmatprep.subr.bf16.mxu0 0
        %773 = vmatpush2.bf16.msra.mxu0 0
        %774 = vmatprep.subr.bf16.mxu0 0
        %775 = vmatpush2.bf16.msra.mxu0 0
        %776 = vmatprep.subr.bf16.mxu0 0
        %777 = vmatpush2.bf16.msra.mxu0 0
        %778 = vmatprep.subr.bf16.mxu0 0
        %779 = vmatpush2.bf16.msra.mxu0 0
        %780 = vmatprep.mubr.bf16.mxu0 0
        %781 = vmatmul.mubr.bf16.gmra.mxu0 %v459
        %v782 = vpop.f32.mrf.mxu0
        %v783 = vadd.f32 %v418, %v782
        %v784 = vpop.f32.mrf.mxu0
        %v785 = vadd.f32 %v422, %v784
        %v786 = vpop.f32.mrf.mxu0
        %v787 = vadd.f32 %v418, %v786
        %v788 = vpop.f32.mrf.mxu0
        %v789 = vadd.f32 %v422, %v788
        %790 = vmatprep.mubr.bf16.mxu0 0
        %791 = vmatmul.mubr.bf16.gmra.mxu0 %v460
        %v792 = vpop.f32.mrf.mxu0
        %v793 = vadd.f32 %v418, %v792
        %v794 = vpop.f32.mrf.mxu0
        %v795 = vadd.f32 %v422, %v794
        %v796 = vpop.f32.mrf.mxu0
        %v797 = vadd.f32 %v418, %v796
        %v798 = vpop.f32.mrf.mxu0
        %v799 = vadd.f32 %v422, %v798
        %800 = vmatprep.mubr.bf16.mxu0 0
        %801 = vmatmul.mubr.bf16.gmra.mxu0 %v461
        %v802 = vpop.f32.mrf.mxu0
        %v803 = vadd.f32 %v418, %v802
        %v804 = vpop.f32.mrf.mxu0
        %v805 = vadd.f32 %v422, %v804
        %v806 = vpop.f32.mrf.mxu0
        %v807 = vadd.f32 %v418, %v806
        %v808 = vpop.f32.mrf.mxu0
        %v809 = vadd.f32 %v422, %v808
        %810 = vmatprep.mubr.bf16.mxu0 0
        %811 = vmatmul.mubr.bf16.gmra.mxu0 %v462
        %v812 = vpop.f32.mrf.mxu0
        %v813 = vadd.f32 %v418, %v812
        %v814 = vpop.f32.mrf.mxu0
        %v815 = vadd.f32 %v422, %v814
        %v816 = vpop.f32.mrf.mxu0
        %v817 = vadd.f32 %v418, %v816
        %v818 = vpop.f32.mrf.mxu0
        %v819 = vadd.f32 %v422, %v818
        %820 = vmatprep.mubr.bf16.mxu0 0
        %821 = vmatmul.mubr.bf16.gmra.mxu0 %v463
        %v822 = vpop.f32.mrf.mxu0
        %v823 = vadd.f32 %v418, %v822
        %v824 = vpop.f32.mrf.mxu0
        %v825 = vadd.f32 %v422, %v824
        %v826 = vpop.f32.mrf.mxu0
        %v827 = vadd.f32 %v418, %v826
        %v828 = vpop.f32.mrf.mxu0
        %v829 = vadd.f32 %v422, %v828
        %830 = vmatprep.mubr.bf16.mxu0 0
        %831 = vmatmul.mubr.bf16.gmra.mxu0 %v464
        %v832 = vpop.f32.mrf.mxu0
        %v833 = vadd.f32 %v418, %v832
        %v834 = vpop.f32.mrf.mxu0
        %v835 = vadd.f32 %v422, %v834
        %v836 = vpop.f32.mrf.mxu0
        %v837 = vadd.f32 %v418, %v836
        %v838 = vpop.f32.mrf.mxu0
        %v839 = vadd.f32 %v422, %v838
        %840 = vmatprep.mubr.bf16.mxu0 0
        %841 = vmatmul.mubr.bf16.gmra.mxu0 %v465
        %v842 = vpop.f32.mrf.mxu0
        %v843 = vadd.f32 %v418, %v842
        %v844 = vpop.f32.mrf.mxu0
        %v845 = vadd.f32 %v422, %v844
        %v846 = vpop.f32.mrf.mxu0
        %v847 = vadd.f32 %v418, %v846
        %v848 = vpop.f32.mrf.mxu0
        %v849 = vadd.f32 %v422, %v848
        %850 = vmatprep.mubr.bf16.mxu0 0
        %851 = vmatmul.mubr.bf16.gmra.mxu0 %v466
        %v852 = vpop.f32.mrf.mxu0
        %v853 = vadd.f32 %v418, %v852
        %v854 = vpop.f32.mrf.mxu0
        %v855 = vadd.f32 %v422, %v854
        %v856 = vpop.f32.mrf.mxu0
        %v857 = vadd.f32 %v418, %v856
        %v858 = vpop.f32.mrf.mxu0
        %v859 = vadd.f32 %v422, %v858
        %860 = vdwg.mxu0
        %v861 = vpack.c.bf16 %v674, %v670
        %v862 = vpack.c.bf16 %v676, %v672
        %v863 = vpack.c.bf16 %v787, %v783
        %v864 = vpack.c.bf16 %v789, %v785
        %v865 = vpack.c.bf16 %v684, %v680
        %v866 = vpack.c.bf16 %v686, %v682
        %v867 = vpack.c.bf16 %v797, %v793
        %v868 = vpack.c.bf16 %v799, %v795
        %v869 = vpack.c.bf16 %v694, %v690
        %v870 = vpack.c.bf16 %v696, %v692
        %v871 = vpack.c.bf16 %v807, %v803
        %v872 = vpack.c.bf16 %v809, %v805
        %v873 = vpack.c.bf16 %v704, %v700
        %v874 = vpack.c.bf16 %v706, %v702
        %v875 = vpack.c.bf16 %v817, %v813
        %v876 = vpack.c.bf16 %v819, %v815
        %v877 = vpack.c.bf16 %v714, %v710
        %v878 = vpack.c.bf16 %v716, %v712
        %v879 = vpack.c.bf16 %v827, %v823
        %v880 = vpack.c.bf16 %v829, %v825
        %v881 = vpack.c.bf16 %v724, %v720
        %v882 = vpack.c.bf16 %v726, %v722
        %v883 = vpack.c.bf16 %v837, %v833
        %v884 = vpack.c.bf16 %v839, %v835
        %v885 = vpack.c.bf16 %v734, %v730
        %v886 = vpack.c.bf16 %v736, %v732
        %v887 = vpack.c.bf16 %v847, %v843
        %v888 = vpack.c.bf16 %v849, %v845
        %v889 = vpack.c.bf16 %v744, %v740
        %v890 = vpack.c.bf16 %v746, %v742
        %v891 = vpack.c.bf16 %v857, %v853
        %v892 = vpack.c.bf16 %v859, %v855
        %v925 = vunpack.c.l.b16 %v861
        %v926 = vunpack.c.l.b16 %v862
        %v927 = vunpack.c.l.b16 %v863
        %v928 = vunpack.c.l.b16 %v864
        %v929 = vunpack.c.h.b16 %v861
        %v930 = vunpack.c.h.b16 %v862
        %v931 = vunpack.c.h.b16 %v863
        %v932 = vunpack.c.h.b16 %v864
        %v933 = vunpack.c.l.b16 %v865
        %v934 = vunpack.c.l.b16 %v866
        %v935 = vunpack.c.l.b16 %v867
        %v936 = vunpack.c.l.b16 %v868
        %v937 = vunpack.c.h.b16 %v865
        %v938 = vunpack.c.h.b16 %v866
        %v939 = vunpack.c.h.b16 %v867
        %v940 = vunpack.c.h.b16 %v868
        %v941 = vunpack.c.l.b16 %v869
        %v942 = vunpack.c.l.b16 %v870
        %v943 = vunpack.c.l.b16 %v871
        %v944 = vunpack.c.l.b16 %v872
        %v945 = vunpack.c.h.b16 %v869
        %v946 = vunpack.c.h.b16 %v870
        %v947 = vunpack.c.h.b16 %v871
        %v948 = vunpack.c.h.b16 %v872
        %v949 = vunpack.c.l.b16 %v873
        %v950 = vunpack.c.l.b16 %v874
        %v951 = vunpack.c.l.b16 %v875
        %v952 = vunpack.c.l.b16 %v876
        %v953 = vunpack.c.h.b16 %v873
        %v954 = vunpack.c.h.b16 %v874
        %v955 = vunpack.c.h.b16 %v875
        %v956 = vunpack.c.h.b16 %v876
        %v957 = vunpack.c.l.b16 %v877
        %v958 = vunpack.c.l.b16 %v878
        %v959 = vunpack.c.l.b16 %v879
        %v960 = vunpack.c.l.b16 %v880
        %v961 = vunpack.c.h.b16 %v877
        %v962 = vunpack.c.h.b16 %v878
        %v963 = vunpack.c.h.b16 %v879
        %v964 = vunpack.c.h.b16 %v880
        %v965 = vunpack.c.l.b16 %v881
        %v966 = vunpack.c.l.b16 %v882
        %v967 = vunpack.c.l.b16 %v883
        %v968 = vunpack.c.l.b16 %v884
        %v969 = vunpack.c.h.b16 %v881
        %v970 = vunpack.c.h.b16 %v882
        %v971 = vunpack.c.h.b16 %v883
        %v972 = vunpack.c.h.b16 %v884
        %v973 = vunpack.c.l.b16 %v885
        %v974 = vunpack.c.l.b16 %v886
        %v975 = vunpack.c.l.b16 %v887
        %v976 = vunpack.c.l.b16 %v888
        %v977 = vunpack.c.h.b16 %v885
        %v978 = vunpack.c.h.b16 %v886
        %v979 = vunpack.c.h.b16 %v887
        %v980 = vunpack.c.h.b16 %v888
        %v981 = vunpack.c.l.b16 %v889
        %v982 = vunpack.c.l.b16 %v890
        %v983 = vunpack.c.l.b16 %v891
        %v984 = vunpack.c.l.b16 %v892
        %v985 = vunpack.c.h.b16 %v889
        %v986 = vunpack.c.h.b16 %v890
        %v987 = vunpack.c.h.b16 %v891
        %v988 = vunpack.c.h.b16 %v892
        %v989 = vpack.c.b16 %v926, %v925
        %v990 = vpack.c.b16 %v928, %v927
        %v991 = vpack.c.b16 %v930, %v929
        %v992 = vpack.c.b16 %v932, %v931
        %v993 = vpack.c.b16 %v934, %v933
        %v994 = vpack.c.b16 %v936, %v935
        %v995 = vpack.c.b16 %v938, %v937
        %v996 = vpack.c.b16 %v940, %v939
        %v997 = vpack.c.b16 %v942, %v941
        %v998 = vpack.c.b16 %v944, %v943
        %v999 = vpack.c.b16 %v946, %v945
        %v1000 = vpack.c.b16 %v948, %v947
        %v1001 = vpack.c.b16 %v950, %v949
        %v1002 = vpack.c.b16 %v952, %v951
        %v1003 = vpack.c.b16 %v954, %v953
        %v1004 = vpack.c.b16 %v956, %v955
        %v1005 = vpack.c.b16 %v958, %v957
        %v1006 = vpack.c.b16 %v960, %v959
        %v1007 = vpack.c.b16 %v962, %v961
        %v1008 = vpack.c.b16 %v964, %v963
        %v1009 = vpack.c.b16 %v966, %v965
        %v1010 = vpack.c.b16 %v968, %v967
        %v1011 = vpack.c.b16 %v970, %v969
        %v1012 = vpack.c.b16 %v972, %v971
        %v1013 = vpack.c.b16 %v974, %v973
        %v1014 = vpack.c.b16 %v976, %v975
        %v1015 = vpack.c.b16 %v978, %v977
        %v1016 = vpack.c.b16 %v980, %v979
        %v1017 = vpack.c.b16 %v982, %v981
        %v1018 = vpack.c.b16 %v984, %v983
        %v1019 = vpack.c.b16 %v986, %v985
        %v1020 = vpack.c.b16 %v988, %v987
        %1053 = vst [vmem:[#allocation2] sm:$0xff] %v989
        %1054 = vst [vmem:[#allocation2 + $0x8] sm:$0xff] %v990
        %1055 = vst [vmem:[#allocation2 + $0x10] sm:$0xff] %v991
        %1056 = vst [vmem:[#allocation2 + $0x18] sm:$0xff] %v992
        %1057 = vst [vmem:[#allocation2 + $0x20] sm:$0xff] %v993
        %1058 = vst [vmem:[#allocation2 + $0x28] sm:$0xff] %v994
        %1059 = vst [vmem:[#allocation2 + $0x30] sm:$0xff] %v995
        %1060 = vst [vmem:[#allocation2 + $0x38] sm:$0xff] %v996
        %1061 = vst [vmem:[#allocation2 + $0x40] sm:$0xff] %v997
        %1062 = vst [vmem:[#allocation2 + $0x48] sm:$0xff] %v998
        %1063 = vst [vmem:[#allocation2 + $0x50] sm:$0xff] %v999
        %1064 = vst [vmem:[#allocation2 + $0x58] sm:$0xff] %v1000
        %1065 = vst [vmem:[#allocation2 + $0x60] sm:$0xff] %v1001
        %1066 = vst [vmem:[#allocation2 + $0x68] sm:$0xff] %v1002
        %1067 = vst [vmem:[#allocation2 + $0x70] sm:$0xff] %v1003
        %1068 = vst [vmem:[#allocation2 + $0x78] sm:$0xff] %v1004
        %1069 = vst [vmem:[#allocation2 + $0x80] sm:$0xff] %v1005
        %1070 = vst [vmem:[#allocation2 + $0x88] sm:$0xff] %v1006
        %1071 = vst [vmem:[#allocation2 + $0x90] sm:$0xff] %v1007
        %1072 = vst [vmem:[#allocation2 + $0x98] sm:$0xff] %v1008
        %1073 = vst [vmem:[#allocation2 + $0xa0] sm:$0xff] %v1009
        %1074 = vst [vmem:[#allocation2 + $0xa8] sm:$0xff] %v1010
        %1075 = vst [vmem:[#allocation2 + $0xb0] sm:$0xff] %v1011
        %1076 = vst [vmem:[#allocation2 + $0xb8] sm:$0xff] %v1012
        %1077 = vst [vmem:[#allocation2 + $0xc0] sm:$0xff] %v1013
        %1078 = vst [vmem:[#allocation2 + $0xc8] sm:$0xff] %v1014
        %1079 = vst [vmem:[#allocation2 + $0xd0] sm:$0xff] %v1015
        %1080 = vst [vmem:[#allocation2 + $0xd8] sm:$0xff] %v1016
        %1081 = vst [vmem:[#allocation2 + $0xe0] sm:$0xff] %v1017
        %1082 = vst [vmem:[#allocation2 + $0xe8] sm:$0xff] %v1018
        %1083 = vst [vmem:[#allocation2 + $0xf0] sm:$0xff] %v1019
        %1084 = vst [vmem:[#allocation2 + $0xf8] sm:$0xff] %v1020
        %s1085 = smul.u32 0, 4
        %s1086 = smul.addr %s1085, 4
        %s1087 = scalar_lea.vmem [#allocation2], %s1086
        %v1088 = vld [vmem:[%s1087] sm:$0xff]
        %v1089 = vld [vmem:[%s1087 + $0x8] sm:$0xff]
        %v1090 = vld [vmem:[%s1087 + $0x10] sm:$0xff]
        %v1091 = vld [vmem:[%s1087 + $0x18] sm:$0xff]
        %v1092 = vunpack.c.l.bf16 %v1088
        %v1093 = vunpack.c.h.bf16 %v1088
        %v1094 = vunpack.c.l.bf16 %v1089
        %v1095 = vunpack.c.h.bf16 %v1089
        %v1096 = vunpack.c.l.bf16 %v1090
        %v1097 = vunpack.c.h.bf16 %v1090
        %v1098 = vunpack.c.l.bf16 %v1091
        %v1099 = vunpack.c.h.bf16 %v1091
        %v1100 = vld [vmem:[%s280] sm:$0xff]
        %v1101 = vld [vmem:[%s280 + $0x8] sm:$0xff]
        %v1102 = vld [vmem:[%s280 + $0x10] sm:$0xff]
        %v1103 = vld [vmem:[%s280 + $0x18] sm:$0xff]
        %v1104 = vld [vmem:[%s280 + $0x20] sm:$0xff]
        %v1105 = vld [vmem:[%s280 + $0x28] sm:$0xff]
        %v1106 = vld [vmem:[%s280 + $0x30] sm:$0xff]
        %v1107 = vld [vmem:[%s280 + $0x38] sm:$0xff]
        %v1108 = vld [vmem:[%s280 + $0x40] sm:$0xff]
        %v1109 = vld [vmem:[%s280 + $0x48] sm:$0xff]
        %v1110 = vld [vmem:[%s280 + $0x50] sm:$0xff]
        %v1111 = vld [vmem:[%s280 + $0x58] sm:$0xff]
        %v1112 = vld [vmem:[%s280 + $0x60] sm:$0xff]
        %v1113 = vld [vmem:[%s280 + $0x68] sm:$0xff]
        %v1114 = vld [vmem:[%s280 + $0x70] sm:$0xff]
        %v1115 = vld [vmem:[%s280 + $0x78] sm:$0xff]
        %v1116 = vld [vmem:[%s280 + $0x80] sm:$0xff]
        %v1117 = vld [vmem:[%s280 + $0x88] sm:$0xff]
        %v1118 = vld [vmem:[%s280 + $0x90] sm:$0xff]
        %v1119 = vld [vmem:[%s280 + $0x98] sm:$0xff]
        %v1120 = vld [vmem:[%s280 + $0xa0] sm:$0xff]
        %v1121 = vld [vmem:[%s280 + $0xa8] sm:$0xff]
        %v1122 = vld [vmem:[%s280 + $0xb0] sm:$0xff]
        %v1123 = vld [vmem:[%s280 + $0xb8] sm:$0xff]
        %v1124 = vld [vmem:[%s280 + $0xc0] sm:$0xff]
        %v1125 = vld [vmem:[%s280 + $0xc8] sm:$0xff]
        %v1126 = vld [vmem:[%s280 + $0xd0] sm:$0xff]
        %v1127 = vld [vmem:[%s280 + $0xd8] sm:$0xff]
        %v1128 = vld [vmem:[%s280 + $0xe0] sm:$0xff]
        %v1129 = vld [vmem:[%s280 + $0xe8] sm:$0xff]
        %v1130 = vld [vmem:[%s280 + $0xf0] sm:$0xff]
        %v1131 = vld [vmem:[%s280 + $0xf8] sm:$0xff]
        %v1164 = vunpack.c.l.b16 %v1100
        %v1165 = vunpack.c.h.b16 %v1100
        %v1166 = vunpack.c.l.b16 %v1101
        %v1167 = vunpack.c.h.b16 %v1101
        %v1168 = vunpack.c.l.b16 %v1102
        %v1169 = vunpack.c.h.b16 %v1102
        %v1170 = vunpack.c.l.b16 %v1103
        %v1171 = vunpack.c.h.b16 %v1103
        %v1172 = vunpack.c.l.b16 %v1104
        %v1173 = vunpack.c.h.b16 %v1104
        %v1174 = vunpack.c.l.b16 %v1105
        %v1175 = vunpack.c.h.b16 %v1105
        %v1176 = vunpack.c.l.b16 %v1106
        %v1177 = vunpack.c.h.b16 %v1106
        %v1178 = vunpack.c.l.b16 %v1107
        %v1179 = vunpack.c.h.b16 %v1107
        %v1180 = vunpack.c.l.b16 %v1108
        %v1181 = vunpack.c.h.b16 %v1108
        %v1182 = vunpack.c.l.b16 %v1109
        %v1183 = vunpack.c.h.b16 %v1109
        %v1184 = vunpack.c.l.b16 %v1110
        %v1185 = vunpack.c.h.b16 %v1110
        %v1186 = vunpack.c.l.b16 %v1111
        %v1187 = vunpack.c.h.b16 %v1111
        %v1188 = vunpack.c.l.b16 %v1112
        %v1189 = vunpack.c.h.b16 %v1112
        %v1190 = vunpack.c.l.b16 %v1113
        %v1191 = vunpack.c.h.b16 %v1113
        %v1192 = vunpack.c.l.b16 %v1114
        %v1193 = vunpack.c.h.b16 %v1114
        %v1194 = vunpack.c.l.b16 %v1115
        %v1195 = vunpack.c.h.b16 %v1115
        %v1196 = vunpack.c.l.b16 %v1116
        %v1197 = vunpack.c.h.b16 %v1116
        %v1198 = vunpack.c.l.b16 %v1117
        %v1199 = vunpack.c.h.b16 %v1117
        %v1200 = vunpack.c.l.b16 %v1118
        %v1201 = vunpack.c.h.b16 %v1118
        %v1202 = vunpack.c.l.b16 %v1119
        %v1203 = vunpack.c.h.b16 %v1119
        %v1204 = vunpack.c.l.b16 %v1120
        %v1205 = vunpack.c.h.b16 %v1120
        %v1206 = vunpack.c.l.b16 %v1121
        %v1207 = vunpack.c.h.b16 %v1121
        %v1208 = vunpack.c.l.b16 %v1122
        %v1209 = vunpack.c.h.b16 %v1122
        %v1210 = vunpack.c.l.b16 %v1123
        %v1211 = vunpack.c.h.b16 %v1123
        %v1212 = vunpack.c.l.b16 %v1124
        %v1213 = vunpack.c.h.b16 %v1124
        %v1214 = vunpack.c.l.b16 %v1125
        %v1215 = vunpack.c.h.b16 %v1125
        %v1216 = vunpack.c.l.b16 %v1126
        %v1217 = vunpack.c.h.b16 %v1126
        %v1218 = vunpack.c.l.b16 %v1127
        %v1219 = vunpack.c.h.b16 %v1127
        %v1220 = vunpack.c.l.b16 %v1128
        %v1221 = vunpack.c.h.b16 %v1128
        %v1222 = vunpack.c.l.b16 %v1129
        %v1223 = vunpack.c.h.b16 %v1129
        %v1224 = vunpack.c.l.b16 %v1130
        %v1225 = vunpack.c.h.b16 %v1130
        %v1226 = vunpack.c.l.b16 %v1131
        %v1227 = vunpack.c.h.b16 %v1131
        %v1228 = vpack.c.b16 %v1168, %v1164
        %v1229 = vpack.c.b16 %v1169, %v1165
        %v1230 = vpack.c.b16 %v1170, %v1166
        %v1231 = vpack.c.b16 %v1171, %v1167
        %v1232 = vpack.c.b16 %v1176, %v1172
        %v1233 = vpack.c.b16 %v1177, %v1173
        %v1234 = vpack.c.b16 %v1178, %v1174
        %v1235 = vpack.c.b16 %v1179, %v1175
        %v1236 = vpack.c.b16 %v1184, %v1180
        %v1237 = vpack.c.b16 %v1185, %v1181
        %v1238 = vpack.c.b16 %v1186, %v1182
        %v1239 = vpack.c.b16 %v1187, %v1183
        %v1240 = vpack.c.b16 %v1192, %v1188
        %v1241 = vpack.c.b16 %v1193, %v1189
        %v1242 = vpack.c.b16 %v1194, %v1190
        %v1243 = vpack.c.b16 %v1195, %v1191
        %v1244 = vpack.c.b16 %v1200, %v1196
        %v1245 = vpack.c.b16 %v1201, %v1197
        %v1246 = vpack.c.b16 %v1202, %v1198
        %v1247 = vpack.c.b16 %v1203, %v1199
        %v1248 = vpack.c.b16 %v1208, %v1204
        %v1249 = vpack.c.b16 %v1209, %v1205
        %v1250 = vpack.c.b16 %v1210, %v1206
        %v1251 = vpack.c.b16 %v1211, %v1207
        %v1252 = vpack.c.b16 %v1216, %v1212
        %v1253 = vpack.c.b16 %v1217, %v1213
        %v1254 = vpack.c.b16 %v1218, %v1214
        %v1255 = vpack.c.b16 %v1219, %v1215
        %v1256 = vpack.c.b16 %v1224, %v1220
        %v1257 = vpack.c.b16 %v1225, %v1221
        %v1258 = vpack.c.b16 %v1226, %v1222
        %v1259 = vpack.c.b16 %v1227, %v1223
        %1292 = vmatprep.subr.bf16.mxu0 %v1257
        %1293 = vmatpush1.bf16.msra.mxu0 %v1256
        %1294 = vmatprep.subr.bf16.mxu0 %v1253
        %1295 = vmatpush1.bf16.msra.mxu0 %v1252
        %1296 = vmatprep.subr.bf16.mxu0 %v1249
        %1297 = vmatpush1.bf16.msra.mxu0 %v1248
        %1298 = vmatprep.subr.bf16.mxu0 %v1245
        %1299 = vmatpush1.bf16.msra.mxu0 %v1244
        %1300 = vmatprep.subr.bf16.mxu0 %v1241
        %1301 = vmatpush1.bf16.msra.mxu0 %v1240
        %1302 = vmatprep.subr.bf16.mxu0 %v1237
        %1303 = vmatpush1.bf16.msra.mxu0 %v1236
        %1304 = vmatprep.subr.bf16.mxu0 %v1233
        %1305 = vmatpush1.bf16.msra.mxu0 %v1232
        %1306 = vmatprep.subr.bf16.mxu0 %v1229
        %1307 = vmatpush1.bf16.msra.mxu0 %v1228
        %1308 = vmatprep.subr.bf16.mxu0 0
        %1309 = vmatpush2.bf16.msra.mxu0 0
        %1310 = vmatprep.subr.bf16.mxu0 0
        %1311 = vmatpush2.bf16.msra.mxu0 0
        %1312 = vmatprep.subr.bf16.mxu0 0
        %1313 = vmatpush2.bf16.msra.mxu0 0
        %1314 = vmatprep.subr.bf16.mxu0 0
        %1315 = vmatpush2.bf16.msra.mxu0 0
        %1316 = vmatprep.subr.bf16.mxu0 0
        %1317 = vmatpush2.bf16.msra.mxu0 0
        %1318 = vmatprep.subr.bf16.mxu0 0
        %1319 = vmatpush2.bf16.msra.mxu0 0
        %1320 = vmatprep.subr.bf16.mxu0 0
        %1321 = vmatpush2.bf16.msra.mxu0 0
        %1322 = vmatprep.subr.bf16.mxu0 0
        %1323 = vmatpush2.bf16.msra.mxu0 0
        %1324 = vmatprep.mubr.bf16.mxu0 0
        %1325 = vmatmul.mubr.bf16.gmra.mxu0 0
        %v1326 = vpop.f32.mrf.mxu0
        %v1327 = vadd.f32 0.0, %v1326
        %v1328 = vpop.f32.mrf.mxu0
        %v1329 = vadd.f32 0.0, %v1328
        %v1330 = vpop.f32.mrf.mxu0
        %v1331 = vadd.f32 0.0, %v1330
        %v1332 = vpop.f32.mrf.mxu0
        %v1333 = vadd.f32 0.0, %v1332
        %1334 = vdwg.mxu0
        %1335 = vmatprep.subr.bf16.mxu0 %v1259
        %1336 = vmatpush1.bf16.msra.mxu0 %v1258
        %1337 = vmatprep.subr.bf16.mxu0 %v1255
        %1338 = vmatpush1.bf16.msra.mxu0 %v1254
        %1339 = vmatprep.subr.bf16.mxu0 %v1251
        %1340 = vmatpush1.bf16.msra.mxu0 %v1250
        %1341 = vmatprep.subr.bf16.mxu0 %v1247
        %1342 = vmatpush1.bf16.msra.mxu0 %v1246
        %1343 = vmatprep.subr.bf16.mxu0 %v1243
        %1344 = vmatpush1.bf16.msra.mxu0 %v1242
        %1345 = vmatprep.subr.bf16.mxu0 %v1239
        %1346 = vmatpush1.bf16.msra.mxu0 %v1238
        %1347 = vmatprep.subr.bf16.mxu0 %v1235
        %1348 = vmatpush1.bf16.msra.mxu0 %v1234
        %1349 = vmatprep.subr.bf16.mxu0 %v1231
        %1350 = vmatpush1.bf16.msra.mxu0 %v1230
        %1351 = vmatprep.subr.bf16.mxu0 0
        %1352 = vmatpush2.bf16.msra.mxu0 0
        %1353 = vmatprep.subr.bf16.mxu0 0
        %1354 = vmatpush2.bf16.msra.mxu0 0
        %1355 = vmatprep.subr.bf16.mxu0 0
        %1356 = vmatpush2.bf16.msra.mxu0 0
        %1357 = vmatprep.subr.bf16.mxu0 0
        %1358 = vmatpush2.bf16.msra.mxu0 0
        %1359 = vmatprep.subr.bf16.mxu0 0
        %1360 = vmatpush2.bf16.msra.mxu0 0
        %1361 = vmatprep.subr.bf16.mxu0 0
        %1362 = vmatpush2.bf16.msra.mxu0 0
        %1363 = vmatprep.subr.bf16.mxu0 0
        %1364 = vmatpush2.bf16.msra.mxu0 0
        %1365 = vmatprep.subr.bf16.mxu0 0
        %1366 = vmatpush2.bf16.msra.mxu0 0
        %1367 = vmatprep.mubr.bf16.mxu0 0
        %1368 = vmatmul.mubr.bf16.gmra.mxu0 0
        %v1369 = vpop.f32.mrf.mxu0
        %v1370 = vadd.f32 0.0, %v1369
        %v1371 = vpop.f32.mrf.mxu0
        %v1372 = vadd.f32 0.0, %v1371
        %v1373 = vpop.f32.mrf.mxu0
        %v1374 = vadd.f32 0.0, %v1373
        %v1375 = vpop.f32.mrf.mxu0
        %v1376 = vadd.f32 0.0, %v1375
        %1377 = vdwg.mxu0
        %v1378 = vadd.f32 %v1092, %v1327
        %v1379 = vadd.f32 %v1093, %v1329
        %v1380 = vadd.f32 %v1094, %v1370
        %v1381 = vadd.f32 %v1095, %v1372
        %v1382 = vadd.f32 %v1096, %v1331
        %v1383 = vadd.f32 %v1097, %v1333
        %v1384 = vadd.f32 %v1098, %v1374
        %v1385 = vadd.f32 %v1099, %v1376
        %v1386 = vxor.u32 %v1378, 2147483648
        %v1387 = vxor.u32 %v1382, 2147483648
        %v1388 = vmul.f32 %v1386, 1.442695
        %v1389 = vpow.pop %v1388
        %v1390 = vmul.f32 %v1387, 1.442695
        %v1391 = vpow.pop %v1390
        %v1392 = vadd.f32 %v1389, 1.0
        %v1393 = vadd.f32 %v1391, 1.0
        %v1394 = vrcp.pop %v1392
        %v1395 = vmul.f32 1.0, %v1394
        %v1396 = vrcp.pop %v1393
        %v1397 = vmul.f32 1.0, %v1396
        %v1398 = vxor.u32 %v1379, 2147483648
        %v1399 = vxor.u32 %v1383, 2147483648
        %v1400 = vmul.f32 %v1398, 1.442695
        %v1401 = vpow.pop %v1400
        %v1402 = vmul.f32 %v1399, 1.442695
        %v1403 = vpow.pop %v1402
        %v1404 = vadd.f32 %v1401, 1.0
        %v1405 = vadd.f32 %v1403, 1.0
        %v1406 = vrcp.pop %v1404
        %v1407 = vmul.f32 1.0, %v1406
        %v1408 = vrcp.pop %v1405
        %v1409 = vmul.f32 1.0, %v1408
        %v1410 = vtanh.pop %v1380
        %v1411 = vtanh.pop %v1384
        %v1412 = vxor.u32 %v1381, 2147483648
        %v1413 = vxor.u32 %v1385, 2147483648
        %v1414 = vmul.f32 %v1412, 1.442695
        %v1415 = vpow.pop %v1414
        %v1416 = vmul.f32 %v1413, 1.442695
        %v1417 = vpow.pop %v1416
        %v1418 = vadd.f32 %v1415, 1.0
        %v1419 = vadd.f32 %v1417, 1.0
        %v1420 = vrcp.pop %v1418
        %v1421 = vmul.f32 1.0, %v1420
        %v1422 = vrcp.pop %v1419
        %v1423 = vmul.f32 1.0, %v1422
        %v1424 = vmul.f32 %v1407, 0.0
        %v1425 = vmul.f32 %v1409, 0.0
        %v1426 = vmul.f32 %v1395, %v1410
        %v1427 = vmul.f32 %v1397, %v1411
        %v1428 = vadd.f32 %v1424, %v1426
        %v1429 = vadd.f32 %v1425, %v1427
        %v1430 = vtanh.pop %v1428
        %v1431 = vtanh.pop %v1429
        %v1432 = vmul.f32 %v1421, %v1430
        %v1433 = vmul.f32 %v1423, %v1431
        %v1434 = vpack.c.bf16 %v1433, %v1432
        %v1436 = vunpack.c.l.b16 %v1434
        %v1437 = vunpack.c.h.b16 %v1434
        %v1438 = vpack.c.b16 %v1436, %v1436
        %v1439 = vpack.c.b16 %v1437, %v1437
        %1442 = vst [vmem:[#allocation3] sm:$0xf] %v1438
        %1443 = vst [vmem:[#allocation3 + $0x4] sm:$0xf] %v1439
        %s1444 = smul.u32 2, 4
        %s1445 = smul.addr %s1444, 4
        %s1446 = scalar_lea.vmem [#allocation2], %s1445
        %v1447 = vld [vmem:[%s1446] sm:$0xff]
        %v1448 = vld [vmem:[%s1446 + $0x8] sm:$0xff]
        %v1449 = vld [vmem:[%s1446 + $0x10] sm:$0xff]
        %v1450 = vld [vmem:[%s1446 + $0x18] sm:$0xff]
        %v1451 = vunpack.c.l.bf16 %v1447
        %v1452 = vunpack.c.h.bf16 %v1447
        %v1453 = vunpack.c.l.bf16 %v1448
        %v1454 = vunpack.c.h.bf16 %v1448
        %v1455 = vunpack.c.l.bf16 %v1449
        %v1456 = vunpack.c.h.bf16 %v1449
        %v1457 = vunpack.c.l.bf16 %v1450
        %v1458 = vunpack.c.h.bf16 %v1450
        %v1459 = vld [vmem:[%s280] sm:$0xff]
        %v1460 = vld [vmem:[%s280 + $0x8] sm:$0xff]
        %v1461 = vld [vmem:[%s280 + $0x10] sm:$0xff]
        %v1462 = vld [vmem:[%s280 + $0x18] sm:$0xff]
        %v1463 = vld [vmem:[%s280 + $0x20] sm:$0xff]
        %v1464 = vld [vmem:[%s280 + $0x28] sm:$0xff]
        %v1465 = vld [vmem:[%s280 + $0x30] sm:$0xff]
        %v1466 = vld [vmem:[%s280 + $0x38] sm:$0xff]
        %v1467 = vld [vmem:[%s280 + $0x40] sm:$0xff]
        %v1468 = vld [vmem:[%s280 + $0x48] sm:$0xff]
        %v1469 = vld [vmem:[%s280 + $0x50] sm:$0xff]
        %v1470 = vld [vmem:[%s280 + $0x58] sm:$0xff]
        %v1471 = vld [vmem:[%s280 + $0x60] sm:$0xff]
        %v1472 = vld [vmem:[%s280 + $0x68] sm:$0xff]
        %v1473 = vld [vmem:[%s280 + $0x70] sm:$0xff]
        %v1474 = vld [vmem:[%s280 + $0x78] sm:$0xff]
        %v1475 = vld [vmem:[%s280 + $0x80] sm:$0xff]
        %v1476 = vld [vmem:[%s280 + $0x88] sm:$0xff]
        %v1477 = vld [vmem:[%s280 + $0x90] sm:$0xff]
        %v1478 = vld [vmem:[%s280 + $0x98] sm:$0xff]
        %v1479 = vld [vmem:[%s280 + $0xa0] sm:$0xff]
        %v1480 = vld [vmem:[%s280 + $0xa8] sm:$0xff]
        %v1481 = vld [vmem:[%s280 + $0xb0] sm:$0xff]
        %v1482 = vld [vmem:[%s280 + $0xb8] sm:$0xff]
        %v1483 = vld [vmem:[%s280 + $0xc0] sm:$0xff]
        %v1484 = vld [vmem:[%s280 + $0xc8] sm:$0xff]
        %v1485 = vld [vmem:[%s280 + $0xd0] sm:$0xff]
        %v1486 = vld [vmem:[%s280 + $0xd8] sm:$0xff]
        %v1487 = vld [vmem:[%s280 + $0xe0] sm:$0xff]
        %v1488 = vld [vmem:[%s280 + $0xe8] sm:$0xff]
        %v1489 = vld [vmem:[%s280 + $0xf0] sm:$0xff]
        %v1490 = vld [vmem:[%s280 + $0xf8] sm:$0xff]
        %v1523 = vunpack.c.l.b16 %v1459
        %v1524 = vunpack.c.h.b16 %v1459
        %v1525 = vunpack.c.l.b16 %v1460
        %v1526 = vunpack.c.h.b16 %v1460
        %v1527 = vunpack.c.l.b16 %v1461
        %v1528 = vunpack.c.h.b16 %v1461
        %v1529 = vunpack.c.l.b16 %v1462
        %v1530 = vunpack.c.h.b16 %v1462
        %v1531 = vunpack.c.l.b16 %v1463
        %v1532 = vunpack.c.h.b16 %v1463
        %v1533 = vunpack.c.l.b16 %v1464
        %v1534 = vunpack.c.h.b16 %v1464
        %v1535 = vunpack.c.l.b16 %v1465
        %v1536 = vunpack.c.h.b16 %v1465
        %v1537 = vunpack.c.l.b16 %v1466
        %v1538 = vunpack.c.h.b16 %v1466
        %v1539 = vunpack.c.l.b16 %v1467
        %v1540 = vunpack.c.h.b16 %v1467
        %v1541 = vunpack.c.l.b16 %v1468
        %v1542 = vunpack.c.h.b16 %v1468
        %v1543 = vunpack.c.l.b16 %v1469
        %v1544 = vunpack.c.h.b16 %v1469
        %v1545 = vunpack.c.l.b16 %v1470
        %v1546 = vunpack.c.h.b16 %v1470
        %v1547 = vunpack.c.l.b16 %v1471
        %v1548 = vunpack.c.h.b16 %v1471
        %v1549 = vunpack.c.l.b16 %v1472
        %v1550 = vunpack.c.h.b16 %v1472
        %v1551 = vunpack.c.l.b16 %v1473
        %v1552 = vunpack.c.h.b16 %v1473
        %v1553 = vunpack.c.l.b16 %v1474
        %v1554 = vunpack.c.h.b16 %v1474
        %v1555 = vunpack.c.l.b16 %v1475
        %v1556 = vunpack.c.h.b16 %v1475
        %v1557 = vunpack.c.l.b16 %v1476
        %v1558 = vunpack.c.h.b16 %v1476
        %v1559 = vunpack.c.l.b16 %v1477
        %v1560 = vunpack.c.h.b16 %v1477
        %v1561 = vunpack.c.l.b16 %v1478
        %v1562 = vunpack.c.h.b16 %v1478
        %v1563 = vunpack.c.l.b16 %v1479
        %v1564 = vunpack.c.h.b16 %v1479
        %v1565 = vunpack.c.l.b16 %v1480
        %v1566 = vunpack.c.h.b16 %v1480
        %v1567 = vunpack.c.l.b16 %v1481
        %v1568 = vunpack.c.h.b16 %v1481
        %v1569 = vunpack.c.l.b16 %v1482
        %v1570 = vunpack.c.h.b16 %v1482
        %v1571 = vunpack.c.l.b16 %v1483
        %v1572 = vunpack.c.h.b16 %v1483
        %v1573 = vunpack.c.l.b16 %v1484
        %v1574 = vunpack.c.h.b16 %v1484
        %v1575 = vunpack.c.l.b16 %v1485
        %v1576 = vunpack.c.h.b16 %v1485
        %v1577 = vunpack.c.l.b16 %v1486
        %v1578 = vunpack.c.h.b16 %v1486
        %v1579 = vunpack.c.l.b16 %v1487
        %v1580 = vunpack.c.h.b16 %v1487
        %v1581 = vunpack.c.l.b16 %v1488
        %v1582 = vunpack.c.h.b16 %v1488
        %v1583 = vunpack.c.l.b16 %v1489
        %v1584 = vunpack.c.h.b16 %v1489
        %v1585 = vunpack.c.l.b16 %v1490
        %v1586 = vunpack.c.h.b16 %v1490
        %v1587 = vpack.c.b16 %v1527, %v1523
        %v1588 = vpack.c.b16 %v1528, %v1524
        %v1589 = vpack.c.b16 %v1529, %v1525
        %v1590 = vpack.c.b16 %v1530, %v1526
        %v1591 = vpack.c.b16 %v1535, %v1531
        %v1592 = vpack.c.b16 %v1536, %v1532
        %v1593 = vpack.c.b16 %v1537, %v1533
        %v1594 = vpack.c.b16 %v1538, %v1534
        %v1595 = vpack.c.b16 %v1543, %v1539
        %v1596 = vpack.c.b16 %v1544, %v1540
        %v1597 = vpack.c.b16 %v1545, %v1541
        %v1598 = vpack.c.b16 %v1546, %v1542
        %v1599 = vpack.c.b16 %v1551, %v1547
        %v1600 = vpack.c.b16 %v1552, %v1548
        %v1601 = vpack.c.b16 %v1553, %v1549
        %v1602 = vpack.c.b16 %v1554, %v1550
        %v1603 = vpack.c.b16 %v1559, %v1555
        %v1604 = vpack.c.b16 %v1560, %v1556
        %v1605 = vpack.c.b16 %v1561, %v1557
        %v1606 = vpack.c.b16 %v1562, %v1558
        %v1607 = vpack.c.b16 %v1567, %v1563
        %v1608 = vpack.c.b16 %v1568, %v1564
        %v1609 = vpack.c.b16 %v1569, %v1565
        %v1610 = vpack.c.b16 %v1570, %v1566
        %v1611 = vpack.c.b16 %v1575, %v1571
        %v1612 = vpack.c.b16 %v1576, %v1572
        %v1613 = vpack.c.b16 %v1577, %v1573
        %v1614 = vpack.c.b16 %v1578, %v1574
        %v1615 = vpack.c.b16 %v1583, %v1579
        %v1616 = vpack.c.b16 %v1584, %v1580
        %v1617 = vpack.c.b16 %v1585, %v1581
        %v1618 = vpack.c.b16 %v1586, %v1582
        %1651 = vmatprep.subr.bf16.mxu0 %v1616
        %1652 = vmatpush1.bf16.msra.mxu0 %v1615
        %1653 = vmatprep.subr.bf16.mxu0 %v1612
        %1654 = vmatpush1.bf16.msra.mxu0 %v1611
        %1655 = vmatprep.subr.bf16.mxu0 %v1608
        %1656 = vmatpush1.bf16.msra.mxu0 %v1607
        %1657 = vmatprep.subr.bf16.mxu0 %v1604
        %1658 = vmatpush1.bf16.msra.mxu0 %v1603
        %1659 = vmatprep.subr.bf16.mxu0 %v1600
        %1660 = vmatpush1.bf16.msra.mxu0 %v1599
        %1661 = vmatprep.subr.bf16.mxu0 %v1596
        %1662 = vmatpush1.bf16.msra.mxu0 %v1595
        %1663 = vmatprep.subr.bf16.mxu0 %v1592
        %1664 = vmatpush1.bf16.msra.mxu0 %v1591
        %1665 = vmatprep.subr.bf16.mxu0 %v1588
        %1666 = vmatpush1.bf16.msra.mxu0 %v1587
        %1667 = vmatprep.subr.bf16.mxu0 0
        %1668 = vmatpush2.bf16.msra.mxu0 0
        %1669 = vmatprep.subr.bf16.mxu0 0
        %1670 = vmatpush2.bf16.msra.mxu0 0
        %1671 = vmatprep.subr.bf16.mxu0 0
        %1672 = vmatpush2.bf16.msra.mxu0 0
        %1673 = vmatprep.subr.bf16.mxu0 0
        %1674 = vmatpush2.bf16.msra.mxu0 0
        %1675 = vmatprep.subr.bf16.mxu0 0
        %1676 = vmatpush2.bf16.msra.mxu0 0
        %1677 = vmatprep.subr.bf16.mxu0 0
        %1678 = vmatpush2.bf16.msra.mxu0 0
        %1679 = vmatprep.subr.bf16.mxu0 0
        %1680 = vmatpush2.bf16.msra.mxu0 0
        %1681 = vmatprep.subr.bf16.mxu0 0
        %1682 = vmatpush2.bf16.msra.mxu0 0
        %1683 = vmatprep.mubr.bf16.mxu0 0
        %1684 = vmatmul.mubr.bf16.gmra.mxu0 %v1434
        %v1685 = vpop.f32.mrf.mxu0
        %v1686 = vadd.f32 0.0, %v1685
        %v1687 = vpop.f32.mrf.mxu0
        %v1688 = vadd.f32 0.0, %v1687
        %v1689 = vpop.f32.mrf.mxu0
        %v1690 = vadd.f32 0.0, %v1689
        %v1691 = vpop.f32.mrf.mxu0
        %v1692 = vadd.f32 0.0, %v1691
        %1693 = vdwg.mxu0
        %1694 = vmatprep.subr.bf16.mxu0 %v1618
        %1695 = vmatpush1.bf16.msra.mxu0 %v1617
        %1696 = vmatprep.subr.bf16.mxu0 %v1614
        %1697 = vmatpush1.bf16.msra.mxu0 %v1613
        %1698 = vmatprep.subr.bf16.mxu0 %v1610
        %1699 = vmatpush1.bf16.msra.mxu0 %v1609
        %1700 = vmatprep.subr.bf16.mxu0 %v1606
        %1701 = vmatpush1.bf16.msra.mxu0 %v1605
        %1702 = vmatprep.subr.bf16.mxu0 %v1602
        %1703 = vmatpush1.bf16.msra.mxu0 %v1601
        %1704 = vmatprep.subr.bf16.mxu0 %v1598
        %1705 = vmatpush1.bf16.msra.mxu0 %v1597
        %1706 = vmatprep.subr.bf16.mxu0 %v1594
        %1707 = vmatpush1.bf16.msra.mxu0 %v1593
        %1708 = vmatprep.subr.bf16.mxu0 %v1590
        %1709 = vmatpush1.bf16.msra.mxu0 %v1589
        %1710 = vmatprep.subr.bf16.mxu0 0
        %1711 = vmatpush2.bf16.msra.mxu0 0
        %1712 = vmatprep.subr.bf16.mxu0 0
        %1713 = vmatpush2.bf16.msra.mxu0 0
        %1714 = vmatprep.subr.bf16.mxu0 0
        %1715 = vmatpush2.bf16.msra.mxu0 0
        %1716 = vmatprep.subr.bf16.mxu0 0
        %1717 = vmatpush2.bf16.msra.mxu0 0
        %1718 = vmatprep.subr.bf16.mxu0 0
        %1719 = vmatpush2.bf16.msra.mxu0 0
        %1720 = vmatprep.subr.bf16.mxu0 0
        %1721 = vmatpush2.bf16.msra.mxu0 0
        %1722 = vmatprep.subr.bf16.mxu0 0
        %1723 = vmatpush2.bf16.msra.mxu0 0
        %1724 = vmatprep.subr.bf16.mxu0 0
        %1725 = vmatpush2.bf16.msra.mxu0 0
        %1726 = vmatprep.mubr.bf16.mxu0 0
        %1727 = vmatmul.mubr.bf16.gmra.mxu0 %v1434
        %v1728 = vpop.f32.mrf.mxu0
        %v1729 = vadd.f32 0.0, %v1728
        %v1730 = vpop.f32.mrf.mxu0
        %v1731 = vadd.f32 0.0, %v1730
        %v1732 = vpop.f32.mrf.mxu0
        %v1733 = vadd.f32 0.0, %v1732
        %v1734 = vpop.f32.mrf.mxu0
        %v1735 = vadd.f32 0.0, %v1734
        %1736 = vdwg.mxu0
        %v1737 = vadd.f32 %v1451, %v1686
        %v1738 = vadd.f32 %v1452, %v1688
        %v1739 = vadd.f32 %v1453, %v1729
        %v1740 = vadd.f32 %v1454, %v1731
        %v1741 = vadd.f32 %v1455, %v1690
        %v1742 = vadd.f32 %v1456, %v1692
        %v1743 = vadd.f32 %v1457, %v1733
        %v1744 = vadd.f32 %v1458, %v1735
        %v1745 = vxor.u32 %v1737, 2147483648
        %v1746 = vxor.u32 %v1741, 2147483648
        %v1747 = vmul.f32 %v1745, 1.442695
        %v1748 = vpow.pop %v1747
        %v1749 = vmul.f32 %v1746, 1.442695
        %v1750 = vpow.pop %v1749
        %v1751 = vadd.f32 %v1748, 1.0
        %v1752 = vadd.f32 %v1750, 1.0
        %v1753 = vrcp.pop %v1751
        %v1754 = vmul.f32 1.0, %v1753
        %v1755 = vrcp.pop %v1752
        %v1756 = vmul.f32 1.0, %v1755
        %v1757 = vxor.u32 %v1738, 2147483648
        %v1758 = vxor.u32 %v1742, 2147483648
        %v1759 = vmul.f32 %v1757, 1.442695
        %v1760 = vpow.pop %v1759
        %v1761 = vmul.f32 %v1758, 1.442695
        %v1762 = vpow.pop %v1761
        %v1763 = vadd.f32 %v1760, 1.0
        %v1764 = vadd.f32 %v1762, 1.0
        %v1765 = vrcp.pop %v1763
        %v1766 = vmul.f32 1.0, %v1765
        %v1767 = vrcp.pop %v1764
        %v1768 = vmul.f32 1.0, %v1767
        %v1769 = vtanh.pop %v1739
        %v1770 = vtanh.pop %v1743
        %v1771 = vxor.u32 %v1740, 2147483648
        %v1772 = vxor.u32 %v1744, 2147483648
        %v1773 = vmul.f32 %v1771, 1.442695
        %v1774 = vpow.pop %v1773
        %v1775 = vmul.f32 %v1772, 1.442695
        %v1776 = vpow.pop %v1775
        %v1777 = vadd.f32 %v1774, 1.0
        %v1778 = vadd.f32 %v1776, 1.0
        %v1779 = vrcp.pop %v1777
        %v1780 = vmul.f32 1.0, %v1779
        %v1781 = vrcp.pop %v1778
        %v1782 = vmul.f32 1.0, %v1781
        %v1783 = vmul.f32 %v1766, %v1428
        %v1784 = vmul.f32 %v1768, %v1429
        %v1785 = vmul.f32 %v1754, %v1769
        %v1786 = vmul.f32 %v1756, %v1770
        %v1787 = vadd.f32 %v1783, %v1785
        %v1788 = vadd.f32 %v1784, %v1786
        %v1789 = vtanh.pop %v1787
        %v1790 = vtanh.pop %v1788
        %v1791 = vmul.f32 %v1780, %v1789
        %v1792 = vmul.f32 %v1782, %v1790
        %v1793 = vpack.c.bf16 %v1792, %v1791
        %v1795 = vunpack.c.l.b16 %v1793
        %v1796 = vunpack.c.h.b16 %v1793
        %v1797 = vpack.c.b16 %v1795, %v1795
        %v1798 = vpack.c.b16 %v1796, %v1796
        %s1801 = scalar_lea.vmem [#allocation3], 8
        %1802 = vst [vmem:[%s1801] sm:$0xf] %v1797
        %1803 = vst [vmem:[%s1801 + $0x4] sm:$0xf] %v1798
        %s1804 = smul.u32 4, 4
        %s1805 = smul.addr %s1804, 4
        %s1806 = scalar_lea.vmem [#allocation2], %s1805
        %v1807 = vld [vmem:[%s1806] sm:$0xff]
        %v1808 = vld [vmem:[%s1806 + $0x8] sm:$0xff]
        %v1809 = vld [vmem:[%s1806 + $0x10] sm:$0xff]
        %v1810 = vld [vmem:[%s1806 + $0x18] sm:$0xff]
        %v1811 = vunpack.c.l.bf16 %v1807
        %v1812 = vunpack.c.h.bf16 %v1807
        %v1813 = vunpack.c.l.bf16 %v1808
        %v1814 = vunpack.c.h.bf16 %v1808
        %v1815 = vunpack.c.l.bf16 %v1809
        %v1816 = vunpack.c.h.bf16 %v1809
        %v1817 = vunpack.c.l.bf16 %v1810
        %v1818 = vunpack.c.h.bf16 %v1810
        %v1819 = vld [vmem:[%s280] sm:$0xff]
        %v1820 = vld [vmem:[%s280 + $0x8] sm:$0xff]
        %v1821 = vld [vmem:[%s280 + $0x10] sm:$0xff]
        %v1822 = vld [vmem:[%s280 + $0x18] sm:$0xff]
        %v1823 = vld [vmem:[%s280 + $0x20] sm:$0xff]
        %v1824 = vld [vmem:[%s280 + $0x28] sm:$0xff]
        %v1825 = vld [vmem:[%s280 + $0x30] sm:$0xff]
        %v1826 = vld [vmem:[%s280 + $0x38] sm:$0xff]
        %v1827 = vld [vmem:[%s280 + $0x40] sm:$0xff]
        %v1828 = vld [vmem:[%s280 + $0x48] sm:$0xff]
        %v1829 = vld [vmem:[%s280 + $0x50] sm:$0xff]
        %v1830 = vld [vmem:[%s280 + $0x58] sm:$0xff]
        %v1831 = vld [vmem:[%s280 + $0x60] sm:$0xff]
        %v1832 = vld [vmem:[%s280 + $0x68] sm:$0xff]
        %v1833 = vld [vmem:[%s280 + $0x70] sm:$0xff]
        %v1834 = vld [vmem:[%s280 + $0x78] sm:$0xff]
        %v1835 = vld [vmem:[%s280 + $0x80] sm:$0xff]
        %v1836 = vld [vmem:[%s280 + $0x88] sm:$0xff]
        %v1837 = vld [vmem:[%s280 + $0x90] sm:$0xff]
        %v1838 = vld [vmem:[%s280 + $0x98] sm:$0xff]
        %v1839 = vld [vmem:[%s280 + $0xa0] sm:$0xff]
        %v1840 = vld [vmem:[%s280 + $0xa8] sm:$0xff]
        %v1841 = vld [vmem:[%s280 + $0xb0] sm:$0xff]
        %v1842 = vld [vmem:[%s280 + $0xb8] sm:$0xff]
        %v1843 = vld [vmem:[%s280 + $0xc0] sm:$0xff]
        %v1844 = vld [vmem:[%s280 + $0xc8] sm:$0xff]
        %v1845 = vld [vmem:[%s280 + $0xd0] sm:$0xff]
        %v1846 = vld [vmem:[%s280 + $0xd8] sm:$0xff]
        %v1847 = vld [vmem:[%s280 + $0xe0] sm:$0xff]
        %v1848 = vld [vmem:[%s280 + $0xe8] sm:$0xff]
        %v1849 = vld [vmem:[%s280 + $0xf0] sm:$0xff]
        %v1850 = vld [vmem:[%s280 + $0xf8] sm:$0xff]
        %v1883 = vunpack.c.l.b16 %v1819
        %v1884 = vunpack.c.h.b16 %v1819
        %v1885 = vunpack.c.l.b16 %v1820
        %v1886 = vunpack.c.h.b16 %v1820
        %v1887 = vunpack.c.l.b16 %v1821
        %v1888 = vunpack.c.h.b16 %v1821
        %v1889 = vunpack.c.l.b16 %v1822
        %v1890 = vunpack.c.h.b16 %v1822
        %v1891 = vunpack.c.l.b16 %v1823
        %v1892 = vunpack.c.h.b16 %v1823
        %v1893 = vunpack.c.l.b16 %v1824
        %v1894 = vunpack.c.h.b16 %v1824
        %v1895 = vunpack.c.l.b16 %v1825
        %v1896 = vunpack.c.h.b16 %v1825
        %v1897 = vunpack.c.l.b16 %v1826
        %v1898 = vunpack.c.h.b16 %v1826
        %v1899 = vunpack.c.l.b16 %v1827
        %v1900 = vunpack.c.h.b16 %v1827
        %v1901 = vunpack.c.l.b16 %v1828
        %v1902 = vunpack.c.h.b16 %v1828
        %v1903 = vunpack.c.l.b16 %v1829
        %v1904 = vunpack.c.h.b16 %v1829
        %v1905 = vunpack.c.l.b16 %v1830
        %v1906 = vunpack.c.h.b16 %v1830
        %v1907 = vunpack.c.l.b16 %v1831
        %v1908 = vunpack.c.h.b16 %v1831
        %v1909 = vunpack.c.l.b16 %v1832
        %v1910 = vunpack.c.h.b16 %v1832
        %v1911 = vunpack.c.l.b16 %v1833
        %v1912 = vunpack.c.h.b16 %v1833
        %v1913 = vunpack.c.l.b16 %v1834
        %v1914 = vunpack.c.h.b16 %v1834
        %v1915 = vunpack.c.l.b16 %v1835
        %v1916 = vunpack.c.h.b16 %v1835
        %v1917 = vunpack.c.l.b16 %v1836
        %v1918 = vunpack.c.h.b16 %v1836
        %v1919 = vunpack.c.l.b16 %v1837
        %v1920 = vunpack.c.h.b16 %v1837
        %v1921 = vunpack.c.l.b16 %v1838
        %v1922 = vunpack.c.h.b16 %v1838
        %v1923 = vunpack.c.l.b16 %v1839
        %v1924 = vunpack.c.h.b16 %v1839
        %v1925 = vunpack.c.l.b16 %v1840
        %v1926 = vunpack.c.h.b16 %v1840
        %v1927 = vunpack.c.l.b16 %v1841
        %v1928 = vunpack.c.h.b16 %v1841
        %v1929 = vunpack.c.l.b16 %v1842
        %v1930 = vunpack.c.h.b16 %v1842
        %v1931 = vunpack.c.l.b16 %v1843
        %v1932 = vunpack.c.h.b16 %v1843
        %v1933 = vunpack.c.l.b16 %v1844
        %v1934 = vunpack.c.h.b16 %v1844
        %v1935 = vunpack.c.l.b16 %v1845
        %v1936 = vunpack.c.h.b16 %v1845
        %v1937 = vunpack.c.l.b16 %v1846
        %v1938 = vunpack.c.h.b16 %v1846
        %v1939 = vunpack.c.l.b16 %v1847
        %v1940 = vunpack.c.h.b16 %v1847
        %v1941 = vunpack.c.l.b16 %v1848
        %v1942 = vunpack.c.h.b16 %v1848
        %v1943 = vunpack.c.l.b16 %v1849
        %v1944 = vunpack.c.h.b16 %v1849
        %v1945 = vunpack.c.l.b16 %v1850
        %v1946 = vunpack.c.h.b16 %v1850
        %v1947 = vpack.c.b16 %v1887, %v1883
        %v1948 = vpack.c.b16 %v1888, %v1884
        %v1949 = vpack.c.b16 %v1889, %v1885
        %v1950 = vpack.c.b16 %v1890, %v1886
        %v1951 = vpack.c.b16 %v1895, %v1891
        %v1952 = vpack.c.b16 %v1896, %v1892
        %v1953 = vpack.c.b16 %v1897, %v1893
        %v1954 = vpack.c.b16 %v1898, %v1894
        %v1955 = vpack.c.b16 %v1903, %v1899
        %v1956 = vpack.c.b16 %v1904, %v1900
        %v1957 = vpack.c.b16 %v1905, %v1901
        %v1958 = vpack.c.b16 %v1906, %v1902
        %v1959 = vpack.c.b16 %v1911, %v1907
        %v1960 = vpack.c.b16 %v1912, %v1908
        %v1961 = vpack.c.b16 %v1913, %v1909
        %v1962 = vpack.c.b16 %v1914, %v1910
        %v1963 = vpack.c.b16 %v1919, %v1915
        %v1964 = vpack.c.b16 %v1920, %v1916
        %v1965 = vpack.c.b16 %v1921, %v1917
        %v1966 = vpack.c.b16 %v1922, %v1918
        %v1967 = vpack.c.b16 %v1927, %v1923
        %v1968 = vpack.c.b16 %v1928, %v1924
        %v1969 = vpack.c.b16 %v1929, %v1925
        %v1970 = vpack.c.b16 %v1930, %v1926
        %v1971 = vpack.c.b16 %v1935, %v1931
        %v1972 = vpack.c.b16 %v1936, %v1932
        %v1973 = vpack.c.b16 %v1937, %v1933
        %v1974 = vpack.c.b16 %v1938, %v1934
        %v1975 = vpack.c.b16 %v1943, %v1939
        %v1976 = vpack.c.b16 %v1944, %v1940
        %v1977 = vpack.c.b16 %v1945, %v1941
        %v1978 = vpack.c.b16 %v1946, %v1942
        %2011 = vmatprep.subr.bf16.mxu0 %v1976
        %2012 = vmatpush1.bf16.msra.mxu0 %v1975
        %2013 = vmatprep.subr.bf16.mxu0 %v1972
        %2014 = vmatpush1.bf16.msra.mxu0 %v1971
        %2015 = vmatprep.subr.bf16.mxu0 %v1968
        %2016 = vmatpush1.bf16.msra.mxu0 %v1967
        %2017 = vmatprep.subr.bf16.mxu0 %v1964
        %2018 = vmatpush1.bf16.msra.mxu0 %v1963
        %2019 = vmatprep.subr.bf16.mxu0 %v1960
        %2020 = vmatpush1.bf16.msra.mxu0 %v1959
        %2021 = vmatprep.subr.bf16.mxu0 %v1956
        %2022 = vmatpush1.bf16.msra.mxu0 %v1955
        %2023 = vmatprep.subr.bf16.mxu0 %v1952
        %2024 = vmatpush1.bf16.msra.mxu0 %v1951
        %2025 = vmatprep.subr.bf16.mxu0 %v1948
        %2026 = vmatpush1.bf16.msra.mxu0 %v1947
        %2027 = vmatprep.subr.bf16.mxu0 0
        %2028 = vmatpush2.bf16.msra.mxu0 0
        %2029 = vmatprep.subr.bf16.mxu0 0
        %2030 = vmatpush2.bf16.msra.mxu0 0
        %2031 = vmatprep.subr.bf16.mxu0 0
        %2032 = vmatpush2.bf16.msra.mxu0 0
        %2033 = vmatprep.subr.bf16.mxu0 0
        %2034 = vmatpush2.bf16.msra.mxu0 0
        %2035 = vmatprep.subr.bf16.mxu0 0
        %2036 = vmatpush2.bf16.msra.mxu0 0
        %2037 = vmatprep.subr.bf16.mxu0 0
        %2038 = vmatpush2.bf16.msra.mxu0 0
        %2039 = vmatprep.subr.bf16.mxu0 0
        %2040 = vmatpush2.bf16.msra.mxu0 0
        %2041 = vmatprep.subr.bf16.mxu0 0
        %2042 = vmatpush2.bf16.msra.mxu0 0
        %2043 = vmatprep.mubr.bf16.mxu0 0
        %2044 = vmatmul.mubr.bf16.gmra.mxu0 %v1793
        %v2045 = vpop.f32.mrf.mxu0
        %v2046 = vadd.f32 0.0, %v2045
        %v2047 = vpop.f32.mrf.mxu0
        %v2048 = vadd.f32 0.0, %v2047
        %v2049 = vpop.f32.mrf.mxu0
        %v2050 = vadd.f32 0.0, %v2049
        %v2051 = vpop.f32.mrf.mxu0
        %v2052 = vadd.f32 0.0, %v2051
        %2053 = vdwg.mxu0
        %2054 = vmatprep.subr.bf16.mxu0 %v1978
        %2055 = vmatpush1.bf16.msra.mxu0 %v1977
        %2056 = vmatprep.subr.bf16.mxu0 %v1974
        %2057 = vmatpush1.bf16.msra.mxu0 %v1973
        %2058 = vmatprep.subr.bf16.mxu0 %v1970
        %2059 = vmatpush1.bf16.msra.mxu0 %v1969
        %2060 = vmatprep.subr.bf16.mxu0 %v1966
        %2061 = vmatpush1.bf16.msra.mxu0 %v1965
        %2062 = vmatprep.subr.bf16.mxu0 %v1962
        %2063 = vmatpush1.bf16.msra.mxu0 %v1961
        %2064 = vmatprep.subr.bf16.mxu0 %v1958
        %2065 = vmatpush1.bf16.msra.mxu0 %v1957
        %2066 = vmatprep.subr.bf16.mxu0 %v1954
        %2067 = vmatpush1.bf16.msra.mxu0 %v1953
        %2068 = vmatprep.subr.bf16.mxu0 %v1950
        %2069 = vmatpush1.bf16.msra.mxu0 %v1949
        %2070 = vmatprep.subr.bf16.mxu0 0
        %2071 = vmatpush2.bf16.msra.mxu0 0
        %2072 = vmatprep.subr.bf16.mxu0 0
        %2073 = vmatpush2.bf16.msra.mxu0 0
        %2074 = vmatprep.subr.bf16.mxu0 0
        %2075 = vmatpush2.bf16.msra.mxu0 0
        %2076 = vmatprep.subr.bf16.mxu0 0
        %2077 = vmatpush2.bf16.msra.mxu0 0
        %2078 = vmatprep.subr.bf16.mxu0 0
        %2079 = vmatpush2.bf16.msra.mxu0 0
        %2080 = vmatprep.subr.bf16.mxu0 0
        %2081 = vmatpush2.bf16.msra.mxu0 0
        %2082 = vmatprep.subr.bf16.mxu0 0
        %2083 = vmatpush2.bf16.msra.mxu0 0
        %2084 = vmatprep.subr.bf16.mxu0 0
        %2085 = vmatpush2.bf16.msra.mxu0 0
        %2086 = vmatprep.mubr.bf16.mxu0 0
        %2087 = vmatmul.mubr.bf16.gmra.mxu0 %v1793
        %v2088 = vpop.f32.mrf.mxu0
        %v2089 = vadd.f32 0.0, %v2088
        %v2090 = vpop.f32.mrf.mxu0
        %v2091 = vadd.f32 0.0, %v2090
        %v2092 = vpop.f32.mrf.mxu0
        %v2093 = vadd.f32 0.0, %v2092
        %v2094 = vpop.f32.mrf.mxu0
        %v2095 = vadd.f32 0.0, %v2094
        %2096 = vdwg.mxu0
        %v2097 = vadd.f32 %v1811, %v2046
        %v2098 = vadd.f32 %v1812, %v2048
        %v2099 = vadd.f32 %v1813, %v2089
        %v2100 = vadd.f32 %v1814, %v2091
        %v2101 = vadd.f32 %v1815, %v2050
        %v2102 = vadd.f32 %v1816, %v2052
        %v2103 = vadd.f32 %v1817, %v2093
        %v2104 = vadd.f32 %v1818, %v2095
        %v2105 = vxor.u32 %v2097, 2147483648
        %v2106 = vxor.u32 %v2101, 2147483648
        %v2107 = vmul.f32 %v2105, 1.442695
        %v2108 = vpow.pop %v2107
        %v2109 = vmul.f32 %v2106, 1.442695
        %v2110 = vpow.pop %v2109
        %v2111 = vadd.f32 %v2108, 1.0
        %v2112 = vadd.f32 %v2110, 1.0
        %v2113 = vrcp.pop %v2111
        %v2114 = vmul.f32 1.0, %v2113
        %v2115 = vrcp.pop %v2112
        %v2116 = vmul.f32 1.0, %v2115
        %v2117 = vxor.u32 %v2098, 2147483648
        %v2118 = vxor.u32 %v2102, 2147483648
        %v2119 = vmul.f32 %v2117, 1.442695
        %v2120 = vpow.pop %v2119
        %v2121 = vmul.f32 %v2118, 1.442695
        %v2122 = vpow.pop %v2121
        %v2123 = vadd.f32 %v2120, 1.0
        %v2124 = vadd.f32 %v2122, 1.0
        %v2125 = vrcp.pop %v2123
        %v2126 = vmul.f32 1.0, %v2125
        %v2127 = vrcp.pop %v2124
        %v2128 = vmul.f32 1.0, %v2127
        %v2129 = vtanh.pop %v2099
        %v2130 = vtanh.pop %v2103
        %v2131 = vxor.u32 %v2100, 2147483648
        %v2132 = vxor.u32 %v2104, 2147483648
        %v2133 = vmul.f32 %v2131, 1.442695
        %v2134 = vpow.pop %v2133
        %v2135 = vmul.f32 %v2132, 1.442695
        %v2136 = vpow.pop %v2135
        %v2137 = vadd.f32 %v2134, 1.0
        %v2138 = vadd.f32 %v2136, 1.0
        %v2139 = vrcp.pop %v2137
        %v2140 = vmul.f32 1.0, %v2139
        %v2141 = vrcp.pop %v2138
        %v2142 = vmul.f32 1.0, %v2141
        %v2143 = vmul.f32 %v2126, %v1787
        %v2144 = vmul.f32 %v2128, %v1788
        %v2145 = vmul.f32 %v2114, %v2129
        %v2146 = vmul.f32 %v2116, %v2130
        %v2147 = vadd.f32 %v2143, %v2145
        %v2148 = vadd.f32 %v2144, %v2146
        %v2149 = vtanh.pop %v2147
        %v2150 = vtanh.pop %v2148
        %v2151 = vmul.f32 %v2140, %v2149
        %v2152 = vmul.f32 %v2142, %v2150
        %v2153 = vpack.c.bf16 %v2152, %v2151
        %v2155 = vunpack.c.l.b16 %v2153
        %v2156 = vunpack.c.h.b16 %v2153
        %v2157 = vpack.c.b16 %v2155, %v2155
        %v2158 = vpack.c.b16 %v2156, %v2156
        %s2161 = scalar_lea.vmem [#allocation3], 16
        %2162 = vst [vmem:[%s2161] sm:$0xf] %v2157
        %2163 = vst [vmem:[%s2161 + $0x4] sm:$0xf] %v2158
        %s2164 = smul.u32 6, 4
        %s2165 = smul.addr %s2164, 4
        %s2166 = scalar_lea.vmem [#allocation2], %s2165
        %v2167 = vld [vmem:[%s2166] sm:$0xff]
        %v2168 = vld [vmem:[%s2166 + $0x8] sm:$0xff]
        %v2169 = vld [vmem:[%s2166 + $0x10] sm:$0xff]
        %v2170 = vld [vmem:[%s2166 + $0x18] sm:$0xff]
        %v2171 = vunpack.c.l.bf16 %v2167
        %v2172 = vunpack.c.h.bf16 %v2167
        %v2173 = vunpack.c.l.bf16 %v2168
        %v2174 = vunpack.c.h.bf16 %v2168
        %v2175 = vunpack.c.l.bf16 %v2169
        %v2176 = vunpack.c.h.bf16 %v2169
        %v2177 = vunpack.c.l.bf16 %v2170
        %v2178 = vunpack.c.h.bf16 %v2170
        %v2179 = vld [vmem:[%s280] sm:$0xff]
        %v2180 = vld [vmem:[%s280 + $0x8] sm:$0xff]
        %v2181 = vld [vmem:[%s280 + $0x10] sm:$0xff]
        %v2182 = vld [vmem:[%s280 + $0x18] sm:$0xff]
        %v2183 = vld [vmem:[%s280 + $0x20] sm:$0xff]
        %v2184 = vld [vmem:[%s280 + $0x28] sm:$0xff]
        %v2185 = vld [vmem:[%s280 + $0x30] sm:$0xff]
        %v2186 = vld [vmem:[%s280 + $0x38] sm:$0xff]
        %v2187 = vld [vmem:[%s280 + $0x40] sm:$0xff]
        %v2188 = vld [vmem:[%s280 + $0x48] sm:$0xff]
        %v2189 = vld [vmem:[%s280 + $0x50] sm:$0xff]
        %v2190 = vld [vmem:[%s280 + $0x58] sm:$0xff]
        %v2191 = vld [vmem:[%s280 + $0x60] sm:$0xff]
        %v2192 = vld [vmem:[%s280 + $0x68] sm:$0xff]
        %v2193 = vld [vmem:[%s280 + $0x70] sm:$0xff]
        %v2194 = vld [vmem:[%s280 + $0x78] sm:$0xff]
        %v2195 = vld [vmem:[%s280 + $0x80] sm:$0xff]
        %v2196 = vld [vmem:[%s280 + $0x88] sm:$0xff]
        %v2197 = vld [vmem:[%s280 + $0x90] sm:$0xff]
        %v2198 = vld [vmem:[%s280 + $0x98] sm:$0xff]
        %v2199 = vld [vmem:[%s280 + $0xa0] sm:$0xff]
        %v2200 = vld [vmem:[%s280 + $0xa8] sm:$0xff]
        %v2201 = vld [vmem:[%s280 + $0xb0] sm:$0xff]
        %v2202 = vld [vmem:[%s280 + $0xb8] sm:$0xff]
        %v2203 = vld [vmem:[%s280 + $0xc0] sm:$0xff]
        %v2204 = vld [vmem:[%s280 + $0xc8] sm:$0xff]
        %v2205 = vld [vmem:[%s280 + $0xd0] sm:$0xff]
        %v2206 = vld [vmem:[%s280 + $0xd8] sm:$0xff]
        %v2207 = vld [vmem:[%s280 + $0xe0] sm:$0xff]
        %v2208 = vld [vmem:[%s280 + $0xe8] sm:$0xff]
        %v2209 = vld [vmem:[%s280 + $0xf0] sm:$0xff]
        %v2210 = vld [vmem:[%s280 + $0xf8] sm:$0xff]
        %v2243 = vunpack.c.l.b16 %v2179
        %v2244 = vunpack.c.h.b16 %v2179
        %v2245 = vunpack.c.l.b16 %v2180
        %v2246 = vunpack.c.h.b16 %v2180
        %v2247 = vunpack.c.l.b16 %v2181
        %v2248 = vunpack.c.h.b16 %v2181
        %v2249 = vunpack.c.l.b16 %v2182
        %v2250 = vunpack.c.h.b16 %v2182
        %v2251 = vunpack.c.l.b16 %v2183
        %v2252 = vunpack.c.h.b16 %v2183
        %v2253 = vunpack.c.l.b16 %v2184
        %v2254 = vunpack.c.h.b16 %v2184
        %v2255 = vunpack.c.l.b16 %v2185
        %v2256 = vunpack.c.h.b16 %v2185
        %v2257 = vunpack.c.l.b16 %v2186
        %v2258 = vunpack.c.h.b16 %v2186
        %v2259 = vunpack.c.l.b16 %v2187
        %v2260 = vunpack.c.h.b16 %v2187
        %v2261 = vunpack.c.l.b16 %v2188
        %v2262 = vunpack.c.h.b16 %v2188
        %v2263 = vunpack.c.l.b16 %v2189
        %v2264 = vunpack.c.h.b16 %v2189
        %v2265 = vunpack.c.l.b16 %v2190
        %v2266 = vunpack.c.h.b16 %v2190
        %v2267 = vunpack.c.l.b16 %v2191
        %v2268 = vunpack.c.h.b16 %v2191
        %v2269 = vunpack.c.l.b16 %v2192
        %v2270 = vunpack.c.h.b16 %v2192
        %v2271 = vunpack.c.l.b16 %v2193
        %v2272 = vunpack.c.h.b16 %v2193
        %v2273 = vunpack.c.l.b16 %v2194
        %v2274 = vunpack.c.h.b16 %v2194
        %v2275 = vunpack.c.l.b16 %v2195
        %v2276 = vunpack.c.h.b16 %v2195
        %v2277 = vunpack.c.l.b16 %v2196
        %v2278 = vunpack.c.h.b16 %v2196
        %v2279 = vunpack.c.l.b16 %v2197
        %v2280 = vunpack.c.h.b16 %v2197
        %v2281 = vunpack.c.l.b16 %v2198
        %v2282 = vunpack.c.h.b16 %v2198
        %v2283 = vunpack.c.l.b16 %v2199
        %v2284 = vunpack.c.h.b16 %v2199
        %v2285 = vunpack.c.l.b16 %v2200
        %v2286 = vunpack.c.h.b16 %v2200
        %v2287 = vunpack.c.l.b16 %v2201
        %v2288 = vunpack.c.h.b16 %v2201
        %v2289 = vunpack.c.l.b16 %v2202
        %v2290 = vunpack.c.h.b16 %v2202
        %v2291 = vunpack.c.l.b16 %v2203
        %v2292 = vunpack.c.h.b16 %v2203
        %v2293 = vunpack.c.l.b16 %v2204
        %v2294 = vunpack.c.h.b16 %v2204
        %v2295 = vunpack.c.l.b16 %v2205
        %v2296 = vunpack.c.h.b16 %v2205
        %v2297 = vunpack.c.l.b16 %v2206
        %v2298 = vunpack.c.h.b16 %v2206
        %v2299 = vunpack.c.l.b16 %v2207
        %v2300 = vunpack.c.h.b16 %v2207
        %v2301 = vunpack.c.l.b16 %v2208
        %v2302 = vunpack.c.h.b16 %v2208
        %v2303 = vunpack.c.l.b16 %v2209
        %v2304 = vunpack.c.h.b16 %v2209
        %v2305 = vunpack.c.l.b16 %v2210
        %v2306 = vunpack.c.h.b16 %v2210
        %v2307 = vpack.c.b16 %v2247, %v2243
        %v2308 = vpack.c.b16 %v2248, %v2244
        %v2309 = vpack.c.b16 %v2249, %v2245
        %v2310 = vpack.c.b16 %v2250, %v2246
        %v2311 = vpack.c.b16 %v2255, %v2251
        %v2312 = vpack.c.b16 %v2256, %v2252
        %v2313 = vpack.c.b16 %v2257, %v2253
        %v2314 = vpack.c.b16 %v2258, %v2254
        %v2315 = vpack.c.b16 %v2263, %v2259
        %v2316 = vpack.c.b16 %v2264, %v2260
        %v2317 = vpack.c.b16 %v2265, %v2261
        %v2318 = vpack.c.b16 %v2266, %v2262
        %v2319 = vpack.c.b16 %v2271, %v2267
        %v2320 = vpack.c.b16 %v2272, %v2268
        %v2321 = vpack.c.b16 %v2273, %v2269
        %v2322 = vpack.c.b16 %v2274, %v2270
        %v2323 = vpack.c.b16 %v2279, %v2275
        %v2324 = vpack.c.b16 %v2280, %v2276
        %v2325 = vpack.c.b16 %v2281, %v2277
        %v2326 = vpack.c.b16 %v2282, %v2278
        %v2327 = vpack.c.b16 %v2287, %v2283
        %v2328 = vpack.c.b16 %v2288, %v2284
        %v2329 = vpack.c.b16 %v2289, %v2285
        %v2330 = vpack.c.b16 %v2290, %v2286
        %v2331 = vpack.c.b16 %v2295, %v2291
        %v2332 = vpack.c.b16 %v2296, %v2292
        %v2333 = vpack.c.b16 %v2297, %v2293
        %v2334 = vpack.c.b16 %v2298, %v2294
        %v2335 = vpack.c.b16 %v2303, %v2299
        %v2336 = vpack.c.b16 %v2304, %v2300
        %v2337 = vpack.c.b16 %v2305, %v2301
        %v2338 = vpack.c.b16 %v2306, %v2302
        %2371 = vmatprep.subr.bf16.mxu0 %v2336
        %2372 = vmatpush1.bf16.msra.mxu0 %v2335
        %2373 = vmatprep.subr.bf16.mxu0 %v2332
        %2374 = vmatpush1.bf16.msra.mxu0 %v2331
        %2375 = vmatprep.subr.bf16.mxu0 %v2328
        %2376 = vmatpush1.bf16.msra.mxu0 %v2327
        %2377 = vmatprep.subr.bf16.mxu0 %v2324
        %2378 = vmatpush1.bf16.msra.mxu0 %v2323
        %2379 = vmatprep.subr.bf16.mxu0 %v2320
        %2380 = vmatpush1.bf16.msra.mxu0 %v2319
        %2381 = vmatprep.subr.bf16.mxu0 %v2316
        %2382 = vmatpush1.bf16.msra.mxu0 %v2315
        %2383 = vmatprep.subr.bf16.mxu0 %v2312
        %2384 = vmatpush1.bf16.msra.mxu0 %v2311
        %2385 = vmatprep.subr.bf16.mxu0 %v2308
        %2386 = vmatpush1.bf16.msra.mxu0 %v2307
        %2387 = vmatprep.subr.bf16.mxu0 0
        %2388 = vmatpush2.bf16.msra.mxu0 0
        %2389 = vmatprep.subr.bf16.mxu0 0
        %2390 = vmatpush2.bf16.msra.mxu0 0
        %2391 = vmatprep.subr.bf16.mxu0 0
        %2392 = vmatpush2.bf16.msra.mxu0 0
        %2393 = vmatprep.subr.bf16.mxu0 0
        %2394 = vmatpush2.bf16.msra.mxu0 0
        %2395 = vmatprep.subr.bf16.mxu0 0
        %2396 = vmatpush2.bf16.msra.mxu0 0
        %2397 = vmatprep.subr.bf16.mxu0 0
        %2398 = vmatpush2.bf16.msra.mxu0 0
        %2399 = vmatprep.subr.bf16.mxu0 0
        %2400 = vmatpush2.bf16.msra.mxu0 0
        %2401 = vmatprep.subr.bf16.mxu0 0
        %2402 = vmatpush2.bf16.msra.mxu0 0
        %2403 = vmatprep.mubr.bf16.mxu0 0
        %2404 = vmatmul.mubr.bf16.gmra.mxu0 %v2153
        %v2405 = vpop.f32.mrf.mxu0
        %v2406 = vadd.f32 0.0, %v2405
        %v2407 = vpop.f32.mrf.mxu0
        %v2408 = vadd.f32 0.0, %v2407
        %v2409 = vpop.f32.mrf.mxu0
        %v2410 = vadd.f32 0.0, %v2409
        %v2411 = vpop.f32.mrf.mxu0
        %v2412 = vadd.f32 0.0, %v2411
        %2413 = vdwg.mxu0
        %2414 = vmatprep.subr.bf16.mxu0 %v2338
        %2415 = vmatpush1.bf16.msra.mxu0 %v2337
        %2416 = vmatprep.subr.bf16.mxu0 %v2334
        %2417 = vmatpush1.bf16.msra.mxu0 %v2333
        %2418 = vmatprep.subr.bf16.mxu0 %v2330
        %2419 = vmatpush1.bf16.msra.mxu0 %v2329
        %2420 = vmatprep.subr.bf16.mxu0 %v2326
        %2421 = vmatpush1.bf16.msra.mxu0 %v2325
        %2422 = vmatprep.subr.bf16.mxu0 %v2322
        %2423 = vmatpush1.bf16.msra.mxu0 %v2321
        %2424 = vmatprep.subr.bf16.mxu0 %v2318
        %2425 = vmatpush1.bf16.msra.mxu0 %v2317
        %2426 = vmatprep.subr.bf16.mxu0 %v2314
        %2427 = vmatpush1.bf16.msra.mxu0 %v2313
        %2428 = vmatprep.subr.bf16.mxu0 %v2310
        %2429 = vmatpush1.bf16.msra.mxu0 %v2309
        %2430 = vmatprep.subr.bf16.mxu0 0
        %2431 = vmatpush2.bf16.msra.mxu0 0
        %2432 = vmatprep.subr.bf16.mxu0 0
        %2433 = vmatpush2.bf16.msra.mxu0 0
        %2434 = vmatprep.subr.bf16.mxu0 0
        %2435 = vmatpush2.bf16.msra.mxu0 0
        %2436 = vmatprep.subr.bf16.mxu0 0
        %2437 = vmatpush2.bf16.msra.mxu0 0
        %2438 = vmatprep.subr.bf16.mxu0 0
        %2439 = vmatpush2.bf16.msra.mxu0 0
        %2440 = vmatprep.subr.bf16.mxu0 0
        %2441 = vmatpush2.bf16.msra.mxu0 0
        %2442 = vmatprep.subr.bf16.mxu0 0
        %2443 = vmatpush2.bf16.msra.mxu0 0
        %2444 = vmatprep.subr.bf16.mxu0 0
        %2445 = vmatpush2.bf16.msra.mxu0 0
        %2446 = vmatprep.mubr.bf16.mxu0 0
        %2447 = vmatmul.mubr.bf16.gmra.mxu0 %v2153
        %v2448 = vpop.f32.mrf.mxu0
        %v2449 = vadd.f32 0.0, %v2448
        %v2450 = vpop.f32.mrf.mxu0
        %v2451 = vadd.f32 0.0, %v2450
        %v2452 = vpop.f32.mrf.mxu0
        %v2453 = vadd.f32 0.0, %v2452
        %v2454 = vpop.f32.mrf.mxu0
        %v2455 = vadd.f32 0.0, %v2454
        %2456 = vdwg.mxu0
        %v2457 = vadd.f32 %v2171, %v2406
        %v2458 = vadd.f32 %v2172, %v2408
        %v2459 = vadd.f32 %v2173, %v2449
        %v2460 = vadd.f32 %v2174, %v2451
        %v2461 = vadd.f32 %v2175, %v2410
        %v2462 = vadd.f32 %v2176, %v2412
        %v2463 = vadd.f32 %v2177, %v2453
        %v2464 = vadd.f32 %v2178, %v2455
        %v2465 = vxor.u32 %v2457, 2147483648
        %v2466 = vxor.u32 %v2461, 2147483648
        %v2467 = vmul.f32 %v2465, 1.442695
        %v2468 = vpow.pop %v2467
        %v2469 = vmul.f32 %v2466, 1.442695
        %v2470 = vpow.pop %v2469
        %v2471 = vadd.f32 %v2468, 1.0
        %v2472 = vadd.f32 %v2470, 1.0
        %v2473 = vrcp.pop %v2471
        %v2474 = vmul.f32 1.0, %v2473
        %v2475 = vrcp.pop %v2472
        %v2476 = vmul.f32 1.0, %v2475
        %v2477 = vxor.u32 %v2458, 2147483648
        %v2478 = vxor.u32 %v2462, 2147483648
        %v2479 = vmul.f32 %v2477, 1.442695
        %v2480 = vpow.pop %v2479
        %v2481 = vmul.f32 %v2478, 1.442695
        %v2482 = vpow.pop %v2481
        %v2483 = vadd.f32 %v2480, 1.0
        %v2484 = vadd.f32 %v2482, 1.0
        %v2485 = vrcp.pop %v2483
        %v2486 = vmul.f32 1.0, %v2485
        %v2487 = vrcp.pop %v2484
        %v2488 = vmul.f32 1.0, %v2487
        %v2489 = vtanh.pop %v2459
        %v2490 = vtanh.pop %v2463
        %v2491 = vxor.u32 %v2460, 2147483648
        %v2492 = vxor.u32 %v2464, 2147483648
        %v2493 = vmul.f32 %v2491, 1.442695
        %v2494 = vpow.pop %v2493
        %v2495 = vmul.f32 %v2492, 1.442695
        %v2496 = vpow.pop %v2495
        %v2497 = vadd.f32 %v2494, 1.0
        %v2498 = vadd.f32 %v2496, 1.0
        %v2499 = vrcp.pop %v2497
        %v2500 = vmul.f32 1.0, %v2499
        %v2501 = vrcp.pop %v2498
        %v2502 = vmul.f32 1.0, %v2501
        %v2503 = vmul.f32 %v2486, %v2147
        %v2504 = vmul.f32 %v2488, %v2148
        %v2505 = vmul.f32 %v2474, %v2489
        %v2506 = vmul.f32 %v2476, %v2490
        %v2507 = vadd.f32 %v2503, %v2505
        %v2508 = vadd.f32 %v2504, %v2506
        %v2509 = vtanh.pop %v2507
        %v2510 = vtanh.pop %v2508
        %v2511 = vmul.f32 %v2500, %v2509
        %v2512 = vmul.f32 %v2502, %v2510
        %v2513 = vpack.c.bf16 %v2512, %v2511
        %v2515 = vunpack.c.l.b16 %v2513
        %v2516 = vunpack.c.h.b16 %v2513
        %v2517 = vpack.c.b16 %v2515, %v2515
        %v2518 = vpack.c.b16 %v2516, %v2516
        %s2521 = scalar_lea.vmem [#allocation3], 24
        %2522 = vst [vmem:[%s2521] sm:$0xf] %v2517
        %2523 = vst [vmem:[%s2521 + $0x4] sm:$0xf] %v2518
        %s2524 = smul.u32 8, 4
        %s2525 = smul.addr %s2524, 4
        %s2526 = scalar_lea.vmem [#allocation2], %s2525
        %v2527 = vld [vmem:[%s2526] sm:$0xff]
        %v2528 = vld [vmem:[%s2526 + $0x8] sm:$0xff]
        %v2529 = vld [vmem:[%s2526 + $0x10] sm:$0xff]
        %v2530 = vld [vmem:[%s2526 + $0x18] sm:$0xff]
        %v2531 = vunpack.c.l.bf16 %v2527
        %v2532 = vunpack.c.h.bf16 %v2527
        %v2533 = vunpack.c.l.bf16 %v2528
        %v2534 = vunpack.c.h.bf16 %v2528
        %v2535 = vunpack.c.l.bf16 %v2529
        %v2536 = vunpack.c.h.bf16 %v2529
        %v2537 = vunpack.c.l.bf16 %v2530
        %v2538 = vunpack.c.h.bf16 %v2530
        %v2539 = vld [vmem:[%s280] sm:$0xff]
        %v2540 = vld [vmem:[%s280 + $0x8] sm:$0xff]
        %v2541 = vld [vmem:[%s280 + $0x10] sm:$0xff]
        %v2542 = vld [vmem:[%s280 + $0x18] sm:$0xff]
        %v2543 = vld [vmem:[%s280 + $0x20] sm:$0xff]
        %v2544 = vld [vmem:[%s280 + $0x28] sm:$0xff]
        %v2545 = vld [vmem:[%s280 + $0x30] sm:$0xff]
        %v2546 = vld [vmem:[%s280 + $0x38] sm:$0xff]
        %v2547 = vld [vmem:[%s280 + $0x40] sm:$0xff]
        %v2548 = vld [vmem:[%s280 + $0x48] sm:$0xff]
        %v2549 = vld [vmem:[%s280 + $0x50] sm:$0xff]
        %v2550 = vld [vmem:[%s280 + $0x58] sm:$0xff]
        %v2551 = vld [vmem:[%s280 + $0x60] sm:$0xff]
        %v2552 = vld [vmem:[%s280 + $0x68] sm:$0xff]
        %v2553 = vld [vmem:[%s280 + $0x70] sm:$0xff]
        %v2554 = vld [vmem:[%s280 + $0x78] sm:$0xff]
        %v2555 = vld [vmem:[%s280 + $0x80] sm:$0xff]
        %v2556 = vld [vmem:[%s280 + $0x88] sm:$0xff]
        %v2557 = vld [vmem:[%s280 + $0x90] sm:$0xff]
        %v2558 = vld [vmem:[%s280 + $0x98] sm:$0xff]
        %v2559 = vld [vmem:[%s280 + $0xa0] sm:$0xff]
        %v2560 = vld [vmem:[%s280 + $0xa8] sm:$0xff]
        %v2561 = vld [vmem:[%s280 + $0xb0] sm:$0xff]
        %v2562 = vld [vmem:[%s280 + $0xb8] sm:$0xff]
        %v2563 = vld [vmem:[%s280 + $0xc0] sm:$0xff]
        %v2564 = vld [vmem:[%s280 + $0xc8] sm:$0xff]
        %v2565 = vld [vmem:[%s280 + $0xd0] sm:$0xff]
        %v2566 = vld [vmem:[%s280 + $0xd8] sm:$0xff]
        %v2567 = vld [vmem:[%s280 + $0xe0] sm:$0xff]
        %v2568 = vld [vmem:[%s280 + $0xe8] sm:$0xff]
        %v2569 = vld [vmem:[%s280 + $0xf0] sm:$0xff]
        %v2570 = vld [vmem:[%s280 + $0xf8] sm:$0xff]
        %v2603 = vunpack.c.l.b16 %v2539
        %v2604 = vunpack.c.h.b16 %v2539
        %v2605 = vunpack.c.l.b16 %v2540
        %v2606 = vunpack.c.h.b16 %v2540
        %v2607 = vunpack.c.l.b16 %v2541
        %v2608 = vunpack.c.h.b16 %v2541
        %v2609 = vunpack.c.l.b16 %v2542
        %v2610 = vunpack.c.h.b16 %v2542
        %v2611 = vunpack.c.l.b16 %v2543
        %v2612 = vunpack.c.h.b16 %v2543
        %v2613 = vunpack.c.l.b16 %v2544
        %v2614 = vunpack.c.h.b16 %v2544
        %v2615 = vunpack.c.l.b16 %v2545
        %v2616 = vunpack.c.h.b16 %v2545
        %v2617 = vunpack.c.l.b16 %v2546
        %v2618 = vunpack.c.h.b16 %v2546
        %v2619 = vunpack.c.l.b16 %v2547
        %v2620 = vunpack.c.h.b16 %v2547
        %v2621 = vunpack.c.l.b16 %v2548
        %v2622 = vunpack.c.h.b16 %v2548
        %v2623 = vunpack.c.l.b16 %v2549
        %v2624 = vunpack.c.h.b16 %v2549
        %v2625 = vunpack.c.l.b16 %v2550
        %v2626 = vunpack.c.h.b16 %v2550
        %v2627 = vunpack.c.l.b16 %v2551
        %v2628 = vunpack.c.h.b16 %v2551
        %v2629 = vunpack.c.l.b16 %v2552
        %v2630 = vunpack.c.h.b16 %v2552
        %v2631 = vunpack.c.l.b16 %v2553
        %v2632 = vunpack.c.h.b16 %v2553
        %v2633 = vunpack.c.l.b16 %v2554
        %v2634 = vunpack.c.h.b16 %v2554
        %v2635 = vunpack.c.l.b16 %v2555
        %v2636 = vunpack.c.h.b16 %v2555
        %v2637 = vunpack.c.l.b16 %v2556
        %v2638 = vunpack.c.h.b16 %v2556
        %v2639 = vunpack.c.l.b16 %v2557
        %v2640 = vunpack.c.h.b16 %v2557
        %v2641 = vunpack.c.l.b16 %v2558
        %v2642 = vunpack.c.h.b16 %v2558
        %v2643 = vunpack.c.l.b16 %v2559
        %v2644 = vunpack.c.h.b16 %v2559
        %v2645 = vunpack.c.l.b16 %v2560
        %v2646 = vunpack.c.h.b16 %v2560
        %v2647 = vunpack.c.l.b16 %v2561
        %v2648 = vunpack.c.h.b16 %v2561
        %v2649 = vunpack.c.l.b16 %v2562
        %v2650 = vunpack.c.h.b16 %v2562
        %v2651 = vunpack.c.l.b16 %v2563
        %v2652 = vunpack.c.h.b16 %v2563
        %v2653 = vunpack.c.l.b16 %v2564
        %v2654 = vunpack.c.h.b16 %v2564
        %v2655 = vunpack.c.l.b16 %v2565
        %v2656 = vunpack.c.h.b16 %v2565
        %v2657 = vunpack.c.l.b16 %v2566
        %v2658 = vunpack.c.h.b16 %v2566
        %v2659 = vunpack.c.l.b16 %v2567
        %v2660 = vunpack.c.h.b16 %v2567
        %v2661 = vunpack.c.l.b16 %v2568
        %v2662 = vunpack.c.h.b16 %v2568
        %v2663 = vunpack.c.l.b16 %v2569
        %v2664 = vunpack.c.h.b16 %v2569
        %v2665 = vunpack.c.l.b16 %v2570
        %v2666 = vunpack.c.h.b16 %v2570
        %v2667 = vpack.c.b16 %v2607, %v2603
        %v2668 = vpack.c.b16 %v2608, %v2604
        %v2669 = vpack.c.b16 %v2609, %v2605
        %v2670 = vpack.c.b16 %v2610, %v2606
        %v2671 = vpack.c.b16 %v2615, %v2611
        %v2672 = vpack.c.b16 %v2616, %v2612
        %v2673 = vpack.c.b16 %v2617, %v2613
        %v2674 = vpack.c.b16 %v2618, %v2614
        %v2675 = vpack.c.b16 %v2623, %v2619
        %v2676 = vpack.c.b16 %v2624, %v2620
        %v2677 = vpack.c.b16 %v2625, %v2621
        %v2678 = vpack.c.b16 %v2626, %v2622
        %v2679 = vpack.c.b16 %v2631, %v2627
        %v2680 = vpack.c.b16 %v2632, %v2628
        %v2681 = vpack.c.b16 %v2633, %v2629
        %v2682 = vpack.c.b16 %v2634, %v2630
        %v2683 = vpack.c.b16 %v2639, %v2635
        %v2684 = vpack.c.b16 %v2640, %v2636
        %v2685 = vpack.c.b16 %v2641, %v2637
        %v2686 = vpack.c.b16 %v2642, %v2638
        %v2687 = vpack.c.b16 %v2647, %v2643
        %v2688 = vpack.c.b16 %v2648, %v2644
        %v2689 = vpack.c.b16 %v2649, %v2645
        %v2690 = vpack.c.b16 %v2650, %v2646
        %v2691 = vpack.c.b16 %v2655, %v2651
        %v2692 = vpack.c.b16 %v2656, %v2652
        %v2693 = vpack.c.b16 %v2657, %v2653
        %v2694 = vpack.c.b16 %v2658, %v2654
        %v2695 = vpack.c.b16 %v2663, %v2659
        %v2696 = vpack.c.b16 %v2664, %v2660
        %v2697 = vpack.c.b16 %v2665, %v2661
        %v2698 = vpack.c.b16 %v2666, %v2662
        %2731 = vmatprep.subr.bf16.mxu0 %v2696
        %2732 = vmatpush1.bf16.msra.mxu0 %v2695
        %2733 = vmatprep.subr.bf16.mxu0 %v2692
        %2734 = vmatpush1.bf16.msra.mxu0 %v2691
        %2735 = vmatprep.subr.bf16.mxu0 %v2688
        %2736 = vmatpush1.bf16.msra.mxu0 %v2687
        %2737 = vmatprep.subr.bf16.mxu0 %v2684
        %2738 = vmatpush1.bf16.msra.mxu0 %v2683
        %2739 = vmatprep.subr.bf16.mxu0 %v2680
        %2740 = vmatpush1.bf16.msra.mxu0 %v2679
        %2741 = vmatprep.subr.bf16.mxu0 %v2676
        %2742 = vmatpush1.bf16.msra.mxu0 %v2675
        %2743 = vmatprep.subr.bf16.mxu0 %v2672
        %2744 = vmatpush1.bf16.msra.mxu0 %v2671
        %2745 = vmatprep.subr.bf16.mxu0 %v2668
        %2746 = vmatpush1.bf16.msra.mxu0 %v2667
        %2747 = vmatprep.subr.bf16.mxu0 0
        %2748 = vmatpush2.bf16.msra.mxu0 0
        %2749 = vmatprep.subr.bf16.mxu0 0
        %2750 = vmatpush2.bf16.msra.mxu0 0
        %2751 = vmatprep.subr.bf16.mxu0 0
        %2752 = vmatpush2.bf16.msra.mxu0 0
        %2753 = vmatprep.subr.bf16.mxu0 0
        %2754 = vmatpush2.bf16.msra.mxu0 0
        %2755 = vmatprep.subr.bf16.mxu0 0
        %2756 = vmatpush2.bf16.msra.mxu0 0
        %2757 = vmatprep.subr.bf16.mxu0 0
        %2758 = vmatpush2.bf16.msra.mxu0 0
        %2759 = vmatprep.subr.bf16.mxu0 0
        %2760 = vmatpush2.bf16.msra.mxu0 0
        %2761 = vmatprep.subr.bf16.mxu0 0
        %2762 = vmatpush2.bf16.msra.mxu0 0
        %2763 = vmatprep.mubr.bf16.mxu0 0
        %2764 = vmatmul.mubr.bf16.gmra.mxu0 %v2513
        %v2765 = vpop.f32.mrf.mxu0
        %v2766 = vadd.f32 0.0, %v2765
        %v2767 = vpop.f32.mrf.mxu0
        %v2768 = vadd.f32 0.0, %v2767
        %v2769 = vpop.f32.mrf.mxu0
        %v2770 = vadd.f32 0.0, %v2769
        %v2771 = vpop.f32.mrf.mxu0
        %v2772 = vadd.f32 0.0, %v2771
        %2773 = vdwg.mxu0
        %2774 = vmatprep.subr.bf16.mxu0 %v2698
        %2775 = vmatpush1.bf16.msra.mxu0 %v2697
        %2776 = vmatprep.subr.bf16.mxu0 %v2694
        %2777 = vmatpush1.bf16.msra.mxu0 %v2693
        %2778 = vmatprep.subr.bf16.mxu0 %v2690
        %2779 = vmatpush1.bf16.msra.mxu0 %v2689
        %2780 = vmatprep.subr.bf16.mxu0 %v2686
        %2781 = vmatpush1.bf16.msra.mxu0 %v2685
        %2782 = vmatprep.subr.bf16.mxu0 %v2682
        %2783 = vmatpush1.bf16.msra.mxu0 %v2681
        %2784 = vmatprep.subr.bf16.mxu0 %v2678
        %2785 = vmatpush1.bf16.msra.mxu0 %v2677
        %2786 = vmatprep.subr.bf16.mxu0 %v2674
        %2787 = vmatpush1.bf16.msra.mxu0 %v2673
        %2788 = vmatprep.subr.bf16.mxu0 %v2670
        %2789 = vmatpush1.bf16.msra.mxu0 %v2669
        %2790 = vmatprep.subr.bf16.mxu0 0
        %2791 = vmatpush2.bf16.msra.mxu0 0
        %2792 = vmatprep.subr.bf16.mxu0 0
        %2793 = vmatpush2.bf16.msra.mxu0 0
        %2794 = vmatprep.subr.bf16.mxu0 0
        %2795 = vmatpush2.bf16.msra.mxu0 0
        %2796 = vmatprep.subr.bf16.mxu0 0
        %2797 = vmatpush2.bf16.msra.mxu0 0
        %2798 = vmatprep.subr.bf16.mxu0 0
        %2799 = vmatpush2.bf16.msra.mxu0 0
        %2800 = vmatprep.subr.bf16.mxu0 0
        %2801 = vmatpush2.bf16.msra.mxu0 0
        %2802 = vmatprep.subr.bf16.mxu0 0
        %2803 = vmatpush2.bf16.msra.mxu0 0
        %2804 = vmatprep.subr.bf16.mxu0 0
        %2805 = vmatpush2.bf16.msra.mxu0 0
        %2806 = vmatprep.mubr.bf16.mxu0 0
        %2807 = vmatmul.mubr.bf16.gmra.mxu0 %v2513
        %v2808 = vpop.f32.mrf.mxu0
        %v2809 = vadd.f32 0.0, %v2808
        %v2810 = vpop.f32.mrf.mxu0
        %v2811 = vadd.f32 0.0, %v2810
        %v2812 = vpop.f32.mrf.mxu0
        %v2813 = vadd.f32 0.0, %v2812
        %v2814 = vpop.f32.mrf.mxu0
        %v2815 = vadd.f32 0.0, %v2814
        %2816 = vdwg.mxu0
        %v2817 = vadd.f32 %v2531, %v2766
        %v2818 = vadd.f32 %v2532, %v2768
        %v2819 = vadd.f32 %v2533, %v2809
        %v2820 = vadd.f32 %v2534, %v2811
        %v2821 = vadd.f32 %v2535, %v2770
        %v2822 = vadd.f32 %v2536, %v2772
        %v2823 = vadd.f32 %v2537, %v2813
        %v2824 = vadd.f32 %v2538, %v2815
        %v2825 = vxor.u32 %v2817, 2147483648
        %v2826 = vxor.u32 %v2821, 2147483648
        %v2827 = vmul.f32 %v2825, 1.442695
        %v2828 = vpow.pop %v2827
        %v2829 = vmul.f32 %v2826, 1.442695
        %v2830 = vpow.pop %v2829
        %v2831 = vadd.f32 %v2828, 1.0
        %v2832 = vadd.f32 %v2830, 1.0
        %v2833 = vrcp.pop %v2831
        %v2834 = vmul.f32 1.0, %v2833
        %v2835 = vrcp.pop %v2832
        %v2836 = vmul.f32 1.0, %v2835
        %v2837 = vxor.u32 %v2818, 2147483648
        %v2838 = vxor.u32 %v2822, 2147483648
        %v2839 = vmul.f32 %v2837, 1.442695
        %v2840 = vpow.pop %v2839
        %v2841 = vmul.f32 %v2838, 1.442695
        %v2842 = vpow.pop %v2841
        %v2843 = vadd.f32 %v2840, 1.0
        %v2844 = vadd.f32 %v2842, 1.0
        %v2845 = vrcp.pop %v2843
        %v2846 = vmul.f32 1.0, %v2845
        %v2847 = vrcp.pop %v2844
        %v2848 = vmul.f32 1.0, %v2847
        %v2849 = vtanh.pop %v2819
        %v2850 = vtanh.pop %v2823
        %v2851 = vxor.u32 %v2820, 2147483648
        %v2852 = vxor.u32 %v2824, 2147483648
        %v2853 = vmul.f32 %v2851, 1.442695
        %v2854 = vpow.pop %v2853
        %v2855 = vmul.f32 %v2852, 1.442695
        %v2856 = vpow.pop %v2855
        %v2857 = vadd.f32 %v2854, 1.0
        %v2858 = vadd.f32 %v2856, 1.0
        %v2859 = vrcp.pop %v2857
        %v2860 = vmul.f32 1.0, %v2859
        %v2861 = vrcp.pop %v2858
        %v2862 = vmul.f32 1.0, %v2861
        %v2863 = vmul.f32 %v2846, %v2507
        %v2864 = vmul.f32 %v2848, %v2508
        %v2865 = vmul.f32 %v2834, %v2849
        %v2866 = vmul.f32 %v2836, %v2850
        %v2867 = vadd.f32 %v2863, %v2865
        %v2868 = vadd.f32 %v2864, %v2866
        %v2869 = vtanh.pop %v2867
        %v2870 = vtanh.pop %v2868
        %v2871 = vmul.f32 %v2860, %v2869
        %v2872 = vmul.f32 %v2862, %v2870
        %v2873 = vpack.c.bf16 %v2872, %v2871
        %v2875 = vunpack.c.l.b16 %v2873
        %v2876 = vunpack.c.h.b16 %v2873
        %v2877 = vpack.c.b16 %v2875, %v2875
        %v2878 = vpack.c.b16 %v2876, %v2876
        %s2881 = scalar_lea.vmem [#allocation3], 32
        %2882 = vst [vmem:[%s2881] sm:$0xf] %v2877
        %2883 = vst [vmem:[%s2881 + $0x4] sm:$0xf] %v2878
        %s2884 = smul.u32 10, 4
        %s2885 = smul.addr %s2884, 4
        %s2886 = scalar_lea.vmem [#allocation2], %s2885
        %v2887 = vld [vmem:[%s2886] sm:$0xff]
        %v2888 = vld [vmem:[%s2886 + $0x8] sm:$0xff]
        %v2889 = vld [vmem:[%s2886 + $0x10] sm:$0xff]
        %v2890 = vld [vmem:[%s2886 + $0x18] sm:$0xff]
        %v2891 = vunpack.c.l.bf16 %v2887
        %v2892 = vunpack.c.h.bf16 %v2887
        %v2893 = vunpack.c.l.bf16 %v2888
        %v2894 = vunpack.c.h.bf16 %v2888
        %v2895 = vunpack.c.l.bf16 %v2889
        %v2896 = vunpack.c.h.bf16 %v2889
        %v2897 = vunpack.c.l.bf16 %v2890
        %v2898 = vunpack.c.h.bf16 %v2890
        %v2899 = vld [vmem:[%s280] sm:$0xff]
        %v2900 = vld [vmem:[%s280 + $0x8] sm:$0xff]
        %v2901 = vld [vmem:[%s280 + $0x10] sm:$0xff]
        %v2902 = vld [vmem:[%s280 + $0x18] sm:$0xff]
        %v2903 = vld [vmem:[%s280 + $0x20] sm:$0xff]
        %v2904 = vld [vmem:[%s280 + $0x28] sm:$0xff]
        %v2905 = vld [vmem:[%s280 + $0x30] sm:$0xff]
        %v2906 = vld [vmem:[%s280 + $0x38] sm:$0xff]
        %v2907 = vld [vmem:[%s280 + $0x40] sm:$0xff]
        %v2908 = vld [vmem:[%s280 + $0x48] sm:$0xff]
        %v2909 = vld [vmem:[%s280 + $0x50] sm:$0xff]
        %v2910 = vld [vmem:[%s280 + $0x58] sm:$0xff]
        %v2911 = vld [vmem:[%s280 + $0x60] sm:$0xff]
        %v2912 = vld [vmem:[%s280 + $0x68] sm:$0xff]
        %v2913 = vld [vmem:[%s280 + $0x70] sm:$0xff]
        %v2914 = vld [vmem:[%s280 + $0x78] sm:$0xff]
        %v2915 = vld [vmem:[%s280 + $0x80] sm:$0xff]
        %v2916 = vld [vmem:[%s280 + $0x88] sm:$0xff]
        %v2917 = vld [vmem:[%s280 + $0x90] sm:$0xff]
        %v2918 = vld [vmem:[%s280 + $0x98] sm:$0xff]
        %v2919 = vld [vmem:[%s280 + $0xa0] sm:$0xff]
        %v2920 = vld [vmem:[%s280 + $0xa8] sm:$0xff]
        %v2921 = vld [vmem:[%s280 + $0xb0] sm:$0xff]
        %v2922 = vld [vmem:[%s280 + $0xb8] sm:$0xff]
        %v2923 = vld [vmem:[%s280 + $0xc0] sm:$0xff]
        %v2924 = vld [vmem:[%s280 + $0xc8] sm:$0xff]
        %v2925 = vld [vmem:[%s280 + $0xd0] sm:$0xff]
        %v2926 = vld [vmem:[%s280 + $0xd8] sm:$0xff]
        %v2927 = vld [vmem:[%s280 + $0xe0] sm:$0xff]
        %v2928 = vld [vmem:[%s280 + $0xe8] sm:$0xff]
        %v2929 = vld [vmem:[%s280 + $0xf0] sm:$0xff]
        %v2930 = vld [vmem:[%s280 + $0xf8] sm:$0xff]
        %v2963 = vunpack.c.l.b16 %v2899
        %v2964 = vunpack.c.h.b16 %v2899
        %v2965 = vunpack.c.l.b16 %v2900
        %v2966 = vunpack.c.h.b16 %v2900
        %v2967 = vunpack.c.l.b16 %v2901
        %v2968 = vunpack.c.h.b16 %v2901
        %v2969 = vunpack.c.l.b16 %v2902
        %v2970 = vunpack.c.h.b16 %v2902
        %v2971 = vunpack.c.l.b16 %v2903
        %v2972 = vunpack.c.h.b16 %v2903
        %v2973 = vunpack.c.l.b16 %v2904
        %v2974 = vunpack.c.h.b16 %v2904
        %v2975 = vunpack.c.l.b16 %v2905
        %v2976 = vunpack.c.h.b16 %v2905
        %v2977 = vunpack.c.l.b16 %v2906
        %v2978 = vunpack.c.h.b16 %v2906
        %v2979 = vunpack.c.l.b16 %v2907
        %v2980 = vunpack.c.h.b16 %v2907
        %v2981 = vunpack.c.l.b16 %v2908
        %v2982 = vunpack.c.h.b16 %v2908
        %v2983 = vunpack.c.l.b16 %v2909
        %v2984 = vunpack.c.h.b16 %v2909
        %v2985 = vunpack.c.l.b16 %v2910
        %v2986 = vunpack.c.h.b16 %v2910
        %v2987 = vunpack.c.l.b16 %v2911
        %v2988 = vunpack.c.h.b16 %v2911
        %v2989 = vunpack.c.l.b16 %v2912
        %v2990 = vunpack.c.h.b16 %v2912
        %v2991 = vunpack.c.l.b16 %v2913
        %v2992 = vunpack.c.h.b16 %v2913
        %v2993 = vunpack.c.l.b16 %v2914
        %v2994 = vunpack.c.h.b16 %v2914
        %v2995 = vunpack.c.l.b16 %v2915
        %v2996 = vunpack.c.h.b16 %v2915
        %v2997 = vunpack.c.l.b16 %v2916
        %v2998 = vunpack.c.h.b16 %v2916
        %v2999 = vunpack.c.l.b16 %v2917
        %v3000 = vunpack.c.h.b16 %v2917
        %v3001 = vunpack.c.l.b16 %v2918
        %v3002 = vunpack.c.h.b16 %v2918
        %v3003 = vunpack.c.l.b16 %v2919
        %v3004 = vunpack.c.h.b16 %v2919
        %v3005 = vunpack.c.l.b16 %v2920
        %v3006 = vunpack.c.h.b16 %v2920
        %v3007 = vunpack.c.l.b16 %v2921
        %v3008 = vunpack.c.h.b16 %v2921
        %v3009 = vunpack.c.l.b16 %v2922
        %v3010 = vunpack.c.h.b16 %v2922
        %v3011 = vunpack.c.l.b16 %v2923
        %v3012 = vunpack.c.h.b16 %v2923
        %v3013 = vunpack.c.l.b16 %v2924
        %v3014 = vunpack.c.h.b16 %v2924
        %v3015 = vunpack.c.l.b16 %v2925
        %v3016 = vunpack.c.h.b16 %v2925
        %v3017 = vunpack.c.l.b16 %v2926
        %v3018 = vunpack.c.h.b16 %v2926
        %v3019 = vunpack.c.l.b16 %v2927
        %v3020 = vunpack.c.h.b16 %v2927
        %v3021 = vunpack.c.l.b16 %v2928
        %v3022 = vunpack.c.h.b16 %v2928
        %v3023 = vunpack.c.l.b16 %v2929
        %v3024 = vunpack.c.h.b16 %v2929
        %v3025 = vunpack.c.l.b16 %v2930
        %v3026 = vunpack.c.h.b16 %v2930
        %v3027 = vpack.c.b16 %v2967, %v2963
        %v3028 = vpack.c.b16 %v2968, %v2964
        %v3029 = vpack.c.b16 %v2969, %v2965
        %v3030 = vpack.c.b16 %v2970, %v2966
        %v3031 = vpack.c.b16 %v2975, %v2971
        %v3032 = vpack.c.b16 %v2976, %v2972
        %v3033 = vpack.c.b16 %v2977, %v2973
        %v3034 = vpack.c.b16 %v2978, %v2974
        %v3035 = vpack.c.b16 %v2983, %v2979
        %v3036 = vpack.c.b16 %v2984, %v2980
        %v3037 = vpack.c.b16 %v2985, %v2981
        %v3038 = vpack.c.b16 %v2986, %v2982
        %v3039 = vpack.c.b16 %v2991, %v2987
        %v3040 = vpack.c.b16 %v2992, %v2988
        %v3041 = vpack.c.b16 %v2993, %v2989
        %v3042 = vpack.c.b16 %v2994, %v2990
        %v3043 = vpack.c.b16 %v2999, %v2995
        %v3044 = vpack.c.b16 %v3000, %v2996
        %v3045 = vpack.c.b16 %v3001, %v2997
        %v3046 = vpack.c.b16 %v3002, %v2998
        %v3047 = vpack.c.b16 %v3007, %v3003
        %v3048 = vpack.c.b16 %v3008, %v3004
        %v3049 = vpack.c.b16 %v3009, %v3005
        %v3050 = vpack.c.b16 %v3010, %v3006
        %v3051 = vpack.c.b16 %v3015, %v3011
        %v3052 = vpack.c.b16 %v3016, %v3012
        %v3053 = vpack.c.b16 %v3017, %v3013
        %v3054 = vpack.c.b16 %v3018, %v3014
        %v3055 = vpack.c.b16 %v3023, %v3019
        %v3056 = vpack.c.b16 %v3024, %v3020
        %v3057 = vpack.c.b16 %v3025, %v3021
        %v3058 = vpack.c.b16 %v3026, %v3022
        %3091 = vmatprep.subr.bf16.mxu0 %v3056
        %3092 = vmatpush1.bf16.msra.mxu0 %v3055
        %3093 = vmatprep.subr.bf16.mxu0 %v3052
        %3094 = vmatpush1.bf16.msra.mxu0 %v3051
        %3095 = vmatprep.subr.bf16.mxu0 %v3048
        %3096 = vmatpush1.bf16.msra.mxu0 %v3047
        %3097 = vmatprep.subr.bf16.mxu0 %v3044
        %3098 = vmatpush1.bf16.msra.mxu0 %v3043
        %3099 = vmatprep.subr.bf16.mxu0 %v3040
        %3100 = vmatpush1.bf16.msra.mxu0 %v3039
        %3101 = vmatprep.subr.bf16.mxu0 %v3036
        %3102 = vmatpush1.bf16.msra.mxu0 %v3035
        %3103 = vmatprep.subr.bf16.mxu0 %v3032
        %3104 = vmatpush1.bf16.msra.mxu0 %v3031
        %3105 = vmatprep.subr.bf16.mxu0 %v3028
        %3106 = vmatpush1.bf16.msra.mxu0 %v3027
        %3107 = vmatprep.subr.bf16.mxu0 0
        %3108 = vmatpush2.bf16.msra.mxu0 0
        %3109 = vmatprep.subr.bf16.mxu0 0
        %3110 = vmatpush2.bf16.msra.mxu0 0
        %3111 = vmatprep.subr.bf16.mxu0 0
        %3112 = vmatpush2.bf16.msra.mxu0 0
        %3113 = vmatprep.subr.bf16.mxu0 0
        %3114 = vmatpush2.bf16.msra.mxu0 0
        %3115 = vmatprep.subr.bf16.mxu0 0
        %3116 = vmatpush2.bf16.msra.mxu0 0
        %3117 = vmatprep.subr.bf16.mxu0 0
        %3118 = vmatpush2.bf16.msra.mxu0 0
        %3119 = vmatprep.subr.bf16.mxu0 0
        %3120 = vmatpush2.bf16.msra.mxu0 0
        %3121 = vmatprep.subr.bf16.mxu0 0
        %3122 = vmatpush2.bf16.msra.mxu0 0
        %3123 = vmatprep.mubr.bf16.mxu0 0
        %3124 = vmatmul.mubr.bf16.gmra.mxu0 %v2873
        %v3125 = vpop.f32.mrf.mxu0
        %v3126 = vadd.f32 0.0, %v3125
        %v3127 = vpop.f32.mrf.mxu0
        %v3128 = vadd.f32 0.0, %v3127
        %v3129 = vpop.f32.mrf.mxu0
        %v3130 = vadd.f32 0.0, %v3129
        %v3131 = vpop.f32.mrf.mxu0
        %v3132 = vadd.f32 0.0, %v3131
        %3133 = vdwg.mxu0
        %3134 = vmatprep.subr.bf16.mxu0 %v3058
        %3135 = vmatpush1.bf16.msra.mxu0 %v3057
        %3136 = vmatprep.subr.bf16.mxu0 %v3054
        %3137 = vmatpush1.bf16.msra.mxu0 %v3053
        %3138 = vmatprep.subr.bf16.mxu0 %v3050
        %3139 = vmatpush1.bf16.msra.mxu0 %v3049
        %3140 = vmatprep.subr.bf16.mxu0 %v3046
        %3141 = vmatpush1.bf16.msra.mxu0 %v3045
        %3142 = vmatprep.subr.bf16.mxu0 %v3042
        %3143 = vmatpush1.bf16.msra.mxu0 %v3041
        %3144 = vmatprep.subr.bf16.mxu0 %v3038
        %3145 = vmatpush1.bf16.msra.mxu0 %v3037
        %3146 = vmatprep.subr.bf16.mxu0 %v3034
        %3147 = vmatpush1.bf16.msra.mxu0 %v3033
        %3148 = vmatprep.subr.bf16.mxu0 %v3030
        %3149 = vmatpush1.bf16.msra.mxu0 %v3029
        %3150 = vmatprep.subr.bf16.mxu0 0
        %3151 = vmatpush2.bf16.msra.mxu0 0
        %3152 = vmatprep.subr.bf16.mxu0 0
        %3153 = vmatpush2.bf16.msra.mxu0 0
        %3154 = vmatprep.subr.bf16.mxu0 0
        %3155 = vmatpush2.bf16.msra.mxu0 0
        %3156 = vmatprep.subr.bf16.mxu0 0
        %3157 = vmatpush2.bf16.msra.mxu0 0
        %3158 = vmatprep.subr.bf16.mxu0 0
        %3159 = vmatpush2.bf16.msra.mxu0 0
        %3160 = vmatprep.subr.bf16.mxu0 0
        %3161 = vmatpush2.bf16.msra.mxu0 0
        %3162 = vmatprep.subr.bf16.mxu0 0
        %3163 = vmatpush2.bf16.msra.mxu0 0
        %3164 = vmatprep.subr.bf16.mxu0 0
        %3165 = vmatpush2.bf16.msra.mxu0 0
        %3166 = vmatprep.mubr.bf16.mxu0 0
        %3167 = vmatmul.mubr.bf16.gmra.mxu0 %v2873
        %v3168 = vpop.f32.mrf.mxu0
        %v3169 = vadd.f32 0.0, %v3168
        %v3170 = vpop.f32.mrf.mxu0
        %v3171 = vadd.f32 0.0, %v3170
        %v3172 = vpop.f32.mrf.mxu0
        %v3173 = vadd.f32 0.0, %v3172
        %v3174 = vpop.f32.mrf.mxu0
        %v3175 = vadd.f32 0.0, %v3174
        %3176 = vdwg.mxu0
        %v3177 = vadd.f32 %v2891, %v3126
        %v3178 = vadd.f32 %v2892, %v3128
        %v3179 = vadd.f32 %v2893, %v3169
        %v3180 = vadd.f32 %v2894, %v3171
        %v3181 = vadd.f32 %v2895, %v3130
        %v3182 = vadd.f32 %v2896, %v3132
        %v3183 = vadd.f32 %v2897, %v3173
        %v3184 = vadd.f32 %v2898, %v3175
        %v3185 = vxor.u32 %v3177, 2147483648
        %v3186 = vxor.u32 %v3181, 2147483648
        %v3187 = vmul.f32 %v3185, 1.442695
        %v3188 = vpow.pop %v3187
        %v3189 = vmul.f32 %v3186, 1.442695
        %v3190 = vpow.pop %v3189
        %v3191 = vadd.f32 %v3188, 1.0
        %v3192 = vadd.f32 %v3190, 1.0
        %v3193 = vrcp.pop %v3191
        %v3194 = vmul.f32 1.0, %v3193
        %v3195 = vrcp.pop %v3192
        %v3196 = vmul.f32 1.0, %v3195
        %v3197 = vxor.u32 %v3178, 2147483648
        %v3198 = vxor.u32 %v3182, 2147483648
        %v3199 = vmul.f32 %v3197, 1.442695
        %v3200 = vpow.pop %v3199
        %v3201 = vmul.f32 %v3198, 1.442695
        %v3202 = vpow.pop %v3201
        %v3203 = vadd.f32 %v3200, 1.0
        %v3204 = vadd.f32 %v3202, 1.0
        %v3205 = vrcp.pop %v3203
        %v3206 = vmul.f32 1.0, %v3205
        %v3207 = vrcp.pop %v3204
        %v3208 = vmul.f32 1.0, %v3207
        %v3209 = vtanh.pop %v3179
        %v3210 = vtanh.pop %v3183
        %v3211 = vxor.u32 %v3180, 2147483648
        %v3212 = vxor.u32 %v3184, 2147483648
        %v3213 = vmul.f32 %v3211, 1.442695
        %v3214 = vpow.pop %v3213
        %v3215 = vmul.f32 %v3212, 1.442695
        %v3216 = vpow.pop %v3215
        %v3217 = vadd.f32 %v3214, 1.0
        %v3218 = vadd.f32 %v3216, 1.0
        %v3219 = vrcp.pop %v3217
        %v3220 = vmul.f32 1.0, %v3219
        %v3221 = vrcp.pop %v3218
        %v3222 = vmul.f32 1.0, %v3221
        %v3223 = vmul.f32 %v3206, %v2867
        %v3224 = vmul.f32 %v3208, %v2868
        %v3225 = vmul.f32 %v3194, %v3209
        %v3226 = vmul.f32 %v3196, %v3210
        %v3227 = vadd.f32 %v3223, %v3225
        %v3228 = vadd.f32 %v3224, %v3226
        %v3229 = vtanh.pop %v3227
        %v3230 = vtanh.pop %v3228
        %v3231 = vmul.f32 %v3220, %v3229
        %v3232 = vmul.f32 %v3222, %v3230
        %v3233 = vpack.c.bf16 %v3232, %v3231
        %v3235 = vunpack.c.l.b16 %v3233
        %v3236 = vunpack.c.h.b16 %v3233
        %v3237 = vpack.c.b16 %v3235, %v3235
        %v3238 = vpack.c.b16 %v3236, %v3236
        %s3241 = scalar_lea.vmem [#allocation3], 40
        %3242 = vst [vmem:[%s3241] sm:$0xf] %v3237
        %3243 = vst [vmem:[%s3241 + $0x4] sm:$0xf] %v3238
        %s3244 = smul.u32 12, 4
        %s3245 = smul.addr %s3244, 4
        %s3246 = scalar_lea.vmem [#allocation2], %s3245
        %v3247 = vld [vmem:[%s3246] sm:$0xff]
        %v3248 = vld [vmem:[%s3246 + $0x8] sm:$0xff]
        %v3249 = vld [vmem:[%s3246 + $0x10] sm:$0xff]
        %v3250 = vld [vmem:[%s3246 + $0x18] sm:$0xff]
        %v3251 = vunpack.c.l.bf16 %v3247
        %v3252 = vunpack.c.h.bf16 %v3247
        %v3253 = vunpack.c.l.bf16 %v3248
        %v3254 = vunpack.c.h.bf16 %v3248
        %v3255 = vunpack.c.l.bf16 %v3249
        %v3256 = vunpack.c.h.bf16 %v3249
        %v3257 = vunpack.c.l.bf16 %v3250
        %v3258 = vunpack.c.h.bf16 %v3250
        %v3259 = vld [vmem:[%s280] sm:$0xff]
        %v3260 = vld [vmem:[%s280 + $0x8] sm:$0xff]
        %v3261 = vld [vmem:[%s280 + $0x10] sm:$0xff]
        %v3262 = vld [vmem:[%s280 + $0x18] sm:$0xff]
        %v3263 = vld [vmem:[%s280 + $0x20] sm:$0xff]
        %v3264 = vld [vmem:[%s280 + $0x28] sm:$0xff]
        %v3265 = vld [vmem:[%s280 + $0x30] sm:$0xff]
        %v3266 = vld [vmem:[%s280 + $0x38] sm:$0xff]
        %v3267 = vld [vmem:[%s280 + $0x40] sm:$0xff]
        %v3268 = vld [vmem:[%s280 + $0x48] sm:$0xff]
        %v3269 = vld [vmem:[%s280 + $0x50] sm:$0xff]
        %v3270 = vld [vmem:[%s280 + $0x58] sm:$0xff]
        %v3271 = vld [vmem:[%s280 + $0x60] sm:$0xff]
        %v3272 = vld [vmem:[%s280 + $0x68] sm:$0xff]
        %v3273 = vld [vmem:[%s280 + $0x70] sm:$0xff]
        %v3274 = vld [vmem:[%s280 + $0x78] sm:$0xff]
        %v3275 = vld [vmem:[%s280 + $0x80] sm:$0xff]
        %v3276 = vld [vmem:[%s280 + $0x88] sm:$0xff]
        %v3277 = vld [vmem:[%s280 + $0x90] sm:$0xff]
        %v3278 = vld [vmem:[%s280 + $0x98] sm:$0xff]
        %v3279 = vld [vmem:[%s280 + $0xa0] sm:$0xff]
        %v3280 = vld [vmem:[%s280 + $0xa8] sm:$0xff]
        %v3281 = vld [vmem:[%s280 + $0xb0] sm:$0xff]
        %v3282 = vld [vmem:[%s280 + $0xb8] sm:$0xff]
        %v3283 = vld [vmem:[%s280 + $0xc0] sm:$0xff]
        %v3284 = vld [vmem:[%s280 + $0xc8] sm:$0xff]
        %v3285 = vld [vmem:[%s280 + $0xd0] sm:$0xff]
        %v3286 = vld [vmem:[%s280 + $0xd8] sm:$0xff]
        %v3287 = vld [vmem:[%s280 + $0xe0] sm:$0xff]
        %v3288 = vld [vmem:[%s280 + $0xe8] sm:$0xff]
        %v3289 = vld [vmem:[%s280 + $0xf0] sm:$0xff]
        %v3290 = vld [vmem:[%s280 + $0xf8] sm:$0xff]
        %v3323 = vunpack.c.l.b16 %v3259
        %v3324 = vunpack.c.h.b16 %v3259
        %v3325 = vunpack.c.l.b16 %v3260
        %v3326 = vunpack.c.h.b16 %v3260
        %v3327 = vunpack.c.l.b16 %v3261
        %v3328 = vunpack.c.h.b16 %v3261
        %v3329 = vunpack.c.l.b16 %v3262
        %v3330 = vunpack.c.h.b16 %v3262
        %v3331 = vunpack.c.l.b16 %v3263
        %v3332 = vunpack.c.h.b16 %v3263
        %v3333 = vunpack.c.l.b16 %v3264
        %v3334 = vunpack.c.h.b16 %v3264
        %v3335 = vunpack.c.l.b16 %v3265
        %v3336 = vunpack.c.h.b16 %v3265
        %v3337 = vunpack.c.l.b16 %v3266
        %v3338 = vunpack.c.h.b16 %v3266
        %v3339 = vunpack.c.l.b16 %v3267
        %v3340 = vunpack.c.h.b16 %v3267
        %v3341 = vunpack.c.l.b16 %v3268
        %v3342 = vunpack.c.h.b16 %v3268
        %v3343 = vunpack.c.l.b16 %v3269
        %v3344 = vunpack.c.h.b16 %v3269
        %v3345 = vunpack.c.l.b16 %v3270
        %v3346 = vunpack.c.h.b16 %v3270
        %v3347 = vunpack.c.l.b16 %v3271
        %v3348 = vunpack.c.h.b16 %v3271
        %v3349 = vunpack.c.l.b16 %v3272
        %v3350 = vunpack.c.h.b16 %v3272
        %v3351 = vunpack.c.l.b16 %v3273
        %v3352 = vunpack.c.h.b16 %v3273
        %v3353 = vunpack.c.l.b16 %v3274
        %v3354 = vunpack.c.h.b16 %v3274
        %v3355 = vunpack.c.l.b16 %v3275
        %v3356 = vunpack.c.h.b16 %v3275
        %v3357 = vunpack.c.l.b16 %v3276
        %v3358 = vunpack.c.h.b16 %v3276
        %v3359 = vunpack.c.l.b16 %v3277
        %v3360 = vunpack.c.h.b16 %v3277
        %v3361 = vunpack.c.l.b16 %v3278
        %v3362 = vunpack.c.h.b16 %v3278
        %v3363 = vunpack.c.l.b16 %v3279
        %v3364 = vunpack.c.h.b16 %v3279
        %v3365 = vunpack.c.l.b16 %v3280
        %v3366 = vunpack.c.h.b16 %v3280
        %v3367 = vunpack.c.l.b16 %v3281
        %v3368 = vunpack.c.h.b16 %v3281
        %v3369 = vunpack.c.l.b16 %v3282
        %v3370 = vunpack.c.h.b16 %v3282
        %v3371 = vunpack.c.l.b16 %v3283
        %v3372 = vunpack.c.h.b16 %v3283
        %v3373 = vunpack.c.l.b16 %v3284
        %v3374 = vunpack.c.h.b16 %v3284
        %v3375 = vunpack.c.l.b16 %v3285
        %v3376 = vunpack.c.h.b16 %v3285
        %v3377 = vunpack.c.l.b16 %v3286
        %v3378 = vunpack.c.h.b16 %v3286
        %v3379 = vunpack.c.l.b16 %v3287
        %v3380 = vunpack.c.h.b16 %v3287
        %v3381 = vunpack.c.l.b16 %v3288
        %v3382 = vunpack.c.h.b16 %v3288
        %v3383 = vunpack.c.l.b16 %v3289
        %v3384 = vunpack.c.h.b16 %v3289
        %v3385 = vunpack.c.l.b16 %v3290
        %v3386 = vunpack.c.h.b16 %v3290
        %v3387 = vpack.c.b16 %v3327, %v3323
        %v3388 = vpack.c.b16 %v3328, %v3324
        %v3389 = vpack.c.b16 %v3329, %v3325
        %v3390 = vpack.c.b16 %v3330, %v3326
        %v3391 = vpack.c.b16 %v3335, %v3331
        %v3392 = vpack.c.b16 %v3336, %v3332
        %v3393 = vpack.c.b16 %v3337, %v3333
        %v3394 = vpack.c.b16 %v3338, %v3334
        %v3395 = vpack.c.b16 %v3343, %v3339
        %v3396 = vpack.c.b16 %v3344, %v3340
        %v3397 = vpack.c.b16 %v3345, %v3341
        %v3398 = vpack.c.b16 %v3346, %v3342
        %v3399 = vpack.c.b16 %v3351, %v3347
        %v3400 = vpack.c.b16 %v3352, %v3348
        %v3401 = vpack.c.b16 %v3353, %v3349
        %v3402 = vpack.c.b16 %v3354, %v3350
        %v3403 = vpack.c.b16 %v3359, %v3355
        %v3404 = vpack.c.b16 %v3360, %v3356
        %v3405 = vpack.c.b16 %v3361, %v3357
        %v3406 = vpack.c.b16 %v3362, %v3358
        %v3407 = vpack.c.b16 %v3367, %v3363
        %v3408 = vpack.c.b16 %v3368, %v3364
        %v3409 = vpack.c.b16 %v3369, %v3365
        %v3410 = vpack.c.b16 %v3370, %v3366
        %v3411 = vpack.c.b16 %v3375, %v3371
        %v3412 = vpack.c.b16 %v3376, %v3372
        %v3413 = vpack.c.b16 %v3377, %v3373
        %v3414 = vpack.c.b16 %v3378, %v3374
        %v3415 = vpack.c.b16 %v3383, %v3379
        %v3416 = vpack.c.b16 %v3384, %v3380
        %v3417 = vpack.c.b16 %v3385, %v3381
        %v3418 = vpack.c.b16 %v3386, %v3382
        %3451 = vmatprep.subr.bf16.mxu0 %v3416
        %3452 = vmatpush1.bf16.msra.mxu0 %v3415
        %3453 = vmatprep.subr.bf16.mxu0 %v3412
        %3454 = vmatpush1.bf16.msra.mxu0 %v3411
        %3455 = vmatprep.subr.bf16.mxu0 %v3408
        %3456 = vmatpush1.bf16.msra.mxu0 %v3407
        %3457 = vmatprep.subr.bf16.mxu0 %v3404
        %3458 = vmatpush1.bf16.msra.mxu0 %v3403
        %3459 = vmatprep.subr.bf16.mxu0 %v3400
        %3460 = vmatpush1.bf16.msra.mxu0 %v3399
        %3461 = vmatprep.subr.bf16.mxu0 %v3396
        %3462 = vmatpush1.bf16.msra.mxu0 %v3395
        %3463 = vmatprep.subr.bf16.mxu0 %v3392
        %3464 = vmatpush1.bf16.msra.mxu0 %v3391
        %3465 = vmatprep.subr.bf16.mxu0 %v3388
        %3466 = vmatpush1.bf16.msra.mxu0 %v3387
        %3467 = vmatprep.subr.bf16.mxu0 0
        %3468 = vmatpush2.bf16.msra.mxu0 0
        %3469 = vmatprep.subr.bf16.mxu0 0
        %3470 = vmatpush2.bf16.msra.mxu0 0
        %3471 = vmatprep.subr.bf16.mxu0 0
        %3472 = vmatpush2.bf16.msra.mxu0 0
        %3473 = vmatprep.subr.bf16.mxu0 0
        %3474 = vmatpush2.bf16.msra.mxu0 0
        %3475 = vmatprep.subr.bf16.mxu0 0
        %3476 = vmatpush2.bf16.msra.mxu0 0
        %3477 = vmatprep.subr.bf16.mxu0 0
        %3478 = vmatpush2.bf16.msra.mxu0 0
        %3479 = vmatprep.subr.bf16.mxu0 0
        %3480 = vmatpush2.bf16.msra.mxu0 0
        %3481 = vmatprep.subr.bf16.mxu0 0
        %3482 = vmatpush2.bf16.msra.mxu0 0
        %3483 = vmatprep.mubr.bf16.mxu0 0
        %3484 = vmatmul.mubr.bf16.gmra.mxu0 %v3233
        %v3485 = vpop.f32.mrf.mxu0
        %v3486 = vadd.f32 0.0, %v3485
        %v3487 = vpop.f32.mrf.mxu0
        %v3488 = vadd.f32 0.0, %v3487
        %v3489 = vpop.f32.mrf.mxu0
        %v3490 = vadd.f32 0.0, %v3489
        %v3491 = vpop.f32.mrf.mxu0
        %v3492 = vadd.f32 0.0, %v3491
        %3493 = vdwg.mxu0
        %3494 = vmatprep.subr.bf16.mxu0 %v3418
        %3495 = vmatpush1.bf16.msra.mxu0 %v3417
        %3496 = vmatprep.subr.bf16.mxu0 %v3414
        %3497 = vmatpush1.bf16.msra.mxu0 %v3413
        %3498 = vmatprep.subr.bf16.mxu0 %v3410
        %3499 = vmatpush1.bf16.msra.mxu0 %v3409
        %3500 = vmatprep.subr.bf16.mxu0 %v3406
        %3501 = vmatpush1.bf16.msra.mxu0 %v3405
        %3502 = vmatprep.subr.bf16.mxu0 %v3402
        %3503 = vmatpush1.bf16.msra.mxu0 %v3401
        %3504 = vmatprep.subr.bf16.mxu0 %v3398
        %3505 = vmatpush1.bf16.msra.mxu0 %v3397
        %3506 = vmatprep.subr.bf16.mxu0 %v3394
        %3507 = vmatpush1.bf16.msra.mxu0 %v3393
        %3508 = vmatprep.subr.bf16.mxu0 %v3390
        %3509 = vmatpush1.bf16.msra.mxu0 %v3389
        %3510 = vmatprep.subr.bf16.mxu0 0
        %3511 = vmatpush2.bf16.msra.mxu0 0
        %3512 = vmatprep.subr.bf16.mxu0 0
        %3513 = vmatpush2.bf16.msra.mxu0 0
        %3514 = vmatprep.subr.bf16.mxu0 0
        %3515 = vmatpush2.bf16.msra.mxu0 0
        %3516 = vmatprep.subr.bf16.mxu0 0
        %3517 = vmatpush2.bf16.msra.mxu0 0
        %3518 = vmatprep.subr.bf16.mxu0 0
        %3519 = vmatpush2.bf16.msra.mxu0 0
        %3520 = vmatprep.subr.bf16.mxu0 0
        %3521 = vmatpush2.bf16.msra.mxu0 0
        %3522 = vmatprep.subr.bf16.mxu0 0
        %3523 = vmatpush2.bf16.msra.mxu0 0
        %3524 = vmatprep.subr.bf16.mxu0 0
        %3525 = vmatpush2.bf16.msra.mxu0 0
        %3526 = vmatprep.mubr.bf16.mxu0 0
        %3527 = vmatmul.mubr.bf16.gmra.mxu0 %v3233
        %v3528 = vpop.f32.mrf.mxu0
        %v3529 = vadd.f32 0.0, %v3528
        %v3530 = vpop.f32.mrf.mxu0
        %v3531 = vadd.f32 0.0, %v3530
        %v3532 = vpop.f32.mrf.mxu0
        %v3533 = vadd.f32 0.0, %v3532
        %v3534 = vpop.f32.mrf.mxu0
        %v3535 = vadd.f32 0.0, %v3534
        %3536 = vdwg.mxu0
        %v3537 = vadd.f32 %v3251, %v3486
        %v3538 = vadd.f32 %v3252, %v3488
        %v3539 = vadd.f32 %v3253, %v3529
        %v3540 = vadd.f32 %v3254, %v3531
        %v3541 = vadd.f32 %v3255, %v3490
        %v3542 = vadd.f32 %v3256, %v3492
        %v3543 = vadd.f32 %v3257, %v3533
        %v3544 = vadd.f32 %v3258, %v3535
        %v3545 = vxor.u32 %v3537, 2147483648
        %v3546 = vxor.u32 %v3541, 2147483648
        %v3547 = vmul.f32 %v3545, 1.442695
        %v3548 = vpow.pop %v3547
        %v3549 = vmul.f32 %v3546, 1.442695
        %v3550 = vpow.pop %v3549
        %v3551 = vadd.f32 %v3548, 1.0
        %v3552 = vadd.f32 %v3550, 1.0
        %v3553 = vrcp.pop %v3551
        %v3554 = vmul.f32 1.0, %v3553
        %v3555 = vrcp.pop %v3552
        %v3556 = vmul.f32 1.0, %v3555
        %v3557 = vxor.u32 %v3538, 2147483648
        %v3558 = vxor.u32 %v3542, 2147483648
        %v3559 = vmul.f32 %v3557, 1.442695
        %v3560 = vpow.pop %v3559
        %v3561 = vmul.f32 %v3558, 1.442695
        %v3562 = vpow.pop %v3561
        %v3563 = vadd.f32 %v3560, 1.0
        %v3564 = vadd.f32 %v3562, 1.0
        %v3565 = vrcp.pop %v3563
        %v3566 = vmul.f32 1.0, %v3565
        %v3567 = vrcp.pop %v3564
        %v3568 = vmul.f32 1.0, %v3567
        %v3569 = vtanh.pop %v3539
        %v3570 = vtanh.pop %v3543
        %v3571 = vxor.u32 %v3540, 2147483648
        %v3572 = vxor.u32 %v3544, 2147483648
        %v3573 = vmul.f32 %v3571, 1.442695
        %v3574 = vpow.pop %v3573
        %v3575 = vmul.f32 %v3572, 1.442695
        %v3576 = vpow.pop %v3575
        %v3577 = vadd.f32 %v3574, 1.0
        %v3578 = vadd.f32 %v3576, 1.0
        %v3579 = vrcp.pop %v3577
        %v3580 = vmul.f32 1.0, %v3579
        %v3581 = vrcp.pop %v3578
        %v3582 = vmul.f32 1.0, %v3581
        %v3583 = vmul.f32 %v3566, %v3227
        %v3584 = vmul.f32 %v3568, %v3228
        %v3585 = vmul.f32 %v3554, %v3569
        %v3586 = vmul.f32 %v3556, %v3570
        %v3587 = vadd.f32 %v3583, %v3585
        %v3588 = vadd.f32 %v3584, %v3586
        %v3589 = vtanh.pop %v3587
        %v3590 = vtanh.pop %v3588
        %v3591 = vmul.f32 %v3580, %v3589
        %v3592 = vmul.f32 %v3582, %v3590
        %v3593 = vpack.c.bf16 %v3592, %v3591
        %v3595 = vunpack.c.l.b16 %v3593
        %v3596 = vunpack.c.h.b16 %v3593
        %v3597 = vpack.c.b16 %v3595, %v3595
        %v3598 = vpack.c.b16 %v3596, %v3596
        %s3601 = scalar_lea.vmem [#allocation3], 48
        %3602 = vst [vmem:[%s3601] sm:$0xf] %v3597
        %3603 = vst [vmem:[%s3601 + $0x4] sm:$0xf] %v3598
        %s3604 = smul.u32 14, 4
        %s3605 = smul.addr %s3604, 4
        %s3606 = scalar_lea.vmem [#allocation2], %s3605
        %v3607 = vld [vmem:[%s3606] sm:$0xff]
        %v3608 = vld [vmem:[%s3606 + $0x8] sm:$0xff]
        %v3609 = vld [vmem:[%s3606 + $0x10] sm:$0xff]
        %v3610 = vld [vmem:[%s3606 + $0x18] sm:$0xff]
        %v3611 = vunpack.c.l.bf16 %v3607
        %v3612 = vunpack.c.h.bf16 %v3607
        %v3613 = vunpack.c.l.bf16 %v3608
        %v3614 = vunpack.c.h.bf16 %v3608
        %v3615 = vunpack.c.l.bf16 %v3609
        %v3616 = vunpack.c.h.bf16 %v3609
        %v3617 = vunpack.c.l.bf16 %v3610
        %v3618 = vunpack.c.h.bf16 %v3610
        %v3619 = vld [vmem:[%s280] sm:$0xff]
        %v3620 = vld [vmem:[%s280 + $0x8] sm:$0xff]
        %v3621 = vld [vmem:[%s280 + $0x10] sm:$0xff]
        %v3622 = vld [vmem:[%s280 + $0x18] sm:$0xff]
        %v3623 = vld [vmem:[%s280 + $0x20] sm:$0xff]
        %v3624 = vld [vmem:[%s280 + $0x28] sm:$0xff]
        %v3625 = vld [vmem:[%s280 + $0x30] sm:$0xff]
        %v3626 = vld [vmem:[%s280 + $0x38] sm:$0xff]
        %v3627 = vld [vmem:[%s280 + $0x40] sm:$0xff]
        %v3628 = vld [vmem:[%s280 + $0x48] sm:$0xff]
        %v3629 = vld [vmem:[%s280 + $0x50] sm:$0xff]
        %v3630 = vld [vmem:[%s280 + $0x58] sm:$0xff]
        %v3631 = vld [vmem:[%s280 + $0x60] sm:$0xff]
        %v3632 = vld [vmem:[%s280 + $0x68] sm:$0xff]
        %v3633 = vld [vmem:[%s280 + $0x70] sm:$0xff]
        %v3634 = vld [vmem:[%s280 + $0x78] sm:$0xff]
        %v3635 = vld [vmem:[%s280 + $0x80] sm:$0xff]
        %v3636 = vld [vmem:[%s280 + $0x88] sm:$0xff]
        %v3637 = vld [vmem:[%s280 + $0x90] sm:$0xff]
        %v3638 = vld [vmem:[%s280 + $0x98] sm:$0xff]
        %v3639 = vld [vmem:[%s280 + $0xa0] sm:$0xff]
        %v3640 = vld [vmem:[%s280 + $0xa8] sm:$0xff]
        %v3641 = vld [vmem:[%s280 + $0xb0] sm:$0xff]
        %v3642 = vld [vmem:[%s280 + $0xb8] sm:$0xff]
        %v3643 = vld [vmem:[%s280 + $0xc0] sm:$0xff]
        %v3644 = vld [vmem:[%s280 + $0xc8] sm:$0xff]
        %v3645 = vld [vmem:[%s280 + $0xd0] sm:$0xff]
        %v3646 = vld [vmem:[%s280 + $0xd8] sm:$0xff]
        %v3647 = vld [vmem:[%s280 + $0xe0] sm:$0xff]
        %v3648 = vld [vmem:[%s280 + $0xe8] sm:$0xff]
        %v3649 = vld [vmem:[%s280 + $0xf0] sm:$0xff]
        %v3650 = vld [vmem:[%s280 + $0xf8] sm:$0xff]
        %v3683 = vunpack.c.l.b16 %v3619
        %v3684 = vunpack.c.h.b16 %v3619
        %v3685 = vunpack.c.l.b16 %v3620
        %v3686 = vunpack.c.h.b16 %v3620
        %v3687 = vunpack.c.l.b16 %v3621
        %v3688 = vunpack.c.h.b16 %v3621
        %v3689 = vunpack.c.l.b16 %v3622
        %v3690 = vunpack.c.h.b16 %v3622
        %v3691 = vunpack.c.l.b16 %v3623
        %v3692 = vunpack.c.h.b16 %v3623
        %v3693 = vunpack.c.l.b16 %v3624
        %v3694 = vunpack.c.h.b16 %v3624
        %v3695 = vunpack.c.l.b16 %v3625
        %v3696 = vunpack.c.h.b16 %v3625
        %v3697 = vunpack.c.l.b16 %v3626
        %v3698 = vunpack.c.h.b16 %v3626
        %v3699 = vunpack.c.l.b16 %v3627
        %v3700 = vunpack.c.h.b16 %v3627
        %v3701 = vunpack.c.l.b16 %v3628
        %v3702 = vunpack.c.h.b16 %v3628
        %v3703 = vunpack.c.l.b16 %v3629
        %v3704 = vunpack.c.h.b16 %v3629
        %v3705 = vunpack.c.l.b16 %v3630
        %v3706 = vunpack.c.h.b16 %v3630
        %v3707 = vunpack.c.l.b16 %v3631
        %v3708 = vunpack.c.h.b16 %v3631
        %v3709 = vunpack.c.l.b16 %v3632
        %v3710 = vunpack.c.h.b16 %v3632
        %v3711 = vunpack.c.l.b16 %v3633
        %v3712 = vunpack.c.h.b16 %v3633
        %v3713 = vunpack.c.l.b16 %v3634
        %v3714 = vunpack.c.h.b16 %v3634
        %v3715 = vunpack.c.l.b16 %v3635
        %v3716 = vunpack.c.h.b16 %v3635
        %v3717 = vunpack.c.l.b16 %v3636
        %v3718 = vunpack.c.h.b16 %v3636
        %v3719 = vunpack.c.l.b16 %v3637
        %v3720 = vunpack.c.h.b16 %v3637
        %v3721 = vunpack.c.l.b16 %v3638
        %v3722 = vunpack.c.h.b16 %v3638
        %v3723 = vunpack.c.l.b16 %v3639
        %v3724 = vunpack.c.h.b16 %v3639
        %v3725 = vunpack.c.l.b16 %v3640
        %v3726 = vunpack.c.h.b16 %v3640
        %v3727 = vunpack.c.l.b16 %v3641
        %v3728 = vunpack.c.h.b16 %v3641
        %v3729 = vunpack.c.l.b16 %v3642
        %v3730 = vunpack.c.h.b16 %v3642
        %v3731 = vunpack.c.l.b16 %v3643
        %v3732 = vunpack.c.h.b16 %v3643
        %v3733 = vunpack.c.l.b16 %v3644
        %v3734 = vunpack.c.h.b16 %v3644
        %v3735 = vunpack.c.l.b16 %v3645
        %v3736 = vunpack.c.h.b16 %v3645
        %v3737 = vunpack.c.l.b16 %v3646
        %v3738 = vunpack.c.h.b16 %v3646
        %v3739 = vunpack.c.l.b16 %v3647
        %v3740 = vunpack.c.h.b16 %v3647
        %v3741 = vunpack.c.l.b16 %v3648
        %v3742 = vunpack.c.h.b16 %v3648
        %v3743 = vunpack.c.l.b16 %v3649
        %v3744 = vunpack.c.h.b16 %v3649
        %v3745 = vunpack.c.l.b16 %v3650
        %v3746 = vunpack.c.h.b16 %v3650
        %v3747 = vpack.c.b16 %v3687, %v3683
        %v3748 = vpack.c.b16 %v3688, %v3684
        %v3749 = vpack.c.b16 %v3689, %v3685
        %v3750 = vpack.c.b16 %v3690, %v3686
        %v3751 = vpack.c.b16 %v3695, %v3691
        %v3752 = vpack.c.b16 %v3696, %v3692
        %v3753 = vpack.c.b16 %v3697, %v3693
        %v3754 = vpack.c.b16 %v3698, %v3694
        %v3755 = vpack.c.b16 %v3703, %v3699
        %v3756 = vpack.c.b16 %v3704, %v3700
        %v3757 = vpack.c.b16 %v3705, %v3701
        %v3758 = vpack.c.b16 %v3706, %v3702
        %v3759 = vpack.c.b16 %v3711, %v3707
        %v3760 = vpack.c.b16 %v3712, %v3708
        %v3761 = vpack.c.b16 %v3713, %v3709
        %v3762 = vpack.c.b16 %v3714, %v3710
        %v3763 = vpack.c.b16 %v3719, %v3715
        %v3764 = vpack.c.b16 %v3720, %v3716
        %v3765 = vpack.c.b16 %v3721, %v3717
        %v3766 = vpack.c.b16 %v3722, %v3718
        %v3767 = vpack.c.b16 %v3727, %v3723
        %v3768 = vpack.c.b16 %v3728, %v3724
        %v3769 = vpack.c.b16 %v3729, %v3725
        %v3770 = vpack.c.b16 %v3730, %v3726
        %v3771 = vpack.c.b16 %v3735, %v3731
        %v3772 = vpack.c.b16 %v3736, %v3732
        %v3773 = vpack.c.b16 %v3737, %v3733
        %v3774 = vpack.c.b16 %v3738, %v3734
        %v3775 = vpack.c.b16 %v3743, %v3739
        %v3776 = vpack.c.b16 %v3744, %v3740
        %v3777 = vpack.c.b16 %v3745, %v3741
        %v3778 = vpack.c.b16 %v3746, %v3742
        %3811 = vmatprep.subr.bf16.mxu0 %v3776
        %3812 = vmatpush1.bf16.msra.mxu0 %v3775
        %3813 = vmatprep.subr.bf16.mxu0 %v3772
        %3814 = vmatpush1.bf16.msra.mxu0 %v3771
        %3815 = vmatprep.subr.bf16.mxu0 %v3768
        %3816 = vmatpush1.bf16.msra.mxu0 %v3767
        %3817 = vmatprep.subr.bf16.mxu0 %v3764
        %3818 = vmatpush1.bf16.msra.mxu0 %v3763
        %3819 = vmatprep.subr.bf16.mxu0 %v3760
        %3820 = vmatpush1.bf16.msra.mxu0 %v3759
        %3821 = vmatprep.subr.bf16.mxu0 %v3756
        %3822 = vmatpush1.bf16.msra.mxu0 %v3755
        %3823 = vmatprep.subr.bf16.mxu0 %v3752
        %3824 = vmatpush1.bf16.msra.mxu0 %v3751
        %3825 = vmatprep.subr.bf16.mxu0 %v3748
        %3826 = vmatpush1.bf16.msra.mxu0 %v3747
        %3827 = vmatprep.subr.bf16.mxu0 0
        %3828 = vmatpush2.bf16.msra.mxu0 0
        %3829 = vmatprep.subr.bf16.mxu0 0
        %3830 = vmatpush2.bf16.msra.mxu0 0
        %3831 = vmatprep.subr.bf16.mxu0 0
        %3832 = vmatpush2.bf16.msra.mxu0 0
        %3833 = vmatprep.subr.bf16.mxu0 0
        %3834 = vmatpush2.bf16.msra.mxu0 0
        %3835 = vmatprep.subr.bf16.mxu0 0
        %3836 = vmatpush2.bf16.msra.mxu0 0
        %3837 = vmatprep.subr.bf16.mxu0 0
        %3838 = vmatpush2.bf16.msra.mxu0 0
        %3839 = vmatprep.subr.bf16.mxu0 0
        %3840 = vmatpush2.bf16.msra.mxu0 0
        %3841 = vmatprep.subr.bf16.mxu0 0
        %3842 = vmatpush2.bf16.msra.mxu0 0
        %3843 = vmatprep.mubr.bf16.mxu0 0
        %3844 = vmatmul.mubr.bf16.gmra.mxu0 %v3593
        %v3845 = vpop.f32.mrf.mxu0
        %v3846 = vadd.f32 0.0, %v3845
        %v3847 = vpop.f32.mrf.mxu0
        %v3848 = vadd.f32 0.0, %v3847
        %v3849 = vpop.f32.mrf.mxu0
        %v3850 = vadd.f32 0.0, %v3849
        %v3851 = vpop.f32.mrf.mxu0
        %v3852 = vadd.f32 0.0, %v3851
        %3853 = vdwg.mxu0
        %3854 = vmatprep.subr.bf16.mxu0 %v3778
        %3855 = vmatpush1.bf16.msra.mxu0 %v3777
        %3856 = vmatprep.subr.bf16.mxu0 %v3774
        %3857 = vmatpush1.bf16.msra.mxu0 %v3773
        %3858 = vmatprep.subr.bf16.mxu0 %v3770
        %3859 = vmatpush1.bf16.msra.mxu0 %v3769
        %3860 = vmatprep.subr.bf16.mxu0 %v3766
        %3861 = vmatpush1.bf16.msra.mxu0 %v3765
        %3862 = vmatprep.subr.bf16.mxu0 %v3762
        %3863 = vmatpush1.bf16.msra.mxu0 %v3761
        %3864 = vmatprep.subr.bf16.mxu0 %v3758
        %3865 = vmatpush1.bf16.msra.mxu0 %v3757
        %3866 = vmatprep.subr.bf16.mxu0 %v3754
        %3867 = vmatpush1.bf16.msra.mxu0 %v3753
        %3868 = vmatprep.subr.bf16.mxu0 %v3750
        %3869 = vmatpush1.bf16.msra.mxu0 %v3749
        %3870 = vmatprep.subr.bf16.mxu0 0
        %3871 = vmatpush2.bf16.msra.mxu0 0
        %3872 = vmatprep.subr.bf16.mxu0 0
        %3873 = vmatpush2.bf16.msra.mxu0 0
        %3874 = vmatprep.subr.bf16.mxu0 0
        %3875 = vmatpush2.bf16.msra.mxu0 0
        %3876 = vmatprep.subr.bf16.mxu0 0
        %3877 = vmatpush2.bf16.msra.mxu0 0
        %3878 = vmatprep.subr.bf16.mxu0 0
        %3879 = vmatpush2.bf16.msra.mxu0 0
        %3880 = vmatprep.subr.bf16.mxu0 0
        %3881 = vmatpush2.bf16.msra.mxu0 0
        %3882 = vmatprep.subr.bf16.mxu0 0
        %3883 = vmatpush2.bf16.msra.mxu0 0
        %3884 = vmatprep.subr.bf16.mxu0 0
        %3885 = vmatpush2.bf16.msra.mxu0 0
        %3886 = vmatprep.mubr.bf16.mxu0 0
        %3887 = vmatmul.mubr.bf16.gmra.mxu0 %v3593
        %v3888 = vpop.f32.mrf.mxu0
        %v3889 = vadd.f32 0.0, %v3888
        %v3890 = vpop.f32.mrf.mxu0
        %v3891 = vadd.f32 0.0, %v3890
        %v3892 = vpop.f32.mrf.mxu0
        %v3893 = vadd.f32 0.0, %v3892
        %v3894 = vpop.f32.mrf.mxu0
        %v3895 = vadd.f32 0.0, %v3894
        %3896 = vdwg.mxu0
        %v3897 = vadd.f32 %v3611, %v3846
        %v3898 = vadd.f32 %v3612, %v3848
        %v3899 = vadd.f32 %v3613, %v3889
        %v3900 = vadd.f32 %v3614, %v3891
        %v3901 = vadd.f32 %v3615, %v3850
        %v3902 = vadd.f32 %v3616, %v3852
        %v3903 = vadd.f32 %v3617, %v3893
        %v3904 = vadd.f32 %v3618, %v3895
        %v3905 = vxor.u32 %v3897, 2147483648
        %v3906 = vxor.u32 %v3901, 2147483648
        %v3907 = vmul.f32 %v3905, 1.442695
        %v3908 = vpow.pop %v3907
        %v3909 = vmul.f32 %v3906, 1.442695
        %v3910 = vpow.pop %v3909
        %v3911 = vadd.f32 %v3908, 1.0
        %v3912 = vadd.f32 %v3910, 1.0
        %v3913 = vrcp.pop %v3911
        %v3914 = vmul.f32 1.0, %v3913
        %v3915 = vrcp.pop %v3912
        %v3916 = vmul.f32 1.0, %v3915
        %v3917 = vxor.u32 %v3898, 2147483648
        %v3918 = vxor.u32 %v3902, 2147483648
        %v3919 = vmul.f32 %v3917, 1.442695
        %v3920 = vpow.pop %v3919
        %v3921 = vmul.f32 %v3918, 1.442695
        %v3922 = vpow.pop %v3921
        %v3923 = vadd.f32 %v3920, 1.0
        %v3924 = vadd.f32 %v3922, 1.0
        %v3925 = vrcp.pop %v3923
        %v3926 = vmul.f32 1.0, %v3925
        %v3927 = vrcp.pop %v3924
        %v3928 = vmul.f32 1.0, %v3927
        %v3929 = vtanh.pop %v3899
        %v3930 = vtanh.pop %v3903
        %v3931 = vxor.u32 %v3900, 2147483648
        %v3932 = vxor.u32 %v3904, 2147483648
        %v3933 = vmul.f32 %v3931, 1.442695
        %v3934 = vpow.pop %v3933
        %v3935 = vmul.f32 %v3932, 1.442695
        %v3936 = vpow.pop %v3935
        %v3937 = vadd.f32 %v3934, 1.0
        %v3938 = vadd.f32 %v3936, 1.0
        %v3939 = vrcp.pop %v3937
        %v3940 = vmul.f32 1.0, %v3939
        %v3941 = vrcp.pop %v3938
        %v3942 = vmul.f32 1.0, %v3941
        %v3943 = vmul.f32 %v3926, %v3587
        %v3944 = vmul.f32 %v3928, %v3588
        %v3945 = vmul.f32 %v3914, %v3929
        %v3946 = vmul.f32 %v3916, %v3930
        %v3947 = vadd.f32 %v3943, %v3945
        %v3948 = vadd.f32 %v3944, %v3946
        %v3949 = vtanh.pop %v3947
        %v3950 = vtanh.pop %v3948
        %v3951 = vmul.f32 %v3940, %v3949
        %v3952 = vmul.f32 %v3942, %v3950
        %v3953 = vpack.c.bf16 %v3952, %v3951
        %v3955 = vunpack.c.l.b16 %v3953
        %v3956 = vunpack.c.h.b16 %v3953
        %v3957 = vpack.c.b16 %v3955, %v3955
        %v3958 = vpack.c.b16 %v3956, %v3956
        %s3961 = scalar_lea.vmem [#allocation3], 56
        %3962 = vst [vmem:[%s3961] sm:$0xf] %v3957
        %3963 = vst [vmem:[%s3961 + $0x4] sm:$0xf] %v3958
        %p3964 = scmp.eq.s32.totalorder %s28, 1
        // Predicated region
        $region57: #{tpu_custom_call.1} parent=35 // pred_check
          %p3965 = pneg %p3964
        $region58: #{tpu_custom_call.1} parent=35 // pred_check_branch
          %3967 = sbr.rel (%p3965) target = $region60
        $region59: #{tpu_custom_call.1} parent=35 // pred_region
          %3968 = vst [vmem:[#allocation12] sm:$0xf] %v3957
          %3969 = vst [vmem:[#allocation12 + $0x4] sm:$0xf] %v3958
        $region60: #{tpu_custom_call.1} parent=35 // pred_fallthru
          _
        // Predicated region
        $region61: #{tpu_custom_call.1} parent=35 // pred_check
          %p3970 = pneg %p157
        $region62: #{tpu_custom_call.1} parent=35 // pred_check_branch
          %3972 = sbr.rel (%p3970) target = $region64
        $region63: #{tpu_custom_call.1} parent=35 // pred_region
          %s3973 = smul.u32 2, %s27
          %s3975 = ssub.s32 128, 128
          %3976 = vsyncadd [#allocation6], %s3975
          %s3977 = smul.addr %s3973, 64
          %s3978 = scalar_lea.hbm %s4, %s3977
          %s3979 = sshll.u32 [#allocation12], 4
          %s3980 = int_to_ptr.vmem [resolvable:$true] %s3979
          %3985 = dma.vmem_to_hbm [thread:$0]  %s3980, 128, %s3978, [#allocation6], 64, 64, 4
        $region64: #{tpu_custom_call.1} parent=35 // pred_fallthru
          _
        // Predicated region
        $region65: #{tpu_custom_call.1} parent=35 // pred_check
          %p3986 = pneg %p157
        $region66: #{tpu_custom_call.1} parent=35 // pred_check_branch
          %3988 = sbr.rel (%p3986) target = $region68
        $region67: #{tpu_custom_call.1} parent=35 // pred_region
          %3989 = dma.done [#allocation6], 128
        $region68: #{tpu_custom_call.1} parent=35 // pred_fallthru
          _
      $region36: #{tpu_custom_call.1} parent=5 // pred_fallthru
        _
      %p3990 = scmp.le.s32.totalorder 2, %s18
      // Predicated region
      $region69: #{tpu_custom_call.1} parent=5 // pred_check
        %p3991 = pneg %p3990
      $region70: #{tpu_custom_call.1} parent=5 // pred_check_branch
        %3993 = sbr.rel (%p3991) target = $region72
      $region71: #{tpu_custom_call.1} parent=5 // pred_region
        %s3994 = ssub.s32 %s18, 2
      $region72: #{tpu_custom_call.1} parent=5 // pred_fallthru
        _
    $region6: #{tpu_custom_call.1} parent=1 // loop_footer
      %s22 = sadd.s32 1, %s18
    $region7: #{tpu_custom_call.1} parent=1 // loop_footer_branch
      %17 = sbr.rel target = $region3
    $region8: #{tpu_custom_call.1} parent=1 // loop_exit
      _
    %3995 = vsyncpa [#allocation5], 1
    %s3996 = scalar_lea.sflag [#allocation5], 1
    %3997 = vsyncpa %s3996, 1
    %3998 = vsyncpa [#allocation8], 1
    %s3999 = scalar_lea.sflag [#allocation8], 1
    %4000 = vsyncpa %s3999, 1
    %4001 = vsyncpa [#allocation11], 1
    %s4002 = scalar_lea.sflag [#allocation11], 1
    %4003 = vsyncpa %s4002, 1
    %4004 = vsyncpa [#allocation6], 1
    %s4005 = scalar_lea.sflag [#allocation6], 1
    %4006 = vsyncpa %s4005, 1

</llo_original>
